<compile_context>
chip_gen: v7x
topology: tpu7x:2x2x1
jax: 0.10.0
libtpu: 0.0.40
codegen_flags: <defaults>
</compile_context>

<pallas_src>
import math

import jax
import jax.numpy as jnp
from jax.experimental import pallas as pl
from jax.experimental.pallas import tpu as pltpu


# ---------------------------------------------------------------------------
# Kernel: one batch tile (batch on lanes), all flows computed in-kernel with
# the full stacked weights resident in VMEM.
# ---------------------------------------------------------------------------
def _realnvp_kernel(
    x_ref,             # (D, TB)  f32 input tile (batch on lanes)
    w1_ref, b1_ref,    # (K, NH, H), (K, NH, 1)
    w2_ref, b2_ref,    # (K, NH, NH), (K, NH, 1)
    wst_ref, bst_ref,  # (K, 2H, NH) fused s|t head, (K, 2H, 1)
    y_ref,             # (D, TB)  f32 output tile
    ld_ref,            # (H, TB)  f32 log-det-Jacobian tile (per-feature)
):
    n_half = ld_ref.shape[0]
    n_flows = w1_ref.shape[0]
    mxu_dtype = w1_ref.dtype

    x = x_ref[...].astype(jnp.float32)          # (D, TB)
    x_a = x[:n_half, :]                         # (H, TB)
    x_b = x[n_half:, :]                         # (H, TB)
    ld = jnp.zeros(ld_ref.shape, jnp.float32)   # (H, TB)

    def one_flow(w1, b1, w2, b2, wst, bst, x_a, x_b, ld):
        # MLP: two ReLU layers + fused (s|t) head.  Weights are (out, in);
        # activations are (features, TB) so every VPU/EUP op is lane-dense.
        h1 = jnp.maximum(
            jnp.dot(w1, x_a.astype(mxu_dtype),
                    preferred_element_type=jnp.float32) + b1, 0.0)
        h2 = jnp.maximum(
            jnp.dot(w2, h1.astype(mxu_dtype),
                    preferred_element_type=jnp.float32) + b2, 0.0)
        st = jnp.dot(wst, h2.astype(mxu_dtype),
                     preferred_element_type=jnp.float32) + bst
        s = jnp.tanh(st[:n_half, :])
        t = st[n_half:, :]
        x_b_new = jnp.exp(s) * x_b + t
        # torch.cat([x_b_new, x_a]) coupling swap, carried as values.
        return x_b_new, x_a, ld + s

    if n_flows <= 8:
        # Few flows: full static unroll keeps every weight index static and
        # gives the LLO scheduler maximum visibility.
        for k in range(n_flows):
            x_a, x_b, ld = one_flow(w1_ref[k], b1_ref[k], w2_ref[k], b2_ref[k],
                                    wst_ref[k], bst_ref[k], x_a, x_b, ld)
    else:
        # Many flows: a huge static unroll inflates live ranges past 64 vregs
        # (spill-bound) -- use fori_loop with a small unroll instead.
        def body(k, carry):
            x_a, x_b, ld = carry
            return one_flow(w1_ref[k], b1_ref[k], w2_ref[k], b2_ref[k],
                            wst_ref[k], bst_ref[k], x_a, x_b, ld)
        x_a, x_b, ld = jax.lax.fori_loop(0, n_flows, body, (x_a, x_b, ld),
                                         unroll=2)

    # Direct half writes (no concatenate materialization); lane-dense stores.
    y_ref[:n_half, :] = x_a.astype(y_ref.dtype)
    y_ref[n_half:, :] = x_b.astype(y_ref.dtype)
    ld_ref[...] = ld.astype(ld_ref.dtype)


# ---------------------------------------------------------------------------
# Wrapper helpers
# ---------------------------------------------------------------------------
def _round_up(n, m):
    return ((n + m - 1) // m) * m


def _cdiv(a, b):
    return -(-a // b)


def _choose_batch_tile(B, batch_tile):
    # Tiny D/H => the kernel is step-overhead bound: go big on the lane tile.
    if batch_tile is None:
        batch_tile = 4096
    TB = _round_up(min(batch_tile, _round_up(B, 128)), 128)  # lane axis: x128
    # v7x has 2 TensorCores: prefer >= 2 tiles when the batch is big enough,
    # otherwise one core sits idle with dimension_semantics=("parallel",).
    if B > 2 * 128 and _cdiv(B, TB) < 2:
        TB = _round_up(_cdiv(B, 2), 128)
    return TB


def _pick_vmem_limit(est_bytes):
    """Generation-aware scoped-VMEM ceiling: v5e/v6e have 128 MiB physical
    VMEM per core, v7x only 64 MiB."""
    try:
        cap = int(pltpu.get_tpu_info().vmem_capacity_bytes)
    except Exception:
        cap = 64 * 2**20  # be conservative if the query is unavailable
    ceiling = (100 * 2**20) if cap >= 96 * 2**20 else (48 * 2**20)
    return int(min(max(2 * est_bytes, 16 * 2**20), ceiling))


# ---------------------------------------------------------------------------
# Forward wrapper
# ---------------------------------------------------------------------------
def realnvp_forward(x, params, *, batch_tile=None):
    """x: (B, D) f32.  params (stacked per-flow, torch (out, in) layout,
    scale/shift heads fused along the output axis):
         W1: (K, NH, H)    b1: (K, NH, 1)
         W2: (K, NH, NH)   b2: (K, NH, 1)
         Wst:(K, 2H, NH)   bst:(K, 2H, 1)
    Returns (y: (B, D) f32, log_det_jacobian: (B, H) f32)."""
    B, D = x.shape
    K, NH, H = params["W1"].shape
    assert D == 2 * H, "data_dim must equal 2 * n_half"
    assert params["W2"].shape == (K, NH, NH)
    assert params["Wst"].shape == (K, 2 * H, NH)

    TB = _choose_batch_tile(B, batch_tile)
    B_pad = _round_up(B, TB)
    num_tiles = B_pad // TB

    # Batch-on-lanes: present x as (D, B_pad) so all tiles are lane-dense.
    xt = x.astype(jnp.float32).T
    if B_pad != B:
        xt = jnp.pad(xt, ((0, 0), (0, B_pad - B)))

    # --- explicit VMEM budget ---
    weight_bytes = sum(
        int(params[k].size) * jnp.dtype(params[k].dtype).itemsize
        for k in ("W1", "b1", "W2", "b2", "Wst", "bst"))
    act_rows = 2 * NH + 2 * (2 * H) + 4 * H          # f32 activation rows
    tile_bytes = TB * (2 * (2 * D + H) + act_rows) * 4
    est_bytes = 2 * weight_bytes + tile_bytes
    vmem_limit = _pick_vmem_limit(est_bytes)

    weight_args = (params["W1"], params["b1"], params["W2"], params["b2"],
                   params["Wst"], params["bst"])

    def build_and_run(single_buffer_weights):
        def const_spec(arr):
            # Full-extent block, constant index map -> DMA'd once, resident.
            idx_map = lambda b: (0,) * arr.ndim
            if single_buffer_weights:
                # Never re-fetched => double-buffering would waste VMEM.
                return pl.BlockSpec(arr.shape, idx_map,
                                    pipeline_mode=pl.Buffered(1))
            return pl.BlockSpec(arr.shape, idx_map)

        grid_spec = pltpu.PrefetchScalarGridSpec(
            num_scalar_prefetch=0,
            grid=(num_tiles,),
            in_specs=[pl.BlockSpec((D, TB), lambda b: (0, b))]     # x tile
                     + [const_spec(a) for a in weight_args],
            out_specs=[
                pl.BlockSpec((D, TB), lambda b: (0, b)),   # y  (lane-dense)
                pl.BlockSpec((H, TB), lambda b: (0, b)),   # log-det (lane-dense)
            ],
        )
        return pl.pallas_call(
            _realnvp_kernel,
            out_shape=(
                jax.ShapeDtypeStruct((D, B_pad), jnp.float32),
                jax.ShapeDtypeStruct((H, B_pad), jnp.float32),
            ),
            grid_spec=grid_spec,
            compiler_params=pltpu.CompilerParams(
                dimension_semantics=("parallel",),   # batch tiles across TCs
                vmem_limit_bytes=vmem_limit,
            ),
        )(xt, *weight_args)

    try:
        yt, ldt = build_and_run(True)
    except Exception:
        # pipeline_mode=pl.Buffered(1) unsupported on this jax/libtpu:
        # fall back to default (double-buffered) weight blocks.
        yt, ldt = build_and_run(False)

    return yt.T[:B], ldt.T[:B]


# ---------------------------------------------------------------------------
# Deterministic parameter init (mimics nn.Linear uniform(-1/sqrt(fan_in), ..)),
# stored in torch (out, in) layout with the s/t heads fused.
# ---------------------------------------------------------------------------
def init_params(key, n_flows, n_half, n_hidden, weight_dtype=jnp.float32):
    def linear(key, fan_in, fan_out):
        kw, kb = jax.random.split(key)
        bound = 1.0 / math.sqrt(fan_in)
        w = jax.random.uniform(kw, (fan_out, fan_in), jnp.float32, -bound, bound)
        b = jax.random.uniform(kb, (fan_out,), jnp.float32, -bound, bound)
        return w, b

    W1, b1, W2, b2, Wst, bst = [], [], [], [], [], []
    keys = jax.random.split(key, n_flows * 4)
    for k in range(n_flows):
        w, b = linear(keys[4 * k + 0], n_half, n_hidden); W1.append(w); b1.append(b)
        w, b = linear(keys[4 * k + 1], n_hidden, n_hidden); W2.append(w); b2.append(b)
        ws, bs = linear(keys[4 * k + 2], n_hidden, n_half)
        wt, bt = linear(keys[4 * k + 3], n_hidden, n_half)
        Wst.append(jnp.concatenate([ws, wt], axis=0))      # (2H, NH)
        bst.append(jnp.concatenate([bs, bt], axis=0))      # (2H,)

    stack = lambda xs: jnp.stack(xs, axis=0)
    return {
        "W1": stack(W1).astype(weight_dtype), "b1": stack(b1)[:, :, None],
        "W2": stack(W2).astype(weight_dtype), "b2": stack(b2)[:, :, None],
        "Wst": stack(Wst).astype(weight_dtype), "bst": stack(bst)[:, :, None],
    }


# ---------------------------------------------------------------------------
# Pure-JAX reference mirroring the PyTorch forward (f32 math; same weight
# dtype cast before each matmul as the kernel).
# ---------------------------------------------------------------------------
def realnvp_reference(x, params):
    K, NH, H = params["W1"].shape
    mxu_dtype = params["W1"].dtype
    x = x.astype(jnp.float32)
    log_det = jnp.zeros((x.shape[0], H), jnp.float32)
    for k in range(K):
        x_a = x[:, :H]
        x_b = x[:, H:]
        h1 = jax.nn.relu(
            jnp.dot(x_a.astype(mxu_dtype), params["W1"][k].T,
                    preferred_element_type=jnp.float32) + params["b1"][k][:, 0])
        h2 = jax.nn.relu(
            jnp.dot(h1.astype(mxu_dtype), params["W2"][k].T,
                    preferred_element_type=jnp.float32) + params["b2"][k][:, 0])
        st = jnp.dot(h2.astype(mxu_dtype), params["Wst"][k].T,
                     preferred_element_type=jnp.float32) + params["bst"][k][:, 0]
        s = jnp.tanh(st[:, :H])
        t = st[:, H:]
        x_b = jnp.exp(s) * x_b + t
        x = jnp.concatenate([x_b, x_a], axis=1)
        log_det = log_det + s
    return x, log_det


if __name__ == "__main__":
    # Small shapes consistent with the module's forward (flat feature vectors).
    batch = 2
    data_dim = 8          # must be even
    n_half = data_dim // 2
    n_hidden = 32
    n_flows = 4

    key = jax.random.PRNGKey(0)
    kx, kp = jax.random.split(key)
    x = jax.random.normal(kx, (batch, data_dim), jnp.float32)
    # f32 weights match the PyTorch module's precision; bf16 storage is an
    # opt-in perf knob (weight_dtype=jnp.bfloat16).
    params = init_params(kp, n_flows, n_half, n_hidden, weight_dtype=jnp.float32)

    y, log_det = realnvp_forward(x, params)
    y, log_det = jax.block_until_ready((y, log_det))

    y_ref, ld_ref = realnvp_reference(x, params)
    assert y.shape == (batch, data_dim) and log_det.shape == (batch, n_half)
    # Tolerance covers Mosaic-vs-XLA f32 matmul pass-count differences; real
    # bugs (wrong coupling order / indexing) produce O(1) errors.
    assert jnp.allclose(y, y_ref, atol=2e-2, rtol=2e-2)
    assert jnp.allclose(log_det, ld_ref, atol=2e-2, rtol=2e-2)

    print("KERNEL_OK")
</pallas_src>

<mosaic_0001>
module attributes {stable_mosaic.version = 11 : i64} {
  func.func @_realnvp_kernel(%arg0: i32, %arg1: memref<8x128xf32, #tpu.memory_space<vmem>>, %arg2: memref<4x32x4xf32, #tpu.memory_space<vmem>>, %arg3: memref<4x32x1xf32, #tpu.memory_space<vmem>>, %arg4: memref<4x32x32xf32, #tpu.memory_space<vmem>>, %arg5: memref<4x32x1xf32, #tpu.memory_space<vmem>>, %arg6: memref<4x8x32xf32, #tpu.memory_space<vmem>>, %arg7: memref<4x8x1xf32, #tpu.memory_space<vmem>>, %arg8: memref<8x128xf32, #tpu.memory_space<vmem>>, %arg9: memref<4x128xf32, #tpu.memory_space<vmem>>) attributes {dimension_semantics = [#tpu.dimension_semantics<parallel>], iteration_bounds = array<i64: 1>, scalar_prefetch = 0 : i64, scratch_operands = 0 : i64, tpu.core_type = #tpu.core_type<tc>, window_params = [{transform_indices = @transform_0, window_bounds = array<i64: 8, 128>}, {pipeline_mode = #tpu.pipeline_mode<synchronous>, transform_indices = @transform_1, window_bounds = array<i64: 4, 32, 4>}, {pipeline_mode = #tpu.pipeline_mode<synchronous>, transform_indices = @transform_2, window_bounds = array<i64: 4, 32, 1>}, {pipeline_mode = #tpu.pipeline_mode<synchronous>, transform_indices = @transform_3, window_bounds = array<i64: 4, 32, 32>}, {pipeline_mode = #tpu.pipeline_mode<synchronous>, transform_indices = @transform_4, window_bounds = array<i64: 4, 32, 1>}, {pipeline_mode = #tpu.pipeline_mode<synchronous>, transform_indices = @transform_5, window_bounds = array<i64: 4, 8, 32>}, {pipeline_mode = #tpu.pipeline_mode<synchronous>, transform_indices = @transform_6, window_bounds = array<i64: 4, 8, 1>}, {transform_indices = @transform_7, window_bounds = array<i64: 8, 128>}, {transform_indices = @transform_8, window_bounds = array<i64: 4, 128>}]} {
    %c0 = arith.constant 0 : index
    %c0_0 = arith.constant 0 : index
    %0 = vector.load %arg1[%c0, %c0_0] : memref<8x128xf32, #tpu.memory_space<vmem>>, vector<8x128xf32>
    %1 = vector.extract_strided_slice %0 {offsets = [0, 0], sizes = [4, 128], strides = [1, 1]} : vector<8x128xf32> to vector<4x128xf32>
    %2 = vector.extract_strided_slice %0 {offsets = [4, 0], sizes = [4, 128], strides = [1, 1]} : vector<8x128xf32> to vector<4x128xf32>
    %cst = arith.constant 0.000000e+00 : f32
    %3 = vector.broadcast %cst : f32 to vector<4x128xf32>
    %c0_1 = arith.constant 0 : index
    %c0_2 = arith.constant 0 : index
    %c0_3 = arith.constant 0 : index
    %4 = vector.load %arg2[%c0_1, %c0_2, %c0_3] : memref<4x32x4xf32, #tpu.memory_space<vmem>>, vector<1x32x4xf32>
    %5 = vector.shape_cast %4 : vector<1x32x4xf32> to vector<32x4xf32>
    %c0_4 = arith.constant 0 : index
    %c0_5 = arith.constant 0 : index
    %c0_6 = arith.constant 0 : index
    %6 = vector.load %arg3[%c0_4, %c0_5, %c0_6] : memref<4x32x1xf32, #tpu.memory_space<vmem>>, vector<1x32x1xf32>
    %7 = vector.shape_cast %6 : vector<1x32x1xf32> to vector<32x1xf32>
    %c0_7 = arith.constant 0 : index
    %c0_8 = arith.constant 0 : index
    %c0_9 = arith.constant 0 : index
    %8 = vector.load %arg4[%c0_7, %c0_8, %c0_9] : memref<4x32x32xf32, #tpu.memory_space<vmem>>, vector<1x32x32xf32>
    %9 = vector.shape_cast %8 : vector<1x32x32xf32> to vector<32x32xf32>
    %c0_10 = arith.constant 0 : index
    %c0_11 = arith.constant 0 : index
    %c0_12 = arith.constant 0 : index
    %10 = vector.load %arg5[%c0_10, %c0_11, %c0_12] : memref<4x32x1xf32, #tpu.memory_space<vmem>>, vector<1x32x1xf32>
    %11 = vector.shape_cast %10 : vector<1x32x1xf32> to vector<32x1xf32>
    %c0_13 = arith.constant 0 : index
    %c0_14 = arith.constant 0 : index
    %c0_15 = arith.constant 0 : index
    %12 = vector.load %arg6[%c0_13, %c0_14, %c0_15] : memref<4x8x32xf32, #tpu.memory_space<vmem>>, vector<1x8x32xf32>
    %13 = vector.shape_cast %12 : vector<1x8x32xf32> to vector<8x32xf32>
    %c0_16 = arith.constant 0 : index
    %c0_17 = arith.constant 0 : index
    %c0_18 = arith.constant 0 : index
    %14 = vector.load %arg7[%c0_16, %c0_17, %c0_18] : memref<4x8x1xf32, #tpu.memory_space<vmem>>, vector<1x8x1xf32>
    %15 = vector.shape_cast %14 : vector<1x8x1xf32> to vector<8x1xf32>
    %cst_19 = arith.constant dense<0.000000e+00> : vector<32x128xf32>
    %16 = tpu.matmul %5, %1, %cst_19 {dimension_numbers = #tpu.dot_dimension_numbers<[1], [0], [0], [1], [0, 0, 1, 1], [], []>} : vector<32x4xf32>, vector<4x128xf32>, vector<32x128xf32> -> vector<32x128xf32>
    %17 = vector.broadcast %7 : vector<32x1xf32> to vector<32x128xf32>
    %18 = arith.addf %16, %17 : vector<32x128xf32>
    %cst_20 = arith.constant 0.000000e+00 : f32
    %19 = vector.broadcast %cst_20 : f32 to vector<32x128xf32>
    %20 = arith.maximumf %18, %19 : vector<32x128xf32>
    %cst_21 = arith.constant dense<0.000000e+00> : vector<32x128xf32>
    %21 = tpu.matmul %9, %20, %cst_21 {dimension_numbers = #tpu.dot_dimension_numbers<[1], [0], [0], [1], [0, 0, 1, 1], [], []>} : vector<32x32xf32>, vector<32x128xf32>, vector<32x128xf32> -> vector<32x128xf32>
    %22 = vector.broadcast %11 : vector<32x1xf32> to vector<32x128xf32>
    %23 = arith.addf %21, %22 : vector<32x128xf32>
    %cst_22 = arith.constant 0.000000e+00 : f32
    %24 = vector.broadcast %cst_22 : f32 to vector<32x128xf32>
    %25 = arith.maximumf %23, %24 : vector<32x128xf32>
    %cst_23 = arith.constant dense<0.000000e+00> : vector<8x128xf32>
    %26 = tpu.matmul %13, %25, %cst_23 {dimension_numbers = #tpu.dot_dimension_numbers<[1], [0], [0], [1], [0, 0, 1, 1], [], []>} : vector<8x32xf32>, vector<32x128xf32>, vector<8x128xf32> -> vector<8x128xf32>
    %27 = vector.broadcast %15 : vector<8x1xf32> to vector<8x128xf32>
    %28 = arith.addf %26, %27 : vector<8x128xf32>
    %29 = vector.extract_strided_slice %28 {offsets = [0, 0], sizes = [4, 128], strides = [1, 1]} : vector<8x128xf32> to vector<4x128xf32>
    %30 = math.tanh %29 : vector<4x128xf32>
    %31 = vector.extract_strided_slice %28 {offsets = [4, 0], sizes = [4, 128], strides = [1, 1]} : vector<8x128xf32> to vector<4x128xf32>
    %32 = math.exp %30 : vector<4x128xf32>
    %33 = arith.mulf %32, %2 : vector<4x128xf32>
    %34 = arith.addf %33, %31 : vector<4x128xf32>
    %35 = arith.addf %3, %30 : vector<4x128xf32>
    %c1 = arith.constant 1 : index
    %c0_24 = arith.constant 0 : index
    %c0_25 = arith.constant 0 : index
    %36 = vector.load %arg2[%c1, %c0_24, %c0_25] : memref<4x32x4xf32, #tpu.memory_space<vmem>>, vector<1x32x4xf32>
    %37 = vector.shape_cast %36 : vector<1x32x4xf32> to vector<32x4xf32>
    %c1_26 = arith.constant 1 : index
    %c0_27 = arith.constant 0 : index
    %c0_28 = arith.constant 0 : index
    %38 = vector.load %arg3[%c1_26, %c0_27, %c0_28] : memref<4x32x1xf32, #tpu.memory_space<vmem>>, vector<1x32x1xf32>
    %39 = vector.shape_cast %38 : vector<1x32x1xf32> to vector<32x1xf32>
    %c1_29 = arith.constant 1 : index
    %c0_30 = arith.constant 0 : index
    %c0_31 = arith.constant 0 : index
    %40 = vector.load %arg4[%c1_29, %c0_30, %c0_31] : memref<4x32x32xf32, #tpu.memory_space<vmem>>, vector<1x32x32xf32>
    %41 = vector.shape_cast %40 : vector<1x32x32xf32> to vector<32x32xf32>
    %c1_32 = arith.constant 1 : index
    %c0_33 = arith.constant 0 : index
    %c0_34 = arith.constant 0 : index
    %42 = vector.load %arg5[%c1_32, %c0_33, %c0_34] : memref<4x32x1xf32, #tpu.memory_space<vmem>>, vector<1x32x1xf32>
    %43 = vector.shape_cast %42 : vector<1x32x1xf32> to vector<32x1xf32>
    %c1_35 = arith.constant 1 : index
    %c0_36 = arith.constant 0 : index
    %c0_37 = arith.constant 0 : index
    %44 = vector.load %arg6[%c1_35, %c0_36, %c0_37] : memref<4x8x32xf32, #tpu.memory_space<vmem>>, vector<1x8x32xf32>
    %45 = vector.shape_cast %44 : vector<1x8x32xf32> to vector<8x32xf32>
    %c1_38 = arith.constant 1 : index
    %c0_39 = arith.constant 0 : index
    %c0_40 = arith.constant 0 : index
    %46 = vector.load %arg7[%c1_38, %c0_39, %c0_40] : memref<4x8x1xf32, #tpu.memory_space<vmem>>, vector<1x8x1xf32>
    %47 = vector.shape_cast %46 : vector<1x8x1xf32> to vector<8x1xf32>
    %cst_41 = arith.constant dense<0.000000e+00> : vector<32x128xf32>
    %48 = tpu.matmul %37, %34, %cst_41 {dimension_numbers = #tpu.dot_dimension_numbers<[1], [0], [0], [1], [0, 0, 1, 1], [], []>} : vector<32x4xf32>, vector<4x128xf32>, vector<32x128xf32> -> vector<32x128xf32>
    %49 = vector.broadcast %39 : vector<32x1xf32> to vector<32x128xf32>
    %50 = arith.addf %48, %49 : vector<32x128xf32>
    %cst_42 = arith.constant 0.000000e+00 : f32
    %51 = vector.broadcast %cst_42 : f32 to vector<32x128xf32>
    %52 = arith.maximumf %50, %51 : vector<32x128xf32>
    %cst_43 = arith.constant dense<0.000000e+00> : vector<32x128xf32>
    %53 = tpu.matmul %41, %52, %cst_43 {dimension_numbers = #tpu.dot_dimension_numbers<[1], [0], [0], [1], [0, 0, 1, 1], [], []>} : vector<32x32xf32>, vector<32x128xf32>, vector<32x128xf32> -> vector<32x128xf32>
    %54 = vector.broadcast %43 : vector<32x1xf32> to vector<32x128xf32>
    %55 = arith.addf %53, %54 : vector<32x128xf32>
    %cst_44 = arith.constant 0.000000e+00 : f32
    %56 = vector.broadcast %cst_44 : f32 to vector<32x128xf32>
    %57 = arith.maximumf %55, %56 : vector<32x128xf32>
    %cst_45 = arith.constant dense<0.000000e+00> : vector<8x128xf32>
    %58 = tpu.matmul %45, %57, %cst_45 {dimension_numbers = #tpu.dot_dimension_numbers<[1], [0], [0], [1], [0, 0, 1, 1], [], []>} : vector<8x32xf32>, vector<32x128xf32>, vector<8x128xf32> -> vector<8x128xf32>
    %59 = vector.broadcast %47 : vector<8x1xf32> to vector<8x128xf32>
    %60 = arith.addf %58, %59 : vector<8x128xf32>
    %61 = vector.extract_strided_slice %60 {offsets = [0, 0], sizes = [4, 128], strides = [1, 1]} : vector<8x128xf32> to vector<4x128xf32>
    %62 = math.tanh %61 : vector<4x128xf32>
    %63 = vector.extract_strided_slice %60 {offsets = [4, 0], sizes = [4, 128], strides = [1, 1]} : vector<8x128xf32> to vector<4x128xf32>
    %64 = math.exp %62 : vector<4x128xf32>
    %65 = arith.mulf %64, %1 : vector<4x128xf32>
    %66 = arith.addf %65, %63 : vector<4x128xf32>
    %67 = arith.addf %35, %62 : vector<4x128xf32>
    %c2 = arith.constant 2 : index
    %c0_46 = arith.constant 0 : index
    %c0_47 = arith.constant 0 : index
    %68 = vector.load %arg2[%c2, %c0_46, %c0_47] : memref<4x32x4xf32, #tpu.memory_space<vmem>>, vector<1x32x4xf32>
    %69 = vector.shape_cast %68 : vector<1x32x4xf32> to vector<32x4xf32>
    %c2_48 = arith.constant 2 : index
    %c0_49 = arith.constant 0 : index
    %c0_50 = arith.constant 0 : index
    %70 = vector.load %arg3[%c2_48, %c0_49, %c0_50] : memref<4x32x1xf32, #tpu.memory_space<vmem>>, vector<1x32x1xf32>
    %71 = vector.shape_cast %70 : vector<1x32x1xf32> to vector<32x1xf32>
    %c2_51 = arith.constant 2 : index
    %c0_52 = arith.constant 0 : index
    %c0_53 = arith.constant 0 : index
    %72 = vector.load %arg4[%c2_51, %c0_52, %c0_53] : memref<4x32x32xf32, #tpu.memory_space<vmem>>, vector<1x32x32xf32>
    %73 = vector.shape_cast %72 : vector<1x32x32xf32> to vector<32x32xf32>
    %c2_54 = arith.constant 2 : index
    %c0_55 = arith.constant 0 : index
    %c0_56 = arith.constant 0 : index
    %74 = vector.load %arg5[%c2_54, %c0_55, %c0_56] : memref<4x32x1xf32, #tpu.memory_space<vmem>>, vector<1x32x1xf32>
    %75 = vector.shape_cast %74 : vector<1x32x1xf32> to vector<32x1xf32>
    %c2_57 = arith.constant 2 : index
    %c0_58 = arith.constant 0 : index
    %c0_59 = arith.constant 0 : index
    %76 = vector.load %arg6[%c2_57, %c0_58, %c0_59] : memref<4x8x32xf32, #tpu.memory_space<vmem>>, vector<1x8x32xf32>
    %77 = vector.shape_cast %76 : vector<1x8x32xf32> to vector<8x32xf32>
    %c2_60 = arith.constant 2 : index
    %c0_61 = arith.constant 0 : index
    %c0_62 = arith.constant 0 : index
    %78 = vector.load %arg7[%c2_60, %c0_61, %c0_62] : memref<4x8x1xf32, #tpu.memory_space<vmem>>, vector<1x8x1xf32>
    %79 = vector.shape_cast %78 : vector<1x8x1xf32> to vector<8x1xf32>
    %cst_63 = arith.constant dense<0.000000e+00> : vector<32x128xf32>
    %80 = tpu.matmul %69, %66, %cst_63 {dimension_numbers = #tpu.dot_dimension_numbers<[1], [0], [0], [1], [0, 0, 1, 1], [], []>} : vector<32x4xf32>, vector<4x128xf32>, vector<32x128xf32> -> vector<32x128xf32>
    %81 = vector.broadcast %71 : vector<32x1xf32> to vector<32x128xf32>
    %82 = arith.addf %80, %81 : vector<32x128xf32>
    %cst_64 = arith.constant 0.000000e+00 : f32
    %83 = vector.broadcast %cst_64 : f32 to vector<32x128xf32>
    %84 = arith.maximumf %82, %83 : vector<32x128xf32>
    %cst_65 = arith.constant dense<0.000000e+00> : vector<32x128xf32>
    %85 = tpu.matmul %73, %84, %cst_65 {dimension_numbers = #tpu.dot_dimension_numbers<[1], [0], [0], [1], [0, 0, 1, 1], [], []>} : vector<32x32xf32>, vector<32x128xf32>, vector<32x128xf32> -> vector<32x128xf32>
    %86 = vector.broadcast %75 : vector<32x1xf32> to vector<32x128xf32>
    %87 = arith.addf %85, %86 : vector<32x128xf32>
    %cst_66 = arith.constant 0.000000e+00 : f32
    %88 = vector.broadcast %cst_66 : f32 to vector<32x128xf32>
    %89 = arith.maximumf %87, %88 : vector<32x128xf32>
    %cst_67 = arith.constant dense<0.000000e+00> : vector<8x128xf32>
    %90 = tpu.matmul %77, %89, %cst_67 {dimension_numbers = #tpu.dot_dimension_numbers<[1], [0], [0], [1], [0, 0, 1, 1], [], []>} : vector<8x32xf32>, vector<32x128xf32>, vector<8x128xf32> -> vector<8x128xf32>
    %91 = vector.broadcast %79 : vector<8x1xf32> to vector<8x128xf32>
    %92 = arith.addf %90, %91 : vector<8x128xf32>
    %93 = vector.extract_strided_slice %92 {offsets = [0, 0], sizes = [4, 128], strides = [1, 1]} : vector<8x128xf32> to vector<4x128xf32>
    %94 = math.tanh %93 : vector<4x128xf32>
    %95 = vector.extract_strided_slice %92 {offsets = [4, 0], sizes = [4, 128], strides = [1, 1]} : vector<8x128xf32> to vector<4x128xf32>
    %96 = math.exp %94 : vector<4x128xf32>
    %97 = arith.mulf %96, %34 : vector<4x128xf32>
    %98 = arith.addf %97, %95 : vector<4x128xf32>
    %99 = arith.addf %67, %94 : vector<4x128xf32>
    %c3 = arith.constant 3 : index
    %c0_68 = arith.constant 0 : index
    %c0_69 = arith.constant 0 : index
    %100 = vector.load %arg2[%c3, %c0_68, %c0_69] : memref<4x32x4xf32, #tpu.memory_space<vmem>>, vector<1x32x4xf32>
    %101 = vector.shape_cast %100 : vector<1x32x4xf32> to vector<32x4xf32>
    %c3_70 = arith.constant 3 : index
    %c0_71 = arith.constant 0 : index
    %c0_72 = arith.constant 0 : index
    %102 = vector.load %arg3[%c3_70, %c0_71, %c0_72] : memref<4x32x1xf32, #tpu.memory_space<vmem>>, vector<1x32x1xf32>
    %103 = vector.shape_cast %102 : vector<1x32x1xf32> to vector<32x1xf32>
    %c3_73 = arith.constant 3 : index
    %c0_74 = arith.constant 0 : index
    %c0_75 = arith.constant 0 : index
    %104 = vector.load %arg4[%c3_73, %c0_74, %c0_75] : memref<4x32x32xf32, #tpu.memory_space<vmem>>, vector<1x32x32xf32>
    %105 = vector.shape_cast %104 : vector<1x32x32xf32> to vector<32x32xf32>
    %c3_76 = arith.constant 3 : index
    %c0_77 = arith.constant 0 : index
    %c0_78 = arith.constant 0 : index
    %106 = vector.load %arg5[%c3_76, %c0_77, %c0_78] : memref<4x32x1xf32, #tpu.memory_space<vmem>>, vector<1x32x1xf32>
    %107 = vector.shape_cast %106 : vector<1x32x1xf32> to vector<32x1xf32>
    %c3_79 = arith.constant 3 : index
    %c0_80 = arith.constant 0 : index
    %c0_81 = arith.constant 0 : index
    %108 = vector.load %arg6[%c3_79, %c0_80, %c0_81] : memref<4x8x32xf32, #tpu.memory_space<vmem>>, vector<1x8x32xf32>
    %109 = vector.shape_cast %108 : vector<1x8x32xf32> to vector<8x32xf32>
    %c3_82 = arith.constant 3 : index
    %c0_83 = arith.constant 0 : index
    %c0_84 = arith.constant 0 : index
    %110 = vector.load %arg7[%c3_82, %c0_83, %c0_84] : memref<4x8x1xf32, #tpu.memory_space<vmem>>, vector<1x8x1xf32>
    %111 = vector.shape_cast %110 : vector<1x8x1xf32> to vector<8x1xf32>
    %cst_85 = arith.constant dense<0.000000e+00> : vector<32x128xf32>
    %112 = tpu.matmul %101, %98, %cst_85 {dimension_numbers = #tpu.dot_dimension_numbers<[1], [0], [0], [1], [0, 0, 1, 1], [], []>} : vector<32x4xf32>, vector<4x128xf32>, vector<32x128xf32> -> vector<32x128xf32>
    %113 = vector.broadcast %103 : vector<32x1xf32> to vector<32x128xf32>
    %114 = arith.addf %112, %113 : vector<32x128xf32>
    %cst_86 = arith.constant 0.000000e+00 : f32
    %115 = vector.broadcast %cst_86 : f32 to vector<32x128xf32>
    %116 = arith.maximumf %114, %115 : vector<32x128xf32>
    %cst_87 = arith.constant dense<0.000000e+00> : vector<32x128xf32>
    %117 = tpu.matmul %105, %116, %cst_87 {dimension_numbers = #tpu.dot_dimension_numbers<[1], [0], [0], [1], [0, 0, 1, 1], [], []>} : vector<32x32xf32>, vector<32x128xf32>, vector<32x128xf32> -> vector<32x128xf32>
    %118 = vector.broadcast %107 : vector<32x1xf32> to vector<32x128xf32>
    %119 = arith.addf %117, %118 : vector<32x128xf32>
    %cst_88 = arith.constant 0.000000e+00 : f32
    %120 = vector.broadcast %cst_88 : f32 to vector<32x128xf32>
    %121 = arith.maximumf %119, %120 : vector<32x128xf32>
    %cst_89 = arith.constant dense<0.000000e+00> : vector<8x128xf32>
    %122 = tpu.matmul %109, %121, %cst_89 {dimension_numbers = #tpu.dot_dimension_numbers<[1], [0], [0], [1], [0, 0, 1, 1], [], []>} : vector<8x32xf32>, vector<32x128xf32>, vector<8x128xf32> -> vector<8x128xf32>
    %123 = vector.broadcast %111 : vector<8x1xf32> to vector<8x128xf32>
    %124 = arith.addf %122, %123 : vector<8x128xf32>
    %125 = vector.extract_strided_slice %124 {offsets = [0, 0], sizes = [4, 128], strides = [1, 1]} : vector<8x128xf32> to vector<4x128xf32>
    %126 = math.tanh %125 : vector<4x128xf32>
    %127 = vector.extract_strided_slice %124 {offsets = [4, 0], sizes = [4, 128], strides = [1, 1]} : vector<8x128xf32> to vector<4x128xf32>
    %128 = math.exp %126 : vector<4x128xf32>
    %129 = arith.mulf %128, %66 : vector<4x128xf32>
    %130 = arith.addf %129, %127 : vector<4x128xf32>
    %131 = arith.addf %99, %126 : vector<4x128xf32>
    %c0_90 = arith.constant 0 : index
    %c0_91 = arith.constant 0 : index
    %132 = vector.load %arg8[%c0_90, %c0_91] : memref<8x128xf32, #tpu.memory_space<vmem>>, vector<4x128xf32>
    tpu.vector_store %arg8[%c0_90, %c0_91], %130 {strides = array<i32>} : memref<8x128xf32, #tpu.memory_space<vmem>>, vector<4x128xf32>,
    %c4 = arith.constant 4 : index
    %c0_92 = arith.constant 0 : index
    %133 = vector.load %arg8[%c4, %c0_92] : memref<8x128xf32, #tpu.memory_space<vmem>>, vector<4x128xf32>
    tpu.vector_store %arg8[%c4, %c0_92], %98 {strides = array<i32>} : memref<8x128xf32, #tpu.memory_space<vmem>>, vector<4x128xf32>,
    %c0_93 = arith.constant 0 : index
    %c0_94 = arith.constant 0 : index
    %134 = vector.load %arg9[%c0_93, %c0_94] : memref<4x128xf32, #tpu.memory_space<vmem>>, vector<4x128xf32>
    tpu.vector_store %arg9[%c0_93, %c0_94], %131 {strides = array<i32>} : memref<4x128xf32, #tpu.memory_space<vmem>>, vector<4x128xf32>,
    return
  }
  func.func @transform_0(%arg0: i32) -> (i32, i32) {
    %c0_i32 = arith.constant 0 : i32
    %c0_i32_0 = arith.constant 0 : i32
    return %c0_i32, %arg0 : i32, i32
  }
  func.func @transform_1(%arg0: i32) -> (i32, i32, i32) {
    %c0_i32 = arith.constant 0 : i32
    %c0_i32_0 = arith.constant 0 : i32
    %c0_i32_1 = arith.constant 0 : i32
    %c0_i32_2 = arith.constant 0 : i32
    return %c0_i32, %c0_i32_0, %c0_i32_1 : i32, i32, i32
  }
  func.func @transform_2(%arg0: i32) -> (i32, i32, i32) {
    %c0_i32 = arith.constant 0 : i32
    %c0_i32_0 = arith.constant 0 : i32
    %c0_i32_1 = arith.constant 0 : i32
    %c0_i32_2 = arith.constant 0 : i32
    return %c0_i32, %c0_i32_0, %c0_i32_1 : i32, i32, i32
  }
  func.func @transform_3(%arg0: i32) -> (i32, i32, i32) {
    %c0_i32 = arith.constant 0 : i32
    %c0_i32_0 = arith.constant 0 : i32
    %c0_i32_1 = arith.constant 0 : i32
    %c0_i32_2 = arith.constant 0 : i32
    return %c0_i32, %c0_i32_0, %c0_i32_1 : i32, i32, i32
  }
  func.func @transform_4(%arg0: i32) -> (i32, i32, i32) {
    %c0_i32 = arith.constant 0 : i32
    %c0_i32_0 = arith.constant 0 : i32
    %c0_i32_1 = arith.constant 0 : i32
    %c0_i32_2 = arith.constant 0 : i32
    return %c0_i32, %c0_i32_0, %c0_i32_1 : i32, i32, i32
  }
  func.func @transform_5(%arg0: i32) -> (i32, i32, i32) {
    %c0_i32 = arith.constant 0 : i32
    %c0_i32_0 = arith.constant 0 : i32
    %c0_i32_1 = arith.constant 0 : i32
    %c0_i32_2 = arith.constant 0 : i32
    return %c0_i32, %c0_i32_0, %c0_i32_1 : i32, i32, i32
  }
  func.func @transform_6(%arg0: i32) -> (i32, i32, i32) {
    %c0_i32 = arith.constant 0 : i32
    %c0_i32_0 = arith.constant 0 : i32
    %c0_i32_1 = arith.constant 0 : i32
    %c0_i32_2 = arith.constant 0 : i32
    return %c0_i32, %c0_i32_0, %c0_i32_1 : i32, i32, i32
  }
  func.func @transform_7(%arg0: i32) -> (i32, i32) {
    %c0_i32 = arith.constant 0 : i32
    %c0_i32_0 = arith.constant 0 : i32
    return %c0_i32, %arg0 : i32, i32
  }
  func.func @transform_8(%arg0: i32) -> (i32, i32) {
    %c0_i32 = arith.constant 0 : i32
    %c0_i32_0 = arith.constant 0 : i32
    return %c0_i32, %arg0 : i32, i32
  }
}

module attributes {stable_mosaic.version = 11 : i64} {
  func.func @_realnvp_kernel(%arg0: i32, %arg1: memref<8x128xf32, #tpu.memory_space<vmem>>, %arg2: memref<4x32x4xf32, #tpu.memory_space<vmem>>, %arg3: memref<4x32x1xf32, #tpu.memory_space<vmem>>, %arg4: memref<4x32x32xf32, #tpu.memory_space<vmem>>, %arg5: memref<4x32x1xf32, #tpu.memory_space<vmem>>, %arg6: memref<4x8x32xf32, #tpu.memory_space<vmem>>, %arg7: memref<4x8x1xf32, #tpu.memory_space<vmem>>, %arg8: memref<8x128xf32, #tpu.memory_space<vmem>>, %arg9: memref<4x128xf32, #tpu.memory_space<vmem>>) attributes {dimension_semantics = [#tpu.dimension_semantics<parallel>], iteration_bounds = array<i64: 1>, scalar_prefetch = 0 : i64, scratch_operands = 0 : i64, tpu.core_type = #tpu.core_type<tc>, window_params = [{transform_indices = @transform_0, window_bounds = array<i64: 8, 128>}, {pipeline_mode = #tpu.pipeline_mode<synchronous>, transform_indices = @transform_1, window_bounds = array<i64: 4, 32, 4>}, {pipeline_mode = #tpu.pipeline_mode<synchronous>, transform_indices = @transform_2, window_bounds = array<i64: 4, 32, 1>}, {pipeline_mode = #tpu.pipeline_mode<synchronous>, transform_indices = @transform_3, window_bounds = array<i64: 4, 32, 32>}, {pipeline_mode = #tpu.pipeline_mode<synchronous>, transform_indices = @transform_4, window_bounds = array<i64: 4, 32, 1>}, {pipeline_mode = #tpu.pipeline_mode<synchronous>, transform_indices = @transform_5, window_bounds = array<i64: 4, 8, 32>}, {pipeline_mode = #tpu.pipeline_mode<synchronous>, transform_indices = @transform_6, window_bounds = array<i64: 4, 8, 1>}, {transform_indices = @transform_7, window_bounds = array<i64: 8, 128>}, {transform_indices = @transform_8, window_bounds = array<i64: 4, 128>}]} {
    %c0 = arith.constant 0 : index
    %c0_0 = arith.constant 0 : index
    %0 = vector.load %arg1[%c0, %c0_0] : memref<8x128xf32, #tpu.memory_space<vmem>>, vector<8x128xf32>
    %1 = vector.extract_strided_slice %0 {offsets = [0, 0], sizes = [4, 128], strides = [1, 1]} : vector<8x128xf32> to vector<4x128xf32>
    %2 = vector.extract_strided_slice %0 {offsets = [4, 0], sizes = [4, 128], strides = [1, 1]} : vector<8x128xf32> to vector<4x128xf32>
    %cst = arith.constant 0.000000e+00 : f32
    %3 = vector.broadcast %cst : f32 to vector<4x128xf32>
    %c0_1 = arith.constant 0 : index
    %c0_2 = arith.constant 0 : index
    %c0_3 = arith.constant 0 : index
    %4 = vector.load %arg2[%c0_1, %c0_2, %c0_3] : memref<4x32x4xf32, #tpu.memory_space<vmem>>, vector<1x32x4xf32>
    %5 = vector.shape_cast %4 : vector<1x32x4xf32> to vector<32x4xf32>
    %c0_4 = arith.constant 0 : index
    %c0_5 = arith.constant 0 : index
    %c0_6 = arith.constant 0 : index
    %6 = vector.load %arg3[%c0_4, %c0_5, %c0_6] : memref<4x32x1xf32, #tpu.memory_space<vmem>>, vector<1x32x1xf32>
    %7 = vector.shape_cast %6 : vector<1x32x1xf32> to vector<32x1xf32>
    %c0_7 = arith.constant 0 : index
    %c0_8 = arith.constant 0 : index
    %c0_9 = arith.constant 0 : index
    %8 = vector.load %arg4[%c0_7, %c0_8, %c0_9] : memref<4x32x32xf32, #tpu.memory_space<vmem>>, vector<1x32x32xf32>
    %9 = vector.shape_cast %8 : vector<1x32x32xf32> to vector<32x32xf32>
    %c0_10 = arith.constant 0 : index
    %c0_11 = arith.constant 0 : index
    %c0_12 = arith.constant 0 : index
    %10 = vector.load %arg5[%c0_10, %c0_11, %c0_12] : memref<4x32x1xf32, #tpu.memory_space<vmem>>, vector<1x32x1xf32>
    %11 = vector.shape_cast %10 : vector<1x32x1xf32> to vector<32x1xf32>
    %c0_13 = arith.constant 0 : index
    %c0_14 = arith.constant 0 : index
    %c0_15 = arith.constant 0 : index
    %12 = vector.load %arg6[%c0_13, %c0_14, %c0_15] : memref<4x8x32xf32, #tpu.memory_space<vmem>>, vector<1x8x32xf32>
    %13 = vector.shape_cast %12 : vector<1x8x32xf32> to vector<8x32xf32>
    %c0_16 = arith.constant 0 : index
    %c0_17 = arith.constant 0 : index
    %c0_18 = arith.constant 0 : index
    %14 = vector.load %arg7[%c0_16, %c0_17, %c0_18] : memref<4x8x1xf32, #tpu.memory_space<vmem>>, vector<1x8x1xf32>
    %15 = vector.shape_cast %14 : vector<1x8x1xf32> to vector<8x1xf32>
    %cst_19 = arith.constant dense<0.000000e+00> : vector<32x128xf32>
    %16 = tpu.matmul %5, %1, %cst_19 {dimension_numbers = #tpu.dot_dimension_numbers<[1], [0], [0], [1], [0, 0, 1, 1], [], []>} : vector<32x4xf32>, vector<4x128xf32>, vector<32x128xf32> -> vector<32x128xf32>
    %17 = vector.broadcast %7 : vector<32x1xf32> to vector<32x128xf32>
    %18 = arith.addf %16, %17 : vector<32x128xf32>
    %cst_20 = arith.constant 0.000000e+00 : f32
    %19 = vector.broadcast %cst_20 : f32 to vector<32x128xf32>
    %20 = arith.maximumf %18, %19 : vector<32x128xf32>
    %cst_21 = arith.constant dense<0.000000e+00> : vector<32x128xf32>
    %21 = tpu.matmul %9, %20, %cst_21 {dimension_numbers = #tpu.dot_dimension_numbers<[1], [0], [0], [1], [0, 0, 1, 1], [], []>} : vector<32x32xf32>, vector<32x128xf32>, vector<32x128xf32> -> vector<32x128xf32>
    %22 = vector.broadcast %11 : vector<32x1xf32> to vector<32x128xf32>
    %23 = arith.addf %21, %22 : vector<32x128xf32>
    %cst_22 = arith.constant 0.000000e+00 : f32
    %24 = vector.broadcast %cst_22 : f32 to vector<32x128xf32>
    %25 = arith.maximumf %23, %24 : vector<32x128xf32>
    %cst_23 = arith.constant dense<0.000000e+00> : vector<8x128xf32>
    %26 = tpu.matmul %13, %25, %cst_23 {dimension_numbers = #tpu.dot_dimension_numbers<[1], [0], [0], [1], [0, 0, 1, 1], [], []>} : vector<8x32xf32>, vector<32x128xf32>, vector<8x128xf32> -> vector<8x128xf32>
    %27 = vector.broadcast %15 : vector<8x1xf32> to vector<8x128xf32>
    %28 = arith.addf %26, %27 : vector<8x128xf32>
    %29 = vector.extract_strided_slice %28 {offsets = [0, 0], sizes = [4, 128], strides = [1, 1]} : vector<8x128xf32> to vector<4x128xf32>
    %30 = math.tanh %29 : vector<4x128xf32>
    %31 = vector.extract_strided_slice %28 {offsets = [4, 0], sizes = [4, 128], strides = [1, 1]} : vector<8x128xf32> to vector<4x128xf32>
    %32 = math.exp %30 : vector<4x128xf32>
    %33 = arith.mulf %32, %2 : vector<4x128xf32>
    %34 = arith.addf %33, %31 : vector<4x128xf32>
    %35 = arith.addf %3, %30 : vector<4x128xf32>
    %c1 = arith.constant 1 : index
    %c0_24 = arith.constant 0 : index
    %c0_25 = arith.constant 0 : index
    %36 = vector.load %arg2[%c1, %c0_24, %c0_25] : memref<4x32x4xf32, #tpu.memory_space<vmem>>, vector<1x32x4xf32>
    %37 = vector.shape_cast %36 : vector<1x32x4xf32> to vector<32x4xf32>
    %c1_26 = arith.constant 1 : index
    %c0_27 = arith.constant 0 : index
    %c0_28 = arith.constant 0 : index
    %38 = vector.load %arg3[%c1_26, %c0_27, %c0_28] : memref<4x32x1xf32, #tpu.memory_space<vmem>>, vector<1x32x1xf32>
    %39 = vector.shape_cast %38 : vector<1x32x1xf32> to vector<32x1xf32>
    %c1_29 = arith.constant 1 : index
    %c0_30 = arith.constant 0 : index
    %c0_31 = arith.constant 0 : index
    %40 = vector.load %arg4[%c1_29, %c0_30, %c0_31] : memref<4x32x32xf32, #tpu.memory_space<vmem>>, vector<1x32x32xf32>
    %41 = vector.shape_cast %40 : vector<1x32x32xf32> to vector<32x32xf32>
    %c1_32 = arith.constant 1 : index
    %c0_33 = arith.constant 0 : index
    %c0_34 = arith.constant 0 : index
    %42 = vector.load %arg5[%c1_32, %c0_33, %c0_34] : memref<4x32x1xf32, #tpu.memory_space<vmem>>, vector<1x32x1xf32>
    %43 = vector.shape_cast %42 : vector<1x32x1xf32> to vector<32x1xf32>
    %c1_35 = arith.constant 1 : index
    %c0_36 = arith.constant 0 : index
    %c0_37 = arith.constant 0 : index
    %44 = vector.load %arg6[%c1_35, %c0_36, %c0_37] : memref<4x8x32xf32, #tpu.memory_space<vmem>>, vector<1x8x32xf32>
    %45 = vector.shape_cast %44 : vector<1x8x32xf32> to vector<8x32xf32>
    %c1_38 = arith.constant 1 : index
    %c0_39 = arith.constant 0 : index
    %c0_40 = arith.constant 0 : index
    %46 = vector.load %arg7[%c1_38, %c0_39, %c0_40] : memref<4x8x1xf32, #tpu.memory_space<vmem>>, vector<1x8x1xf32>
    %47 = vector.shape_cast %46 : vector<1x8x1xf32> to vector<8x1xf32>
    %cst_41 = arith.constant dense<0.000000e+00> : vector<32x128xf32>
    %48 = tpu.matmul %37, %34, %cst_41 {dimension_numbers = #tpu.dot_dimension_numbers<[1], [0], [0], [1], [0, 0, 1, 1], [], []>} : vector<32x4xf32>, vector<4x128xf32>, vector<32x128xf32> -> vector<32x128xf32>
    %49 = vector.broadcast %39 : vector<32x1xf32> to vector<32x128xf32>
    %50 = arith.addf %48, %49 : vector<32x128xf32>
    %cst_42 = arith.constant 0.000000e+00 : f32
    %51 = vector.broadcast %cst_42 : f32 to vector<32x128xf32>
    %52 = arith.maximumf %50, %51 : vector<32x128xf32>
    %cst_43 = arith.constant dense<0.000000e+00> : vector<32x128xf32>
    %53 = tpu.matmul %41, %52, %cst_43 {dimension_numbers = #tpu.dot_dimension_numbers<[1], [0], [0], [1], [0, 0, 1, 1], [], []>} : vector<32x32xf32>, vector<32x128xf32>, vector<32x128xf32> -> vector<32x128xf32>
    %54 = vector.broadcast %43 : vector<32x1xf32> to vector<32x128xf32>
    %55 = arith.addf %53, %54 : vector<32x128xf32>
    %cst_44 = arith.constant 0.000000e+00 : f32
    %56 = vector.broadcast %cst_44 : f32 to vector<32x128xf32>
    %57 = arith.maximumf %55, %56 : vector<32x128xf32>
    %cst_45 = arith.constant dense<0.000000e+00> : vector<8x128xf32>
    %58 = tpu.matmul %45, %57, %cst_45 {dimension_numbers = #tpu.dot_dimension_numbers<[1], [0], [0], [1], [0, 0, 1, 1], [], []>} : vector<8x32xf32>, vector<32x128xf32>, vector<8x128xf32> -> vector<8x128xf32>
    %59 = vector.broadcast %47 : vector<8x1xf32> to vector<8x128xf32>
    %60 = arith.addf %58, %59 : vector<8x128xf32>
    %61 = vector.extract_strided_slice %60 {offsets = [0, 0], sizes = [4, 128], strides = [1, 1]} : vector<8x128xf32> to vector<4x128xf32>
    %62 = math.tanh %61 : vector<4x128xf32>
    %63 = vector.extract_strided_slice %60 {offsets = [4, 0], sizes = [4, 128], strides = [1, 1]} : vector<8x128xf32> to vector<4x128xf32>
    %64 = math.exp %62 : vector<4x128xf32>
    %65 = arith.mulf %64, %1 : vector<4x128xf32>
    %66 = arith.addf %65, %63 : vector<4x128xf32>
    %67 = arith.addf %35, %62 : vector<4x128xf32>
    %c2 = arith.constant 2 : index
    %c0_46 = arith.constant 0 : index
    %c0_47 = arith.constant 0 : index
    %68 = vector.load %arg2[%c2, %c0_46, %c0_47] : memref<4x32x4xf32, #tpu.memory_space<vmem>>, vector<1x32x4xf32>
    %69 = vector.shape_cast %68 : vector<1x32x4xf32> to vector<32x4xf32>
    %c2_48 = arith.constant 2 : index
    %c0_49 = arith.constant 0 : index
    %c0_50 = arith.constant 0 : index
    %70 = vector.load %arg3[%c2_48, %c0_49, %c0_50] : memref<4x32x1xf32, #tpu.memory_space<vmem>>, vector<1x32x1xf32>
    %71 = vector.shape_cast %70 : vector<1x32x1xf32> to vector<32x1xf32>
    %c2_51 = arith.constant 2 : index
    %c0_52 = arith.constant 0 : index
    %c0_53 = arith.constant 0 : index
    %72 = vector.load %arg4[%c2_51, %c0_52, %c0_53] : memref<4x32x32xf32, #tpu.memory_space<vmem>>, vector<1x32x32xf32>
    %73 = vector.shape_cast %72 : vector<1x32x32xf32> to vector<32x32xf32>
    %c2_54 = arith.constant 2 : index
    %c0_55 = arith.constant 0 : index
    %c0_56 = arith.constant 0 : index
    %74 = vector.load %arg5[%c2_54, %c0_55, %c0_56] : memref<4x32x1xf32, #tpu.memory_space<vmem>>, vector<1x32x1xf32>
    %75 = vector.shape_cast %74 : vector<1x32x1xf32> to vector<32x1xf32>
    %c2_57 = arith.constant 2 : index
    %c0_58 = arith.constant 0 : index
    %c0_59 = arith.constant 0 : index
    %76 = vector.load %arg6[%c2_57, %c0_58, %c0_59] : memref<4x8x32xf32, #tpu.memory_space<vmem>>, vector<1x8x32xf32>
    %77 = vector.shape_cast %76 : vector<1x8x32xf32> to vector<8x32xf32>
    %c2_60 = arith.constant 2 : index
    %c0_61 = arith.constant 0 : index
    %c0_62 = arith.constant 0 : index
    %78 = vector.load %arg7[%c2_60, %c0_61, %c0_62] : memref<4x8x1xf32, #tpu.memory_space<vmem>>, vector<1x8x1xf32>
    %79 = vector.shape_cast %78 : vector<1x8x1xf32> to vector<8x1xf32>
    %cst_63 = arith.constant dense<0.000000e+00> : vector<32x128xf32>
    %80 = tpu.matmul %69, %66, %cst_63 {dimension_numbers = #tpu.dot_dimension_numbers<[1], [0], [0], [1], [0, 0, 1, 1], [], []>} : vector<32x4xf32>, vector<4x128xf32>, vector<32x128xf32> -> vector<32x128xf32>
    %81 = vector.broadcast %71 : vector<32x1xf32> to vector<32x128xf32>
    %82 = arith.addf %80, %81 : vector<32x128xf32>
    %cst_64 = arith.constant 0.000000e+00 : f32
    %83 = vector.broadcast %cst_64 : f32 to vector<32x128xf32>
    %84 = arith.maximumf %82, %83 : vector<32x128xf32>
    %cst_65 = arith.constant dense<0.000000e+00> : vector<32x128xf32>
    %85 = tpu.matmul %73, %84, %cst_65 {dimension_numbers = #tpu.dot_dimension_numbers<[1], [0], [0], [1], [0, 0, 1, 1], [], []>} : vector<32x32xf32>, vector<32x128xf32>, vector<32x128xf32> -> vector<32x128xf32>
    %86 = vector.broadcast %75 : vector<32x1xf32> to vector<32x128xf32>
    %87 = arith.addf %85, %86 : vector<32x128xf32>
    %cst_66 = arith.constant 0.000000e+00 : f32
    %88 = vector.broadcast %cst_66 : f32 to vector<32x128xf32>
    %89 = arith.maximumf %87, %88 : vector<32x128xf32>
    %cst_67 = arith.constant dense<0.000000e+00> : vector<8x128xf32>
    %90 = tpu.matmul %77, %89, %cst_67 {dimension_numbers = #tpu.dot_dimension_numbers<[1], [0], [0], [1], [0, 0, 1, 1], [], []>} : vector<8x32xf32>, vector<32x128xf32>, vector<8x128xf32> -> vector<8x128xf32>
    %91 = vector.broadcast %79 : vector<8x1xf32> to vector<8x128xf32>
    %92 = arith.addf %90, %91 : vector<8x128xf32>
    %93 = vector.extract_strided_slice %92 {offsets = [0, 0], sizes = [4, 128], strides = [1, 1]} : vector<8x128xf32> to vector<4x128xf32>
    %94 = math.tanh %93 : vector<4x128xf32>
    %95 = vector.extract_strided_slice %92 {offsets = [4, 0], sizes = [4, 128], strides = [1, 1]} : vector<8x128xf32> to vector<4x128xf32>
    %96 = math.exp %94 : vector<4x128xf32>
    %97 = arith.mulf %96, %34 : vector<4x128xf32>
    %98 = arith.addf %97, %95 : vector<4x128xf32>
    %99 = arith.addf %67, %94 : vector<4x128xf32>
    %c3 = arith.constant 3 : index
    %c0_68 = arith.constant 0 : index
    %c0_69 = arith.constant 0 : index
    %100 = vector.load %arg2[%c3, %c0_68, %c0_69] : memref<4x32x4xf32, #tpu.memory_space<vmem>>, vector<1x32x4xf32>
    %101 = vector.shape_cast %100 : vector<1x32x4xf32> to vector<32x4xf32>
    %c3_70 = arith.constant 3 : index
    %c0_71 = arith.constant 0 : index
    %c0_72 = arith.constant 0 : index
    %102 = vector.load %arg3[%c3_70, %c0_71, %c0_72] : memref<4x32x1xf32, #tpu.memory_space<vmem>>, vector<1x32x1xf32>
    %103 = vector.shape_cast %102 : vector<1x32x1xf32> to vector<32x1xf32>
    %c3_73 = arith.constant 3 : index
    %c0_74 = arith.constant 0 : index
    %c0_75 = arith.constant 0 : index
    %104 = vector.load %arg4[%c3_73, %c0_74, %c0_75] : memref<4x32x32xf32, #tpu.memory_space<vmem>>, vector<1x32x32xf32>
    %105 = vector.shape_cast %104 : vector<1x32x32xf32> to vector<32x32xf32>
    %c3_76 = arith.constant 3 : index
    %c0_77 = arith.constant 0 : index
    %c0_78 = arith.constant 0 : index
    %106 = vector.load %arg5[%c3_76, %c0_77, %c0_78] : memref<4x32x1xf32, #tpu.memory_space<vmem>>, vector<1x32x1xf32>
    %107 = vector.shape_cast %106 : vector<1x32x1xf32> to vector<32x1xf32>
    %c3_79 = arith.constant 3 : index
    %c0_80 = arith.constant 0 : index
    %c0_81 = arith.constant 0 : index
    %108 = vector.load %arg6[%c3_79, %c0_80, %c0_81] : memref<4x8x32xf32, #tpu.memory_space<vmem>>, vector<1x8x32xf32>
    %109 = vector.shape_cast %108 : vector<1x8x32xf32> to vector<8x32xf32>
    %c3_82 = arith.constant 3 : index
    %c0_83 = arith.constant 0 : index
    %c0_84 = arith.constant 0 : index
    %110 = vector.load %arg7[%c3_82, %c0_83, %c0_84] : memref<4x8x1xf32, #tpu.memory_space<vmem>>, vector<1x8x1xf32>
    %111 = vector.shape_cast %110 : vector<1x8x1xf32> to vector<8x1xf32>
    %cst_85 = arith.constant dense<0.000000e+00> : vector<32x128xf32>
    %112 = tpu.matmul %101, %98, %cst_85 {dimension_numbers = #tpu.dot_dimension_numbers<[1], [0], [0], [1], [0, 0, 1, 1], [], []>} : vector<32x4xf32>, vector<4x128xf32>, vector<32x128xf32> -> vector<32x128xf32>
    %113 = vector.broadcast %103 : vector<32x1xf32> to vector<32x128xf32>
    %114 = arith.addf %112, %113 : vector<32x128xf32>
    %cst_86 = arith.constant 0.000000e+00 : f32
    %115 = vector.broadcast %cst_86 : f32 to vector<32x128xf32>
    %116 = arith.maximumf %114, %115 : vector<32x128xf32>
    %cst_87 = arith.constant dense<0.000000e+00> : vector<32x128xf32>
    %117 = tpu.matmul %105, %116, %cst_87 {dimension_numbers = #tpu.dot_dimension_numbers<[1], [0], [0], [1], [0, 0, 1, 1], [], []>} : vector<32x32xf32>, vector<32x128xf32>, vector<32x128xf32> -> vector<32x128xf32>
    %118 = vector.broadcast %107 : vector<32x1xf32> to vector<32x128xf32>
    %119 = arith.addf %117, %118 : vector<32x128xf32>
    %cst_88 = arith.constant 0.000000e+00 : f32
    %120 = vector.broadcast %cst_88 : f32 to vector<32x128xf32>
    %121 = arith.maximumf %119, %120 : vector<32x128xf32>
    %cst_89 = arith.constant dense<0.000000e+00> : vector<8x128xf32>
    %122 = tpu.matmul %109, %121, %cst_89 {dimension_numbers = #tpu.dot_dimension_numbers<[1], [0], [0], [1], [0, 0, 1, 1], [], []>} : vector<8x32xf32>, vector<32x128xf32>, vector<8x128xf32> -> vector<8x128xf32>
    %123 = vector.broadcast %111 : vector<8x1xf32> to vector<8x128xf32>
    %124 = arith.addf %122, %123 : vector<8x128xf32>
    %125 = vector.extract_strided_slice %124 {offsets = [0, 0], sizes = [4, 128], strides = [1, 1]} : vector<8x128xf32> to vector<4x128xf32>
    %126 = math.tanh %125 : vector<4x128xf32>
    %127 = vector.extract_strided_slice %124 {offsets = [4, 0], sizes = [4, 128], strides = [1, 1]} : vector<8x128xf32> to vector<4x128xf32>
    %128 = math.exp %126 : vector<4x128xf32>
    %129 = arith.mulf %128, %66 : vector<4x128xf32>
    %130 = arith.addf %129, %127 : vector<4x128xf32>
    %131 = arith.addf %99, %126 : vector<4x128xf32>
    %c0_90 = arith.constant 0 : index
    %c0_91 = arith.constant 0 : index
    %132 = vector.load %arg8[%c0_90, %c0_91] : memref<8x128xf32, #tpu.memory_space<vmem>>, vector<4x128xf32>
    tpu.vector_store %arg8[%c0_90, %c0_91], %130 {strides = array<i32>} : memref<8x128xf32, #tpu.memory_space<vmem>>, vector<4x128xf32>,
    %c4 = arith.constant 4 : index
    %c0_92 = arith.constant 0 : index
    %133 = vector.load %arg8[%c4, %c0_92] : memref<8x128xf32, #tpu.memory_space<vmem>>, vector<4x128xf32>
    tpu.vector_store %arg8[%c4, %c0_92], %98 {strides = array<i32>} : memref<8x128xf32, #tpu.memory_space<vmem>>, vector<4x128xf32>,
    %c0_93 = arith.constant 0 : index
    %c0_94 = arith.constant 0 : index
    %134 = vector.load %arg9[%c0_93, %c0_94] : memref<4x128xf32, #tpu.memory_space<vmem>>, vector<4x128xf32>
    tpu.vector_store %arg9[%c0_93, %c0_94], %131 {strides = array<i32>} : memref<4x128xf32, #tpu.memory_space<vmem>>, vector<4x128xf32>,
    return
  }
  func.func @transform_0(%arg0: i32) -> (i32, i32) {
    %c0_i32 = arith.constant 0 : i32
    %c0_i32_0 = arith.constant 0 : i32
    return %c0_i32, %arg0 : i32, i32
  }
  func.func @transform_1(%arg0: i32) -> (i32, i32, i32) {
    %c0_i32 = arith.constant 0 : i32
    %c0_i32_0 = arith.constant 0 : i32
    %c0_i32_1 = arith.constant 0 : i32
    %c0_i32_2 = arith.constant 0 : i32
    return %c0_i32, %c0_i32_0, %c0_i32_1 : i32, i32, i32
  }
  func.func @transform_2(%arg0: i32) -> (i32, i32, i32) {
    %c0_i32 = arith.constant 0 : i32
    %c0_i32_0 = arith.constant 0 : i32
    %c0_i32_1 = arith.constant 0 : i32
    %c0_i32_2 = arith.constant 0 : i32
    return %c0_i32, %c0_i32_0, %c0_i32_1 : i32, i32, i32
  }
  func.func @transform_3(%arg0: i32) -> (i32, i32, i32) {
    %c0_i32 = arith.constant 0 : i32
    %c0_i32_0 = arith.constant 0 : i32
    %c0_i32_1 = arith.constant 0 : i32
    %c0_i32_2 = arith.constant 0 : i32
    return %c0_i32, %c0_i32_0, %c0_i32_1 : i32, i32, i32
  }
  func.func @transform_4(%arg0: i32) -> (i32, i32, i32) {
    %c0_i32 = arith.constant 0 : i32
    %c0_i32_0 = arith.constant 0 : i32
    %c0_i32_1 = arith.constant 0 : i32
    %c0_i32_2 = arith.constant 0 : i32
    return %c0_i32, %c0_i32_0, %c0_i32_1 : i32, i32, i32
  }
  func.func @transform_5(%arg0: i32) -> (i32, i32, i32) {
    %c0_i32 = arith.constant 0 : i32
    %c0_i32_0 = arith.constant 0 : i32
    %c0_i32_1 = arith.constant 0 : i32
    %c0_i32_2 = arith.constant 0 : i32
    return %c0_i32, %c0_i32_0, %c0_i32_1 : i32, i32, i32
  }
  func.func @transform_6(%arg0: i32) -> (i32, i32, i32) {
    %c0_i32 = arith.constant 0 : i32
    %c0_i32_0 = arith.constant 0 : i32
    %c0_i32_1 = arith.constant 0 : i32
    %c0_i32_2 = arith.constant 0 : i32
    return %c0_i32, %c0_i32_0, %c0_i32_1 : i32, i32, i32
  }
  func.func @transform_7(%arg0: i32) -> (i32, i32) {
    %c0_i32 = arith.constant 0 : i32
    %c0_i32_0 = arith.constant 0 : i32
    return %c0_i32, %arg0 : i32, i32
  }
  func.func @transform_8(%arg0: i32) -> (i32, i32) {
    %c0_i32 = arith.constant 0 : i32
    %c0_i32_0 = arith.constant 0 : i32
    return %c0_i32, %arg0 : i32, i32
  }
}

</mosaic_0001>

<llo_original>
// kernel: tpu_custom_call.1
$region0: #{tpu_custom_call.1}
  #allocation0 [shape = 'u32[]', space=smem, size = 0x4, offset = 0x4, fixed_abs, tag = 'smem constant byte address 0x4 - core index']
  #allocation1 [shape = 'u32[144,128]{1,0:T(1,128)}', space=vmem, size = 0x12000, scoped, tag = 'internal scratch']
  %s0 = inlined_call_operand.vmem [shape: f32[8,128], index: 0, kind: input, shape index: {}]
  %s1 = inlined_call_operand.vmem [shape: f32[4,32,4], index: 1, kind: input, shape index: {}]
  %s2 = inlined_call_operand.vmem [shape: f32[4,32,1], index: 2, kind: input, shape index: {}]
  %s3 = inlined_call_operand.vmem [shape: f32[4,32,32], index: 3, kind: input, shape index: {}]
  %s4 = inlined_call_operand.vmem [shape: f32[4,32,1], index: 4, kind: input, shape index: {}]
  %s5 = inlined_call_operand.vmem [shape: f32[4,8,32], index: 5, kind: input, shape index: {}]
  %s6 = inlined_call_operand.vmem [shape: f32[4,8,1], index: 6, kind: input, shape index: {}]
  %s7 = inlined_call_operand.hbm [shape: f32[8,128], index: 7, kind: output, shape index: {0}]
  %s8 = inlined_call_operand.hbm [shape: f32[4,128], index: 8, kind: output, shape index: {1}]
  %9 = xla_tuple %s7, %s8
  %s10 = sld [smem:[#allocation0]]
  $region46: #{tpu_custom_call.1} parent=0
    _
  %s12 = ssub.s32 1, %s10
  %s13 = scalar_select 0, %s12, %s10
  $region1: #{tpu_custom_call.1} parent=0
    #allocation2 [shape = 'u8[4096]{0}', space=vmem, size = 0x1000, scoped, tag = 'output window, operand 0, single buffered']
    #allocation3 [shape = 's32[1]{0}', space=sflag, size = 0x4, scoped, tag = 'scoped memory for tpu_custom_call.1']
    #allocation4 [shape = 'u8[2048]{0}', space=vmem, size = 0x800, scoped, tag = 'output window, operand 1, single buffered']
    #allocation5 [shape = 's32[1]{0}', space=sflag, size = 0x4, scoped, tag = 'scoped memory for tpu_custom_call.1']
    %14 = vsyncpa [#allocation3], 0
    %15 = vsyncpa [#allocation5], 0
    // Predicated region
    $region2: #{tpu_custom_call.1} parent=1 // pred_check
      _
    $region3: #{tpu_custom_call.1} parent=1 // pred_check_branch
      %17 = sbr.rel (0) target = $region5
    $region4: #{tpu_custom_call.1} parent=1 // pred_region
      _
    $region5: #{tpu_custom_call.1} parent=1 // pred_fallthru
      _
    // Predicated region
    $region6: #{tpu_custom_call.1} parent=1 // pred_check
      _
    $region7: #{tpu_custom_call.1} parent=1 // pred_check_branch
      %19 = sbr.rel (0) target = $region9
    $region8: #{tpu_custom_call.1} parent=1 // pred_region
      _
    $region9: #{tpu_custom_call.1} parent=1 // pred_fallthru
      _
    // Predicated region
    $region10: #{tpu_custom_call.1} parent=1 // pred_check
      _
    $region11: #{tpu_custom_call.1} parent=1 // pred_check_branch
      %21 = sbr.rel (0) target = $region13
    $region12: #{tpu_custom_call.1} parent=1 // pred_region
      _
    $region13: #{tpu_custom_call.1} parent=1 // pred_fallthru
      _
    // Predicated region
    $region14: #{tpu_custom_call.1} parent=1 // pred_check
      _
    $region15: #{tpu_custom_call.1} parent=1 // pred_check_branch
      %23 = sbr.rel (0) target = $region17
    $region16: #{tpu_custom_call.1} parent=1 // pred_region
      _
    $region17: #{tpu_custom_call.1} parent=1 // pred_fallthru
      _
    // Predicated region
    $region18: #{tpu_custom_call.1} parent=1 // pred_check
      _
    $region19: #{tpu_custom_call.1} parent=1 // pred_check_branch
      %25 = sbr.rel (0) target = $region21
    $region20: #{tpu_custom_call.1} parent=1 // pred_region
      _
    $region21: #{tpu_custom_call.1} parent=1 // pred_fallthru
      _
    // Predicated region
    $region22: #{tpu_custom_call.1} parent=1 // pred_check
      _
    $region23: #{tpu_custom_call.1} parent=1 // pred_check_branch
      %27 = sbr.rel (0) target = $region25
    $region24: #{tpu_custom_call.1} parent=1 // pred_region
      _
    $region25: #{tpu_custom_call.1} parent=1 // pred_fallthru
      _
    // Predicated region
    $region26: #{tpu_custom_call.1} parent=1 // pred_check
      _
    $region27: #{tpu_custom_call.1} parent=1 // pred_check_branch
      %29 = sbr.rel (0) target = $region29
    $region28: #{tpu_custom_call.1} parent=1 // pred_region
      _
    $region29: #{tpu_custom_call.1} parent=1 // pred_fallthru
      _
    %v30 = vld [vmem:[%s0] sm:$0xff]
    %v31 = vld [vmem:[%s1] sm:$0xff]
    %v32 = vld [vmem:[%s1 + $0x8] sm:$0xff]
    %v33 = vld [vmem:[%s1 + $0x10] sm:$0xff]
    %v34 = vld [vmem:[%s1 + $0x18] sm:$0xff]
    %v35 = vld [vmem:[%s2] sm:$0xff]
    %v36 = vld [vmem:[%s2 + $0x8] sm:$0xff]
    %v37 = vld [vmem:[%s2 + $0x10] sm:$0xff]
    %v38 = vld [vmem:[%s2 + $0x18] sm:$0xff]
    %v39 = vld [vmem:[%s3] sm:$0xff]
    %v40 = vld [vmem:[%s3 + $0x8] sm:$0xff]
    %v41 = vld [vmem:[%s3 + $0x10] sm:$0xff]
    %v42 = vld [vmem:[%s3 + $0x18] sm:$0xff]
    %v43 = vld [vmem:[%s4] sm:$0xff]
    %v44 = vld [vmem:[%s4 + $0x8] sm:$0xff]
    %v45 = vld [vmem:[%s4 + $0x10] sm:$0xff]
    %v46 = vld [vmem:[%s4 + $0x18] sm:$0xff]
    %v47 = vld [vmem:[%s5] sm:$0xff]
    %v48 = vld [vmem:[%s6] sm:$0xff]
    %50 = vset.pattern.permute.xlu0 0
    %51 = vperm.xlu0 %50, %v35
    %v52 = vpop.permute.xlu0 %51
    %55 = vset.pattern.permute.xlu0 0
    %56 = vperm.xlu0 %55, %v36
    %v57 = vpop.permute.xlu0 %56
    %60 = vset.pattern.permute.xlu0 0
    %61 = vperm.xlu0 %60, %v37
    %v62 = vpop.permute.xlu0 %61
    %65 = vset.pattern.permute.xlu0 0
    %66 = vperm.xlu0 %65, %v38
    %v67 = vpop.permute.xlu0 %66
    %vm69 = vcmask 31744
    %v71 = vsel %vm69, %v31, 0
    %v74 = vsel %vm69, %v32, 0
    %v77 = vsel %vm69, %v33, 0
    %v80 = vsel %vm69, %v34, 0
    %vm82 = vcmask 1043456
    %v84 = vsel %vm82, %v30, 0
    %86 = vmatprep.subr.mxu0 0.0
    %87 = vmatpush1.msra.mxu0 %v84
    %88 = vmatprep.subr.mxu0 0.0
    %89 = vmatpush1.msra.mxu0 0.0
    %90 = vmatprep.subr.mxu0 0.0
    %91 = vmatpush1.msra.mxu0 0.0
    %92 = vmatprep.subr.mxu0 0.0
    %93 = vmatpush1.msra.mxu0 0.0
    %94 = vmatprep.subr.mxu0 0.0
    %95 = vmatpush1.msra.mxu0 0.0
    %96 = vmatprep.subr.mxu0 0.0
    %97 = vmatpush1.msra.mxu0 0.0
    %98 = vmatprep.subr.mxu0 0.0
    %99 = vmatpush1.msra.mxu0 0.0
    %100 = vmatprep.subr.mxu0 0.0
    %101 = vmatpush1.msra.mxu0 0.0
    %102 = vmatprep.subr.mxu0 0.0
    %103 = vmatpush1.msra.mxu0 0.0
    %104 = vmatprep.subr.mxu0 0.0
    %105 = vmatpush1.msra.mxu0 0.0
    %106 = vmatprep.subr.mxu0 0.0
    %107 = vmatpush1.msra.mxu0 0.0
    %108 = vmatprep.subr.mxu0 0.0
    %109 = vmatpush1.msra.mxu0 0.0
    %110 = vmatprep.subr.mxu0 0.0
    %111 = vmatpush1.msra.mxu0 0.0
    %112 = vmatprep.subr.mxu0 0.0
    %113 = vmatpush1.msra.mxu0 0.0
    %114 = vmatprep.subr.mxu0 0.0
    %115 = vmatpush1.msra.mxu0 0.0
    %116 = vmatprep.subr.mxu0 0.0
    %117 = vmatpush1.msra.mxu0 0.0
    %118 = vmatprep.subr.mxu0 0.0
    %119 = vmatpush1.msra.mxu0 0.0
    %120 = vmatprep.subr.mxu0 0.0
    %121 = vmatpush1.msra.mxu0 0.0
    %122 = vmatprep.subr.mxu0 0.0
    %123 = vmatpush1.msra.mxu0 0.0
    %124 = vmatprep.subr.mxu0 0.0
    %125 = vmatpush1.msra.mxu0 0.0
    %126 = vmatprep.subr.mxu0 0.0
    %127 = vmatpush1.msra.mxu0 0.0
    %128 = vmatprep.subr.mxu0 0.0
    %129 = vmatpush1.msra.mxu0 0.0
    %130 = vmatprep.subr.mxu0 0.0
    %131 = vmatpush1.msra.mxu0 0.0
    %132 = vmatprep.subr.mxu0 0.0
    %133 = vmatpush1.msra.mxu0 0.0
    %134 = vmatprep.subr.mxu0 0.0
    %135 = vmatpush1.msra.mxu0 0.0
    %136 = vmatprep.subr.mxu0 0.0
    %137 = vmatpush1.msra.mxu0 0.0
    %138 = vmatprep.subr.mxu0 0.0
    %139 = vmatpush1.msra.mxu0 0.0
    %140 = vmatprep.subr.mxu0 0.0
    %141 = vmatpush1.msra.mxu0 0.0
    %142 = vmatprep.subr.mxu0 0.0
    %143 = vmatpush1.msra.mxu0 0.0
    %144 = vmatprep.subr.mxu0 0.0
    %145 = vmatpush1.msra.mxu0 0.0
    %146 = vmatprep.subr.mxu0 0.0
    %147 = vmatpush1.msra.mxu0 0.0
    %148 = vmatprep.subr.mxu0 0.0
    %149 = vmatpush1.msra.mxu0 0.0
    %150 = vmatprep.mubr.f32.mxu0 0.0
    %151 = vmatmul.mubr.f32.gmra.mrb[0].mxu0 %v71
    %v152 = vpop.f32.mrb[0].mxu0
    %v153 = vadd.f32 %v52, %v152
    %v154 = vpop.f32.mrb[0].mxu0
    %155 = vmatprep.mubr.f32.mxu0 0.0
    %156 = vmatmul.mubr.f32.gmra.mrb[0].mxu0 %v74
    %v157 = vpop.f32.mrb[0].mxu0
    %v158 = vadd.f32 %v57, %v157
    %v159 = vpop.f32.mrb[0].mxu0
    %160 = vmatprep.mubr.f32.mxu0 0.0
    %161 = vmatmul.mubr.f32.gmra.mrb[0].mxu0 %v77
    %v162 = vpop.f32.mrb[0].mxu0
    %v163 = vadd.f32 %v62, %v162
    %v164 = vpop.f32.mrb[0].mxu0
    %165 = vmatprep.mubr.f32.mxu0 0.0
    %166 = vmatmul.mubr.f32.gmra.mrb[0].mxu0 %v80
    %v167 = vpop.f32.mrb[0].mxu0
    %v168 = vadd.f32 %v67, %v167
    %v169 = vpop.f32.mrb[0].mxu0
    %170 = vdwg.mxu0
    %v171 = vmax.f32 %v153, 0.0
    %v172 = vmax.f32 %v158, 0.0
    %v173 = vmax.f32 %v163, 0.0
    %v174 = vmax.f32 %v168, 0.0
    %176 = vset.pattern.permute.xlu0 0
    %177 = vperm.xlu0 %176, %v43
    %v178 = vpop.permute.xlu0 %177
    %181 = vset.pattern.permute.xlu0 0
    %182 = vperm.xlu0 %181, %v44
    %v183 = vpop.permute.xlu0 %182
    %186 = vset.pattern.permute.xlu0 0
    %187 = vperm.xlu0 %186, %v45
    %v188 = vpop.permute.xlu0 %187
    %191 = vset.pattern.permute.xlu0 0
    %192 = vperm.xlu0 %191, %v46
    %v193 = vpop.permute.xlu0 %192
    %vm195 = vcmask 261120
    %v197 = vsel %vm195, %v39, 0
    %v200 = vsel %vm195, %v40, 0
    %v203 = vsel %vm195, %v41, 0
    %v206 = vsel %vm195, %v42, 0
    %208 = vmatprep.subr.mxu0 0.0
    %209 = vmatpush1.msra.mxu0 %v171
    %210 = vmatprep.subr.mxu0 0.0
    %211 = vmatpush1.msra.mxu0 %v172
    %212 = vmatprep.subr.mxu0 0.0
    %213 = vmatpush1.msra.mxu0 %v173
    %214 = vmatprep.subr.mxu0 0.0
    %215 = vmatpush1.msra.mxu0 %v174
    %216 = vmatprep.subr.mxu0 0.0
    %217 = vmatpush1.msra.mxu0 0.0
    %218 = vmatprep.subr.mxu0 0.0
    %219 = vmatpush1.msra.mxu0 0.0
    %220 = vmatprep.subr.mxu0 0.0
    %221 = vmatpush1.msra.mxu0 0.0
    %222 = vmatprep.subr.mxu0 0.0
    %223 = vmatpush1.msra.mxu0 0.0
    %224 = vmatprep.subr.mxu0 0.0
    %225 = vmatpush1.msra.mxu0 0.0
    %226 = vmatprep.subr.mxu0 0.0
    %227 = vmatpush1.msra.mxu0 0.0
    %228 = vmatprep.subr.mxu0 0.0
    %229 = vmatpush1.msra.mxu0 0.0
    %230 = vmatprep.subr.mxu0 0.0
    %231 = vmatpush1.msra.mxu0 0.0
    %232 = vmatprep.subr.mxu0 0.0
    %233 = vmatpush1.msra.mxu0 0.0
    %234 = vmatprep.subr.mxu0 0.0
    %235 = vmatpush1.msra.mxu0 0.0
    %236 = vmatprep.subr.mxu0 0.0
    %237 = vmatpush1.msra.mxu0 0.0
    %238 = vmatprep.subr.mxu0 0.0
    %239 = vmatpush1.msra.mxu0 0.0
    %240 = vmatprep.subr.mxu0 0.0
    %241 = vmatpush1.msra.mxu0 0.0
    %242 = vmatprep.subr.mxu0 0.0
    %243 = vmatpush1.msra.mxu0 0.0
    %244 = vmatprep.subr.mxu0 0.0
    %245 = vmatpush1.msra.mxu0 0.0
    %246 = vmatprep.subr.mxu0 0.0
    %247 = vmatpush1.msra.mxu0 0.0
    %248 = vmatprep.subr.mxu0 0.0
    %249 = vmatpush1.msra.mxu0 0.0
    %250 = vmatprep.subr.mxu0 0.0
    %251 = vmatpush1.msra.mxu0 0.0
    %252 = vmatprep.subr.mxu0 0.0
    %253 = vmatpush1.msra.mxu0 0.0
    %254 = vmatprep.subr.mxu0 0.0
    %255 = vmatpush1.msra.mxu0 0.0
    %256 = vmatprep.subr.mxu0 0.0
    %257 = vmatpush1.msra.mxu0 0.0
    %258 = vmatprep.subr.mxu0 0.0
    %259 = vmatpush1.msra.mxu0 0.0
    %260 = vmatprep.subr.mxu0 0.0
    %261 = vmatpush1.msra.mxu0 0.0
    %262 = vmatprep.subr.mxu0 0.0
    %263 = vmatpush1.msra.mxu0 0.0
    %264 = vmatprep.subr.mxu0 0.0
    %265 = vmatpush1.msra.mxu0 0.0
    %266 = vmatprep.subr.mxu0 0.0
    %267 = vmatpush1.msra.mxu0 0.0
    %268 = vmatprep.subr.mxu0 0.0
    %269 = vmatpush1.msra.mxu0 0.0
    %270 = vmatprep.subr.mxu0 0.0
    %271 = vmatpush1.msra.mxu0 0.0
    %272 = vmatprep.mubr.f32.mxu0 0.0
    %273 = vmatmul.mubr.f32.gmra.mrb[0].mxu0 %v197
    %v274 = vpop.f32.mrb[0].mxu0
    %v275 = vadd.f32 %v178, %v274
    %v276 = vpop.f32.mrb[0].mxu0
    %277 = vmatprep.mubr.f32.mxu0 0.0
    %278 = vmatmul.mubr.f32.gmra.mrb[0].mxu0 %v200
    %v279 = vpop.f32.mrb[0].mxu0
    %v280 = vadd.f32 %v183, %v279
    %v281 = vpop.f32.mrb[0].mxu0
    %282 = vmatprep.mubr.f32.mxu0 0.0
    %283 = vmatmul.mubr.f32.gmra.mrb[0].mxu0 %v203
    %v284 = vpop.f32.mrb[0].mxu0
    %v285 = vadd.f32 %v188, %v284
    %v286 = vpop.f32.mrb[0].mxu0
    %287 = vmatprep.mubr.f32.mxu0 0.0
    %288 = vmatmul.mubr.f32.gmra.mrb[0].mxu0 %v206
    %v289 = vpop.f32.mrb[0].mxu0
    %v290 = vadd.f32 %v193, %v289
    %v291 = vpop.f32.mrb[0].mxu0
    %292 = vdwg.mxu0
    %v293 = vmax.f32 %v275, 0.0
    %v294 = vmax.f32 %v280, 0.0
    %v295 = vmax.f32 %v285, 0.0
    %v296 = vmax.f32 %v290, 0.0
    %298 = vset.pattern.permute.xlu0 0
    %299 = vperm.xlu0 %298, %v48
    %v300 = vpop.permute.xlu0 %299
    %v303 = vsel %vm195, %v47, 0
    %305 = vmatprep.subr.mxu0 0.0
    %306 = vmatpush1.msra.mxu0 %v293
    %307 = vmatprep.subr.mxu0 0.0
    %308 = vmatpush1.msra.mxu0 %v294
    %309 = vmatprep.subr.mxu0 0.0
    %310 = vmatpush1.msra.mxu0 %v295
    %311 = vmatprep.subr.mxu0 0.0
    %312 = vmatpush1.msra.mxu0 %v296
    %313 = vmatprep.subr.mxu0 0.0
    %314 = vmatpush1.msra.mxu0 0.0
    %315 = vmatprep.subr.mxu0 0.0
    %316 = vmatpush1.msra.mxu0 0.0
    %317 = vmatprep.subr.mxu0 0.0
    %318 = vmatpush1.msra.mxu0 0.0
    %319 = vmatprep.subr.mxu0 0.0
    %320 = vmatpush1.msra.mxu0 0.0
    %321 = vmatprep.subr.mxu0 0.0
    %322 = vmatpush1.msra.mxu0 0.0
    %323 = vmatprep.subr.mxu0 0.0
    %324 = vmatpush1.msra.mxu0 0.0
    %325 = vmatprep.subr.mxu0 0.0
    %326 = vmatpush1.msra.mxu0 0.0
    %327 = vmatprep.subr.mxu0 0.0
    %328 = vmatpush1.msra.mxu0 0.0
    %329 = vmatprep.subr.mxu0 0.0
    %330 = vmatpush1.msra.mxu0 0.0
    %331 = vmatprep.subr.mxu0 0.0
    %332 = vmatpush1.msra.mxu0 0.0
    %333 = vmatprep.subr.mxu0 0.0
    %334 = vmatpush1.msra.mxu0 0.0
    %335 = vmatprep.subr.mxu0 0.0
    %336 = vmatpush1.msra.mxu0 0.0
    %337 = vmatprep.subr.mxu0 0.0
    %338 = vmatpush1.msra.mxu0 0.0
    %339 = vmatprep.subr.mxu0 0.0
    %340 = vmatpush1.msra.mxu0 0.0
    %341 = vmatprep.subr.mxu0 0.0
    %342 = vmatpush1.msra.mxu0 0.0
    %343 = vmatprep.subr.mxu0 0.0
    %344 = vmatpush1.msra.mxu0 0.0
    %345 = vmatprep.subr.mxu0 0.0
    %346 = vmatpush1.msra.mxu0 0.0
    %347 = vmatprep.subr.mxu0 0.0
    %348 = vmatpush1.msra.mxu0 0.0
    %349 = vmatprep.subr.mxu0 0.0
    %350 = vmatpush1.msra.mxu0 0.0
    %351 = vmatprep.subr.mxu0 0.0
    %352 = vmatpush1.msra.mxu0 0.0
    %353 = vmatprep.subr.mxu0 0.0
    %354 = vmatpush1.msra.mxu0 0.0
    %355 = vmatprep.subr.mxu0 0.0
    %356 = vmatpush1.msra.mxu0 0.0
    %357 = vmatprep.subr.mxu0 0.0
    %358 = vmatpush1.msra.mxu0 0.0
    %359 = vmatprep.subr.mxu0 0.0
    %360 = vmatpush1.msra.mxu0 0.0
    %361 = vmatprep.subr.mxu0 0.0
    %362 = vmatpush1.msra.mxu0 0.0
    %363 = vmatprep.subr.mxu0 0.0
    %364 = vmatpush1.msra.mxu0 0.0
    %365 = vmatprep.subr.mxu0 0.0
    %366 = vmatpush1.msra.mxu0 0.0
    %367 = vmatprep.subr.mxu0 0.0
    %368 = vmatpush1.msra.mxu0 0.0
    %369 = vmatprep.mubr.f32.mxu0 0.0
    %370 = vmatmul.mubr.f32.gmra.mrb[0].mxu0 %v303
    %v371 = vpop.f32.mrb[0].mxu0
    %v372 = vadd.f32 %v300, %v371
    %v373 = vpop.f32.mrb[0].mxu0
    %374 = vdwg.mxu0
    %v375 = vtanh.pop %v372
    %v376 = vmul.f32 %v375, 1.442695
    %v377 = vpow.pop %v376
    %v378 = vrot.slane %v30, 4
    %v380 = vmul.f32 %v377, %v378
    %v382 = vrot.slane %v372, 4
    %v384 = vadd.f32 %v380, %v382
    %v385 = vadd.f32 %v375, 0.0
    %s386 = scalar_lea.vmem %s1, 32
    %v387 = vld [vmem:[%s386] sm:$0xff]
    %v388 = vld [vmem:[%s386 + $0x8] sm:$0xff]
    %v389 = vld [vmem:[%s386 + $0x10] sm:$0xff]
    %v390 = vld [vmem:[%s386 + $0x18] sm:$0xff]
    %s391 = scalar_lea.vmem %s2, 32
    %v392 = vld [vmem:[%s391] sm:$0xff]
    %v393 = vld [vmem:[%s391 + $0x8] sm:$0xff]
    %v394 = vld [vmem:[%s391 + $0x10] sm:$0xff]
    %v395 = vld [vmem:[%s391 + $0x18] sm:$0xff]
    %s396 = scalar_lea.vmem %s3, 32
    %v397 = vld [vmem:[%s396] sm:$0xff]
    %v398 = vld [vmem:[%s396 + $0x8] sm:$0xff]
    %v399 = vld [vmem:[%s396 + $0x10] sm:$0xff]
    %v400 = vld [vmem:[%s396 + $0x18] sm:$0xff]
    %s401 = scalar_lea.vmem %s4, 32
    %v402 = vld [vmem:[%s401] sm:$0xff]
    %v403 = vld [vmem:[%s401 + $0x8] sm:$0xff]
    %v404 = vld [vmem:[%s401 + $0x10] sm:$0xff]
    %v405 = vld [vmem:[%s401 + $0x18] sm:$0xff]
    %s406 = scalar_lea.vmem %s5, 8
    %v407 = vld [vmem:[%s406] sm:$0xff]
    %s408 = scalar_lea.vmem %s6, 8
    %v409 = vld [vmem:[%s408] sm:$0xff]
    %411 = vset.pattern.permute.xlu0 0
    %412 = vperm.xlu0 %411, %v392
    %v413 = vpop.permute.xlu0 %412
    %416 = vset.pattern.permute.xlu0 0
    %417 = vperm.xlu0 %416, %v393
    %v418 = vpop.permute.xlu0 %417
    %421 = vset.pattern.permute.xlu0 0
    %422 = vperm.xlu0 %421, %v394
    %v423 = vpop.permute.xlu0 %422
    %426 = vset.pattern.permute.xlu0 0
    %427 = vperm.xlu0 %426, %v395
    %v428 = vpop.permute.xlu0 %427
    %v431 = vsel %vm69, %v387, 0
    %v434 = vsel %vm69, %v388, 0
    %v437 = vsel %vm69, %v389, 0
    %v440 = vsel %vm69, %v390, 0
    %v443 = vsel %vm82, %v384, 0
    %445 = vmatprep.subr.mxu0 0.0
    %446 = vmatpush1.msra.mxu0 %v443
    %447 = vmatprep.subr.mxu0 0.0
    %448 = vmatpush1.msra.mxu0 0.0
    %449 = vmatprep.subr.mxu0 0.0
    %450 = vmatpush1.msra.mxu0 0.0
    %451 = vmatprep.subr.mxu0 0.0
    %452 = vmatpush1.msra.mxu0 0.0
    %453 = vmatprep.subr.mxu0 0.0
    %454 = vmatpush1.msra.mxu0 0.0
    %455 = vmatprep.subr.mxu0 0.0
    %456 = vmatpush1.msra.mxu0 0.0
    %457 = vmatprep.subr.mxu0 0.0
    %458 = vmatpush1.msra.mxu0 0.0
    %459 = vmatprep.subr.mxu0 0.0
    %460 = vmatpush1.msra.mxu0 0.0
    %461 = vmatprep.subr.mxu0 0.0
    %462 = vmatpush1.msra.mxu0 0.0
    %463 = vmatprep.subr.mxu0 0.0
    %464 = vmatpush1.msra.mxu0 0.0
    %465 = vmatprep.subr.mxu0 0.0
    %466 = vmatpush1.msra.mxu0 0.0
    %467 = vmatprep.subr.mxu0 0.0
    %468 = vmatpush1.msra.mxu0 0.0
    %469 = vmatprep.subr.mxu0 0.0
    %470 = vmatpush1.msra.mxu0 0.0
    %471 = vmatprep.subr.mxu0 0.0
    %472 = vmatpush1.msra.mxu0 0.0
    %473 = vmatprep.subr.mxu0 0.0
    %474 = vmatpush1.msra.mxu0 0.0
    %475 = vmatprep.subr.mxu0 0.0
    %476 = vmatpush1.msra.mxu0 0.0
    %477 = vmatprep.subr.mxu0 0.0
    %478 = vmatpush1.msra.mxu0 0.0
    %479 = vmatprep.subr.mxu0 0.0
    %480 = vmatpush1.msra.mxu0 0.0
    %481 = vmatprep.subr.mxu0 0.0
    %482 = vmatpush1.msra.mxu0 0.0
    %483 = vmatprep.subr.mxu0 0.0
    %484 = vmatpush1.msra.mxu0 0.0
    %485 = vmatprep.subr.mxu0 0.0
    %486 = vmatpush1.msra.mxu0 0.0
    %487 = vmatprep.subr.mxu0 0.0
    %488 = vmatpush1.msra.mxu0 0.0
    %489 = vmatprep.subr.mxu0 0.0
    %490 = vmatpush1.msra.mxu0 0.0
    %491 = vmatprep.subr.mxu0 0.0
    %492 = vmatpush1.msra.mxu0 0.0
    %493 = vmatprep.subr.mxu0 0.0
    %494 = vmatpush1.msra.mxu0 0.0
    %495 = vmatprep.subr.mxu0 0.0
    %496 = vmatpush1.msra.mxu0 0.0
    %497 = vmatprep.subr.mxu0 0.0
    %498 = vmatpush1.msra.mxu0 0.0
    %499 = vmatprep.subr.mxu0 0.0
    %500 = vmatpush1.msra.mxu0 0.0
    %501 = vmatprep.subr.mxu0 0.0
    %502 = vmatpush1.msra.mxu0 0.0
    %503 = vmatprep.subr.mxu0 0.0
    %504 = vmatpush1.msra.mxu0 0.0
    %505 = vmatprep.subr.mxu0 0.0
    %506 = vmatpush1.msra.mxu0 0.0
    %507 = vmatprep.subr.mxu0 0.0
    %508 = vmatpush1.msra.mxu0 0.0
    %509 = vmatprep.mubr.f32.mxu0 0.0
    %510 = vmatmul.mubr.f32.gmra.mrb[0].mxu0 %v431
    %v511 = vpop.f32.mrb[0].mxu0
    %v512 = vadd.f32 %v413, %v511
    %v513 = vpop.f32.mrb[0].mxu0
    %514 = vmatprep.mubr.f32.mxu0 0.0
    %515 = vmatmul.mubr.f32.gmra.mrb[0].mxu0 %v434
    %v516 = vpop.f32.mrb[0].mxu0
    %v517 = vadd.f32 %v418, %v516
    %v518 = vpop.f32.mrb[0].mxu0
    %519 = vmatprep.mubr.f32.mxu0 0.0
    %520 = vmatmul.mubr.f32.gmra.mrb[0].mxu0 %v437
    %v521 = vpop.f32.mrb[0].mxu0
    %v522 = vadd.f32 %v423, %v521
    %v523 = vpop.f32.mrb[0].mxu0
    %524 = vmatprep.mubr.f32.mxu0 0.0
    %525 = vmatmul.mubr.f32.gmra.mrb[0].mxu0 %v440
    %v526 = vpop.f32.mrb[0].mxu0
    %v527 = vadd.f32 %v428, %v526
    %v528 = vpop.f32.mrb[0].mxu0
    %529 = vdwg.mxu0
    %v530 = vmax.f32 %v512, 0.0
    %v531 = vmax.f32 %v517, 0.0
    %v532 = vmax.f32 %v522, 0.0
    %v533 = vmax.f32 %v527, 0.0
    %535 = vset.pattern.permute.xlu0 0
    %536 = vperm.xlu0 %535, %v402
    %v537 = vpop.permute.xlu0 %536
    %540 = vset.pattern.permute.xlu0 0
    %541 = vperm.xlu0 %540, %v403
    %v542 = vpop.permute.xlu0 %541
    %545 = vset.pattern.permute.xlu0 0
    %546 = vperm.xlu0 %545, %v404
    %v547 = vpop.permute.xlu0 %546
    %550 = vset.pattern.permute.xlu0 0
    %551 = vperm.xlu0 %550, %v405
    %v552 = vpop.permute.xlu0 %551
    %v555 = vsel %vm195, %v397, 0
    %v558 = vsel %vm195, %v398, 0
    %v561 = vsel %vm195, %v399, 0
    %v564 = vsel %vm195, %v400, 0
    %566 = vmatprep.subr.mxu0 0.0
    %567 = vmatpush1.msra.mxu0 %v530
    %568 = vmatprep.subr.mxu0 0.0
    %569 = vmatpush1.msra.mxu0 %v531
    %570 = vmatprep.subr.mxu0 0.0
    %571 = vmatpush1.msra.mxu0 %v532
    %572 = vmatprep.subr.mxu0 0.0
    %573 = vmatpush1.msra.mxu0 %v533
    %574 = vmatprep.subr.mxu0 0.0
    %575 = vmatpush1.msra.mxu0 0.0
    %576 = vmatprep.subr.mxu0 0.0
    %577 = vmatpush1.msra.mxu0 0.0
    %578 = vmatprep.subr.mxu0 0.0
    %579 = vmatpush1.msra.mxu0 0.0
    %580 = vmatprep.subr.mxu0 0.0
    %581 = vmatpush1.msra.mxu0 0.0
    %582 = vmatprep.subr.mxu0 0.0
    %583 = vmatpush1.msra.mxu0 0.0
    %584 = vmatprep.subr.mxu0 0.0
    %585 = vmatpush1.msra.mxu0 0.0
    %586 = vmatprep.subr.mxu0 0.0
    %587 = vmatpush1.msra.mxu0 0.0
    %588 = vmatprep.subr.mxu0 0.0
    %589 = vmatpush1.msra.mxu0 0.0
    %590 = vmatprep.subr.mxu0 0.0
    %591 = vmatpush1.msra.mxu0 0.0
    %592 = vmatprep.subr.mxu0 0.0
    %593 = vmatpush1.msra.mxu0 0.0
    %594 = vmatprep.subr.mxu0 0.0
    %595 = vmatpush1.msra.mxu0 0.0
    %596 = vmatprep.subr.mxu0 0.0
    %597 = vmatpush1.msra.mxu0 0.0
    %598 = vmatprep.subr.mxu0 0.0
    %599 = vmatpush1.msra.mxu0 0.0
    %600 = vmatprep.subr.mxu0 0.0
    %601 = vmatpush1.msra.mxu0 0.0
    %602 = vmatprep.subr.mxu0 0.0
    %603 = vmatpush1.msra.mxu0 0.0
    %604 = vmatprep.subr.mxu0 0.0
    %605 = vmatpush1.msra.mxu0 0.0
    %606 = vmatprep.subr.mxu0 0.0
    %607 = vmatpush1.msra.mxu0 0.0
    %608 = vmatprep.subr.mxu0 0.0
    %609 = vmatpush1.msra.mxu0 0.0
    %610 = vmatprep.subr.mxu0 0.0
    %611 = vmatpush1.msra.mxu0 0.0
    %612 = vmatprep.subr.mxu0 0.0
    %613 = vmatpush1.msra.mxu0 0.0
    %614 = vmatprep.subr.mxu0 0.0
    %615 = vmatpush1.msra.mxu0 0.0
    %616 = vmatprep.subr.mxu0 0.0
    %617 = vmatpush1.msra.mxu0 0.0
    %618 = vmatprep.subr.mxu0 0.0
    %619 = vmatpush1.msra.mxu0 0.0
    %620 = vmatprep.subr.mxu0 0.0
    %621 = vmatpush1.msra.mxu0 0.0
    %622 = vmatprep.subr.mxu0 0.0
    %623 = vmatpush1.msra.mxu0 0.0
    %624 = vmatprep.subr.mxu0 0.0
    %625 = vmatpush1.msra.mxu0 0.0
    %626 = vmatprep.subr.mxu0 0.0
    %627 = vmatpush1.msra.mxu0 0.0
    %628 = vmatprep.subr.mxu0 0.0
    %629 = vmatpush1.msra.mxu0 0.0
    %630 = vmatprep.mubr.f32.mxu0 0.0
    %631 = vmatmul.mubr.f32.gmra.mrb[0].mxu0 %v555
    %v632 = vpop.f32.mrb[0].mxu0
    %v633 = vadd.f32 %v537, %v632
    %v634 = vpop.f32.mrb[0].mxu0
    %635 = vmatprep.mubr.f32.mxu0 0.0
    %636 = vmatmul.mubr.f32.gmra.mrb[0].mxu0 %v558
    %v637 = vpop.f32.mrb[0].mxu0
    %v638 = vadd.f32 %v542, %v637
    %v639 = vpop.f32.mrb[0].mxu0
    %640 = vmatprep.mubr.f32.mxu0 0.0
    %641 = vmatmul.mubr.f32.gmra.mrb[0].mxu0 %v561
    %v642 = vpop.f32.mrb[0].mxu0
    %v643 = vadd.f32 %v547, %v642
    %v644 = vpop.f32.mrb[0].mxu0
    %645 = vmatprep.mubr.f32.mxu0 0.0
    %646 = vmatmul.mubr.f32.gmra.mrb[0].mxu0 %v564
    %v647 = vpop.f32.mrb[0].mxu0
    %v648 = vadd.f32 %v552, %v647
    %v649 = vpop.f32.mrb[0].mxu0
    %650 = vdwg.mxu0
    %v651 = vmax.f32 %v633, 0.0
    %v652 = vmax.f32 %v638, 0.0
    %v653 = vmax.f32 %v643, 0.0
    %v654 = vmax.f32 %v648, 0.0
    %656 = vset.pattern.permute.xlu0 0
    %657 = vperm.xlu0 %656, %v409
    %v658 = vpop.permute.xlu0 %657
    %v661 = vsel %vm195, %v407, 0
    %663 = vmatprep.subr.mxu0 0.0
    %664 = vmatpush1.msra.mxu0 %v651
    %665 = vmatprep.subr.mxu0 0.0
    %666 = vmatpush1.msra.mxu0 %v652
    %667 = vmatprep.subr.mxu0 0.0
    %668 = vmatpush1.msra.mxu0 %v653
    %669 = vmatprep.subr.mxu0 0.0
    %670 = vmatpush1.msra.mxu0 %v654
    %671 = vmatprep.subr.mxu0 0.0
    %672 = vmatpush1.msra.mxu0 0.0
    %673 = vmatprep.subr.mxu0 0.0
    %674 = vmatpush1.msra.mxu0 0.0
    %675 = vmatprep.subr.mxu0 0.0
    %676 = vmatpush1.msra.mxu0 0.0
    %677 = vmatprep.subr.mxu0 0.0
    %678 = vmatpush1.msra.mxu0 0.0
    %679 = vmatprep.subr.mxu0 0.0
    %680 = vmatpush1.msra.mxu0 0.0
    %681 = vmatprep.subr.mxu0 0.0
    %682 = vmatpush1.msra.mxu0 0.0
    %683 = vmatprep.subr.mxu0 0.0
    %684 = vmatpush1.msra.mxu0 0.0
    %685 = vmatprep.subr.mxu0 0.0
    %686 = vmatpush1.msra.mxu0 0.0
    %687 = vmatprep.subr.mxu0 0.0
    %688 = vmatpush1.msra.mxu0 0.0
    %689 = vmatprep.subr.mxu0 0.0
    %690 = vmatpush1.msra.mxu0 0.0
    %691 = vmatprep.subr.mxu0 0.0
    %692 = vmatpush1.msra.mxu0 0.0
    %693 = vmatprep.subr.mxu0 0.0
    %694 = vmatpush1.msra.mxu0 0.0
    %695 = vmatprep.subr.mxu0 0.0
    %696 = vmatpush1.msra.mxu0 0.0
    %697 = vmatprep.subr.mxu0 0.0
    %698 = vmatpush1.msra.mxu0 0.0
    %699 = vmatprep.subr.mxu0 0.0
    %700 = vmatpush1.msra.mxu0 0.0
    %701 = vmatprep.subr.mxu0 0.0
    %702 = vmatpush1.msra.mxu0 0.0
    %703 = vmatprep.subr.mxu0 0.0
    %704 = vmatpush1.msra.mxu0 0.0
    %705 = vmatprep.subr.mxu0 0.0
    %706 = vmatpush1.msra.mxu0 0.0
    %707 = vmatprep.subr.mxu0 0.0
    %708 = vmatpush1.msra.mxu0 0.0
    %709 = vmatprep.subr.mxu0 0.0
    %710 = vmatpush1.msra.mxu0 0.0
    %711 = vmatprep.subr.mxu0 0.0
    %712 = vmatpush1.msra.mxu0 0.0
    %713 = vmatprep.subr.mxu0 0.0
    %714 = vmatpush1.msra.mxu0 0.0
    %715 = vmatprep.subr.mxu0 0.0
    %716 = vmatpush1.msra.mxu0 0.0
    %717 = vmatprep.subr.mxu0 0.0
    %718 = vmatpush1.msra.mxu0 0.0
    %719 = vmatprep.subr.mxu0 0.0
    %720 = vmatpush1.msra.mxu0 0.0
    %721 = vmatprep.subr.mxu0 0.0
    %722 = vmatpush1.msra.mxu0 0.0
    %723 = vmatprep.subr.mxu0 0.0
    %724 = vmatpush1.msra.mxu0 0.0
    %725 = vmatprep.subr.mxu0 0.0
    %726 = vmatpush1.msra.mxu0 0.0
    %727 = vmatprep.mubr.f32.mxu0 0.0
    %728 = vmatmul.mubr.f32.gmra.mrb[0].mxu0 %v661
    %v729 = vpop.f32.mrb[0].mxu0
    %v730 = vadd.f32 %v658, %v729
    %v731 = vpop.f32.mrb[0].mxu0
    %732 = vdwg.mxu0
    %v733 = vtanh.pop %v730
    %v734 = vmul.f32 %v733, 1.442695
    %v735 = vpow.pop %v734
    %v736 = vmul.f32 %v735, %v30
    %v738 = vrot.slane %v730, 4
    %v740 = vadd.f32 %v736, %v738
    %v741 = vadd.f32 %v385, %v733
    %s742 = scalar_lea.vmem %s1, 64
    %v743 = vld [vmem:[%s742] sm:$0xff]
    %v744 = vld [vmem:[%s742 + $0x8] sm:$0xff]
    %v745 = vld [vmem:[%s742 + $0x10] sm:$0xff]
    %v746 = vld [vmem:[%s742 + $0x18] sm:$0xff]
    %s747 = scalar_lea.vmem %s2, 64
    %v748 = vld [vmem:[%s747] sm:$0xff]
    %v749 = vld [vmem:[%s747 + $0x8] sm:$0xff]
    %v750 = vld [vmem:[%s747 + $0x10] sm:$0xff]
    %v751 = vld [vmem:[%s747 + $0x18] sm:$0xff]
    %s752 = scalar_lea.vmem %s3, 64
    %v753 = vld [vmem:[%s752] sm:$0xff]
    %v754 = vld [vmem:[%s752 + $0x8] sm:$0xff]
    %v755 = vld [vmem:[%s752 + $0x10] sm:$0xff]
    %v756 = vld [vmem:[%s752 + $0x18] sm:$0xff]
    %s757 = scalar_lea.vmem %s4, 64
    %v758 = vld [vmem:[%s757] sm:$0xff]
    %v759 = vld [vmem:[%s757 + $0x8] sm:$0xff]
    %v760 = vld [vmem:[%s757 + $0x10] sm:$0xff]
    %v761 = vld [vmem:[%s757 + $0x18] sm:$0xff]
    %s762 = scalar_lea.vmem %s5, 16
    %v763 = vld [vmem:[%s762] sm:$0xff]
    %s764 = scalar_lea.vmem %s6, 16
    %v765 = vld [vmem:[%s764] sm:$0xff]
    %767 = vset.pattern.permute.xlu0 0
    %768 = vperm.xlu0 %767, %v748
    %v769 = vpop.permute.xlu0 %768
    %772 = vset.pattern.permute.xlu0 0
    %773 = vperm.xlu0 %772, %v749
    %v774 = vpop.permute.xlu0 %773
    %777 = vset.pattern.permute.xlu0 0
    %778 = vperm.xlu0 %777, %v750
    %v779 = vpop.permute.xlu0 %778
    %782 = vset.pattern.permute.xlu0 0
    %783 = vperm.xlu0 %782, %v751
    %v784 = vpop.permute.xlu0 %783
    %v787 = vsel %vm69, %v743, 0
    %v790 = vsel %vm69, %v744, 0
    %v793 = vsel %vm69, %v745, 0
    %v796 = vsel %vm69, %v746, 0
    %v799 = vsel %vm82, %v740, 0
    %801 = vmatprep.subr.mxu0 0.0
    %802 = vmatpush1.msra.mxu0 %v799
    %803 = vmatprep.subr.mxu0 0.0
    %804 = vmatpush1.msra.mxu0 0.0
    %805 = vmatprep.subr.mxu0 0.0
    %806 = vmatpush1.msra.mxu0 0.0
    %807 = vmatprep.subr.mxu0 0.0
    %808 = vmatpush1.msra.mxu0 0.0
    %809 = vmatprep.subr.mxu0 0.0
    %810 = vmatpush1.msra.mxu0 0.0
    %811 = vmatprep.subr.mxu0 0.0
    %812 = vmatpush1.msra.mxu0 0.0
    %813 = vmatprep.subr.mxu0 0.0
    %814 = vmatpush1.msra.mxu0 0.0
    %815 = vmatprep.subr.mxu0 0.0
    %816 = vmatpush1.msra.mxu0 0.0
    %817 = vmatprep.subr.mxu0 0.0
    %818 = vmatpush1.msra.mxu0 0.0
    %819 = vmatprep.subr.mxu0 0.0
    %820 = vmatpush1.msra.mxu0 0.0
    %821 = vmatprep.subr.mxu0 0.0
    %822 = vmatpush1.msra.mxu0 0.0
    %823 = vmatprep.subr.mxu0 0.0
    %824 = vmatpush1.msra.mxu0 0.0
    %825 = vmatprep.subr.mxu0 0.0
    %826 = vmatpush1.msra.mxu0 0.0
    %827 = vmatprep.subr.mxu0 0.0
    %828 = vmatpush1.msra.mxu0 0.0
    %829 = vmatprep.subr.mxu0 0.0
    %830 = vmatpush1.msra.mxu0 0.0
    %831 = vmatprep.subr.mxu0 0.0
    %832 = vmatpush1.msra.mxu0 0.0
    %833 = vmatprep.subr.mxu0 0.0
    %834 = vmatpush1.msra.mxu0 0.0
    %835 = vmatprep.subr.mxu0 0.0
    %836 = vmatpush1.msra.mxu0 0.0
    %837 = vmatprep.subr.mxu0 0.0
    %838 = vmatpush1.msra.mxu0 0.0
    %839 = vmatprep.subr.mxu0 0.0
    %840 = vmatpush1.msra.mxu0 0.0
    %841 = vmatprep.subr.mxu0 0.0
    %842 = vmatpush1.msra.mxu0 0.0
    %843 = vmatprep.subr.mxu0 0.0
    %844 = vmatpush1.msra.mxu0 0.0
    %845 = vmatprep.subr.mxu0 0.0
    %846 = vmatpush1.msra.mxu0 0.0
    %847 = vmatprep.subr.mxu0 0.0
    %848 = vmatpush1.msra.mxu0 0.0
    %849 = vmatprep.subr.mxu0 0.0
    %850 = vmatpush1.msra.mxu0 0.0
    %851 = vmatprep.subr.mxu0 0.0
    %852 = vmatpush1.msra.mxu0 0.0
    %853 = vmatprep.subr.mxu0 0.0
    %854 = vmatpush1.msra.mxu0 0.0
    %855 = vmatprep.subr.mxu0 0.0
    %856 = vmatpush1.msra.mxu0 0.0
    %857 = vmatprep.subr.mxu0 0.0
    %858 = vmatpush1.msra.mxu0 0.0
    %859 = vmatprep.subr.mxu0 0.0
    %860 = vmatpush1.msra.mxu0 0.0
    %861 = vmatprep.subr.mxu0 0.0
    %862 = vmatpush1.msra.mxu0 0.0
    %863 = vmatprep.subr.mxu0 0.0
    %864 = vmatpush1.msra.mxu0 0.0
    %865 = vmatprep.mubr.f32.mxu0 0.0
    %866 = vmatmul.mubr.f32.gmra.mrb[0].mxu0 %v787
    %v867 = vpop.f32.mrb[0].mxu0
    %v868 = vadd.f32 %v769, %v867
    %v869 = vpop.f32.mrb[0].mxu0
    %870 = vmatprep.mubr.f32.mxu0 0.0
    %871 = vmatmul.mubr.f32.gmra.mrb[0].mxu0 %v790
    %v872 = vpop.f32.mrb[0].mxu0
    %v873 = vadd.f32 %v774, %v872
    %v874 = vpop.f32.mrb[0].mxu0
    %875 = vmatprep.mubr.f32.mxu0 0.0
    %876 = vmatmul.mubr.f32.gmra.mrb[0].mxu0 %v793
    %v877 = vpop.f32.mrb[0].mxu0
    %v878 = vadd.f32 %v779, %v877
    %v879 = vpop.f32.mrb[0].mxu0
    %880 = vmatprep.mubr.f32.mxu0 0.0
    %881 = vmatmul.mubr.f32.gmra.mrb[0].mxu0 %v796
    %v882 = vpop.f32.mrb[0].mxu0
    %v883 = vadd.f32 %v784, %v882
    %v884 = vpop.f32.mrb[0].mxu0
    %885 = vdwg.mxu0
    %v886 = vmax.f32 %v868, 0.0
    %v887 = vmax.f32 %v873, 0.0
    %v888 = vmax.f32 %v878, 0.0
    %v889 = vmax.f32 %v883, 0.0
    %891 = vset.pattern.permute.xlu0 0
    %892 = vperm.xlu0 %891, %v758
    %v893 = vpop.permute.xlu0 %892
    %896 = vset.pattern.permute.xlu0 0
    %897 = vperm.xlu0 %896, %v759
    %v898 = vpop.permute.xlu0 %897
    %901 = vset.pattern.permute.xlu0 0
    %902 = vperm.xlu0 %901, %v760
    %v903 = vpop.permute.xlu0 %902
    %906 = vset.pattern.permute.xlu0 0
    %907 = vperm.xlu0 %906, %v761
    %v908 = vpop.permute.xlu0 %907
    %v911 = vsel %vm195, %v753, 0
    %v914 = vsel %vm195, %v754, 0
    %v917 = vsel %vm195, %v755, 0
    %v920 = vsel %vm195, %v756, 0
    %922 = vmatprep.subr.mxu0 0.0
    %923 = vmatpush1.msra.mxu0 %v886
    %924 = vmatprep.subr.mxu0 0.0
    %925 = vmatpush1.msra.mxu0 %v887
    %926 = vmatprep.subr.mxu0 0.0
    %927 = vmatpush1.msra.mxu0 %v888
    %928 = vmatprep.subr.mxu0 0.0
    %929 = vmatpush1.msra.mxu0 %v889
    %930 = vmatprep.subr.mxu0 0.0
    %931 = vmatpush1.msra.mxu0 0.0
    %932 = vmatprep.subr.mxu0 0.0
    %933 = vmatpush1.msra.mxu0 0.0
    %934 = vmatprep.subr.mxu0 0.0
    %935 = vmatpush1.msra.mxu0 0.0
    %936 = vmatprep.subr.mxu0 0.0
    %937 = vmatpush1.msra.mxu0 0.0
    %938 = vmatprep.subr.mxu0 0.0
    %939 = vmatpush1.msra.mxu0 0.0
    %940 = vmatprep.subr.mxu0 0.0
    %941 = vmatpush1.msra.mxu0 0.0
    %942 = vmatprep.subr.mxu0 0.0
    %943 = vmatpush1.msra.mxu0 0.0
    %944 = vmatprep.subr.mxu0 0.0
    %945 = vmatpush1.msra.mxu0 0.0
    %946 = vmatprep.subr.mxu0 0.0
    %947 = vmatpush1.msra.mxu0 0.0
    %948 = vmatprep.subr.mxu0 0.0
    %949 = vmatpush1.msra.mxu0 0.0
    %950 = vmatprep.subr.mxu0 0.0
    %951 = vmatpush1.msra.mxu0 0.0
    %952 = vmatprep.subr.mxu0 0.0
    %953 = vmatpush1.msra.mxu0 0.0
    %954 = vmatprep.subr.mxu0 0.0
    %955 = vmatpush1.msra.mxu0 0.0
    %956 = vmatprep.subr.mxu0 0.0
    %957 = vmatpush1.msra.mxu0 0.0
    %958 = vmatprep.subr.mxu0 0.0
    %959 = vmatpush1.msra.mxu0 0.0
    %960 = vmatprep.subr.mxu0 0.0
    %961 = vmatpush1.msra.mxu0 0.0
    %962 = vmatprep.subr.mxu0 0.0
    %963 = vmatpush1.msra.mxu0 0.0
    %964 = vmatprep.subr.mxu0 0.0
    %965 = vmatpush1.msra.mxu0 0.0
    %966 = vmatprep.subr.mxu0 0.0
    %967 = vmatpush1.msra.mxu0 0.0
    %968 = vmatprep.subr.mxu0 0.0
    %969 = vmatpush1.msra.mxu0 0.0
    %970 = vmatprep.subr.mxu0 0.0
    %971 = vmatpush1.msra.mxu0 0.0
    %972 = vmatprep.subr.mxu0 0.0
    %973 = vmatpush1.msra.mxu0 0.0
    %974 = vmatprep.subr.mxu0 0.0
    %975 = vmatpush1.msra.mxu0 0.0
    %976 = vmatprep.subr.mxu0 0.0
    %977 = vmatpush1.msra.mxu0 0.0
    %978 = vmatprep.subr.mxu0 0.0
    %979 = vmatpush1.msra.mxu0 0.0
    %980 = vmatprep.subr.mxu0 0.0
    %981 = vmatpush1.msra.mxu0 0.0
    %982 = vmatprep.subr.mxu0 0.0
    %983 = vmatpush1.msra.mxu0 0.0
    %984 = vmatprep.subr.mxu0 0.0
    %985 = vmatpush1.msra.mxu0 0.0
    %986 = vmatprep.mubr.f32.mxu0 0.0
    %987 = vmatmul.mubr.f32.gmra.mrb[0].mxu0 %v911
    %v988 = vpop.f32.mrb[0].mxu0
    %v989 = vadd.f32 %v893, %v988
    %v990 = vpop.f32.mrb[0].mxu0
    %991 = vmatprep.mubr.f32.mxu0 0.0
    %992 = vmatmul.mubr.f32.gmra.mrb[0].mxu0 %v914
    %v993 = vpop.f32.mrb[0].mxu0
    %v994 = vadd.f32 %v898, %v993
    %v995 = vpop.f32.mrb[0].mxu0
    %996 = vmatprep.mubr.f32.mxu0 0.0
    %997 = vmatmul.mubr.f32.gmra.mrb[0].mxu0 %v917
    %v998 = vpop.f32.mrb[0].mxu0
    %v999 = vadd.f32 %v903, %v998
    %v1000 = vpop.f32.mrb[0].mxu0
    %1001 = vmatprep.mubr.f32.mxu0 0.0
    %1002 = vmatmul.mubr.f32.gmra.mrb[0].mxu0 %v920
    %v1003 = vpop.f32.mrb[0].mxu0
    %v1004 = vadd.f32 %v908, %v1003
    %v1005 = vpop.f32.mrb[0].mxu0
    %1006 = vdwg.mxu0
    %v1007 = vmax.f32 %v989, 0.0
    %v1008 = vmax.f32 %v994, 0.0
    %v1009 = vmax.f32 %v999, 0.0
    %v1010 = vmax.f32 %v1004, 0.0
    %1012 = vset.pattern.permute.xlu0 0
    %1013 = vperm.xlu0 %1012, %v765
    %v1014 = vpop.permute.xlu0 %1013
    %v1017 = vsel %vm195, %v763, 0
    %1019 = vmatprep.subr.mxu0 0.0
    %1020 = vmatpush1.msra.mxu0 %v1007
    %1021 = vmatprep.subr.mxu0 0.0
    %1022 = vmatpush1.msra.mxu0 %v1008
    %1023 = vmatprep.subr.mxu0 0.0
    %1024 = vmatpush1.msra.mxu0 %v1009
    %1025 = vmatprep.subr.mxu0 0.0
    %1026 = vmatpush1.msra.mxu0 %v1010
    %1027 = vmatprep.subr.mxu0 0.0
    %1028 = vmatpush1.msra.mxu0 0.0
    %1029 = vmatprep.subr.mxu0 0.0
    %1030 = vmatpush1.msra.mxu0 0.0
    %1031 = vmatprep.subr.mxu0 0.0
    %1032 = vmatpush1.msra.mxu0 0.0
    %1033 = vmatprep.subr.mxu0 0.0
    %1034 = vmatpush1.msra.mxu0 0.0
    %1035 = vmatprep.subr.mxu0 0.0
    %1036 = vmatpush1.msra.mxu0 0.0
    %1037 = vmatprep.subr.mxu0 0.0
    %1038 = vmatpush1.msra.mxu0 0.0
    %1039 = vmatprep.subr.mxu0 0.0
    %1040 = vmatpush1.msra.mxu0 0.0
    %1041 = vmatprep.subr.mxu0 0.0
    %1042 = vmatpush1.msra.mxu0 0.0
    %1043 = vmatprep.subr.mxu0 0.0
    %1044 = vmatpush1.msra.mxu0 0.0
    %1045 = vmatprep.subr.mxu0 0.0
    %1046 = vmatpush1.msra.mxu0 0.0
    %1047 = vmatprep.subr.mxu0 0.0
    %1048 = vmatpush1.msra.mxu0 0.0
    %1049 = vmatprep.subr.mxu0 0.0
    %1050 = vmatpush1.msra.mxu0 0.0
    %1051 = vmatprep.subr.mxu0 0.0
    %1052 = vmatpush1.msra.mxu0 0.0
    %1053 = vmatprep.subr.mxu0 0.0
    %1054 = vmatpush1.msra.mxu0 0.0
    %1055 = vmatprep.subr.mxu0 0.0
    %1056 = vmatpush1.msra.mxu0 0.0
    %1057 = vmatprep.subr.mxu0 0.0
    %1058 = vmatpush1.msra.mxu0 0.0
    %1059 = vmatprep.subr.mxu0 0.0
    %1060 = vmatpush1.msra.mxu0 0.0
    %1061 = vmatprep.subr.mxu0 0.0
    %1062 = vmatpush1.msra.mxu0 0.0
    %1063 = vmatprep.subr.mxu0 0.0
    %1064 = vmatpush1.msra.mxu0 0.0
    %1065 = vmatprep.subr.mxu0 0.0
    %1066 = vmatpush1.msra.mxu0 0.0
    %1067 = vmatprep.subr.mxu0 0.0
    %1068 = vmatpush1.msra.mxu0 0.0
    %1069 = vmatprep.subr.mxu0 0.0
    %1070 = vmatpush1.msra.mxu0 0.0
    %1071 = vmatprep.subr.mxu0 0.0
    %1072 = vmatpush1.msra.mxu0 0.0
    %1073 = vmatprep.subr.mxu0 0.0
    %1074 = vmatpush1.msra.mxu0 0.0
    %1075 = vmatprep.subr.mxu0 0.0
    %1076 = vmatpush1.msra.mxu0 0.0
    %1077 = vmatprep.subr.mxu0 0.0
    %1078 = vmatpush1.msra.mxu0 0.0
    %1079 = vmatprep.subr.mxu0 0.0
    %1080 = vmatpush1.msra.mxu0 0.0
    %1081 = vmatprep.subr.mxu0 0.0
    %1082 = vmatpush1.msra.mxu0 0.0
    %1083 = vmatprep.mubr.f32.mxu0 0.0
    %1084 = vmatmul.mubr.f32.gmra.mrb[0].mxu0 %v1017
    %v1085 = vpop.f32.mrb[0].mxu0
    %v1086 = vadd.f32 %v1014, %v1085
    %v1087 = vpop.f32.mrb[0].mxu0
    %1088 = vdwg.mxu0
    %v1089 = vtanh.pop %v1086
    %v1090 = vmul.f32 %v1089, 1.442695
    %v1091 = vpow.pop %v1090
    %v1092 = vmul.f32 %v1091, %v384
    %v1094 = vrot.slane %v1086, 4
    %v1096 = vadd.f32 %v1092, %v1094
    %v1097 = vadd.f32 %v741, %v1089
    %s1098 = scalar_lea.vmem %s1, 96
    %v1099 = vld [vmem:[%s1098] sm:$0xff]
    %v1100 = vld [vmem:[%s1098 + $0x8] sm:$0xff]
    %v1101 = vld [vmem:[%s1098 + $0x10] sm:$0xff]
    %v1102 = vld [vmem:[%s1098 + $0x18] sm:$0xff]
    %s1103 = scalar_lea.vmem %s2, 96
    %v1104 = vld [vmem:[%s1103] sm:$0xff]
    %v1105 = vld [vmem:[%s1103 + $0x8] sm:$0xff]
    %v1106 = vld [vmem:[%s1103 + $0x10] sm:$0xff]
    %v1107 = vld [vmem:[%s1103 + $0x18] sm:$0xff]
    %s1108 = scalar_lea.vmem %s3, 96
    %v1109 = vld [vmem:[%s1108] sm:$0xff]
    %v1110 = vld [vmem:[%s1108 + $0x8] sm:$0xff]
    %v1111 = vld [vmem:[%s1108 + $0x10] sm:$0xff]
    %v1112 = vld [vmem:[%s1108 + $0x18] sm:$0xff]
    %s1113 = scalar_lea.vmem %s4, 96
    %v1114 = vld [vmem:[%s1113] sm:$0xff]
    %v1115 = vld [vmem:[%s1113 + $0x8] sm:$0xff]
    %v1116 = vld [vmem:[%s1113 + $0x10] sm:$0xff]
    %v1117 = vld [vmem:[%s1113 + $0x18] sm:$0xff]
    %s1118 = scalar_lea.vmem %s5, 24
    %v1119 = vld [vmem:[%s1118] sm:$0xff]
    %s1120 = scalar_lea.vmem %s6, 24
    %v1121 = vld [vmem:[%s1120] sm:$0xff]
    %1123 = vset.pattern.permute.xlu0 0
    %1124 = vperm.xlu0 %1123, %v1104
    %v1125 = vpop.permute.xlu0 %1124
    %1128 = vset.pattern.permute.xlu0 0
    %1129 = vperm.xlu0 %1128, %v1105
    %v1130 = vpop.permute.xlu0 %1129
    %1133 = vset.pattern.permute.xlu0 0
    %1134 = vperm.xlu0 %1133, %v1106
    %v1135 = vpop.permute.xlu0 %1134
    %1138 = vset.pattern.permute.xlu0 0
    %1139 = vperm.xlu0 %1138, %v1107
    %v1140 = vpop.permute.xlu0 %1139
    %v1143 = vsel %vm69, %v1099, 0
    %v1146 = vsel %vm69, %v1100, 0
    %v1149 = vsel %vm69, %v1101, 0
    %v1152 = vsel %vm69, %v1102, 0
    %v1155 = vsel %vm82, %v1096, 0
    %1157 = vmatprep.subr.mxu0 0.0
    %1158 = vmatpush1.msra.mxu0 %v1155
    %1159 = vmatprep.subr.mxu0 0.0
    %1160 = vmatpush1.msra.mxu0 0.0
    %1161 = vmatprep.subr.mxu0 0.0
    %1162 = vmatpush1.msra.mxu0 0.0
    %1163 = vmatprep.subr.mxu0 0.0
    %1164 = vmatpush1.msra.mxu0 0.0
    %1165 = vmatprep.subr.mxu0 0.0
    %1166 = vmatpush1.msra.mxu0 0.0
    %1167 = vmatprep.subr.mxu0 0.0
    %1168 = vmatpush1.msra.mxu0 0.0
    %1169 = vmatprep.subr.mxu0 0.0
    %1170 = vmatpush1.msra.mxu0 0.0
    %1171 = vmatprep.subr.mxu0 0.0
    %1172 = vmatpush1.msra.mxu0 0.0
    %1173 = vmatprep.subr.mxu0 0.0
    %1174 = vmatpush1.msra.mxu0 0.0
    %1175 = vmatprep.subr.mxu0 0.0
    %1176 = vmatpush1.msra.mxu0 0.0
    %1177 = vmatprep.subr.mxu0 0.0
    %1178 = vmatpush1.msra.mxu0 0.0
    %1179 = vmatprep.subr.mxu0 0.0
    %1180 = vmatpush1.msra.mxu0 0.0
    %1181 = vmatprep.subr.mxu0 0.0
    %1182 = vmatpush1.msra.mxu0 0.0
    %1183 = vmatprep.subr.mxu0 0.0
    %1184 = vmatpush1.msra.mxu0 0.0
    %1185 = vmatprep.subr.mxu0 0.0
    %1186 = vmatpush1.msra.mxu0 0.0
    %1187 = vmatprep.subr.mxu0 0.0
    %1188 = vmatpush1.msra.mxu0 0.0
    %1189 = vmatprep.subr.mxu0 0.0
    %1190 = vmatpush1.msra.mxu0 0.0
    %1191 = vmatprep.subr.mxu0 0.0
    %1192 = vmatpush1.msra.mxu0 0.0
    %1193 = vmatprep.subr.mxu0 0.0
    %1194 = vmatpush1.msra.mxu0 0.0
    %1195 = vmatprep.subr.mxu0 0.0
    %1196 = vmatpush1.msra.mxu0 0.0
    %1197 = vmatprep.subr.mxu0 0.0
    %1198 = vmatpush1.msra.mxu0 0.0
    %1199 = vmatprep.subr.mxu0 0.0
    %1200 = vmatpush1.msra.mxu0 0.0
    %1201 = vmatprep.subr.mxu0 0.0
    %1202 = vmatpush1.msra.mxu0 0.0
    %1203 = vmatprep.subr.mxu0 0.0
    %1204 = vmatpush1.msra.mxu0 0.0
    %1205 = vmatprep.subr.mxu0 0.0
    %1206 = vmatpush1.msra.mxu0 0.0
    %1207 = vmatprep.subr.mxu0 0.0
    %1208 = vmatpush1.msra.mxu0 0.0
    %1209 = vmatprep.subr.mxu0 0.0
    %1210 = vmatpush1.msra.mxu0 0.0
    %1211 = vmatprep.subr.mxu0 0.0
    %1212 = vmatpush1.msra.mxu0 0.0
    %1213 = vmatprep.subr.mxu0 0.0
    %1214 = vmatpush1.msra.mxu0 0.0
    %1215 = vmatprep.subr.mxu0 0.0
    %1216 = vmatpush1.msra.mxu0 0.0
    %1217 = vmatprep.subr.mxu0 0.0
    %1218 = vmatpush1.msra.mxu0 0.0
    %1219 = vmatprep.subr.mxu0 0.0
    %1220 = vmatpush1.msra.mxu0 0.0
    %1221 = vmatprep.mubr.f32.mxu0 0.0
    %1222 = vmatmul.mubr.f32.gmra.mrb[0].mxu0 %v1143
    %v1223 = vpop.f32.mrb[0].mxu0
    %v1224 = vadd.f32 %v1125, %v1223
    %v1225 = vpop.f32.mrb[0].mxu0
    %1226 = vmatprep.mubr.f32.mxu0 0.0
    %1227 = vmatmul.mubr.f32.gmra.mrb[0].mxu0 %v1146
    %v1228 = vpop.f32.mrb[0].mxu0
    %v1229 = vadd.f32 %v1130, %v1228
    %v1230 = vpop.f32.mrb[0].mxu0
    %1231 = vmatprep.mubr.f32.mxu0 0.0
    %1232 = vmatmul.mubr.f32.gmra.mrb[0].mxu0 %v1149
    %v1233 = vpop.f32.mrb[0].mxu0
    %v1234 = vadd.f32 %v1135, %v1233
    %v1235 = vpop.f32.mrb[0].mxu0
    %1236 = vmatprep.mubr.f32.mxu0 0.0
    %1237 = vmatmul.mubr.f32.gmra.mrb[0].mxu0 %v1152
    %v1238 = vpop.f32.mrb[0].mxu0
    %v1239 = vadd.f32 %v1140, %v1238
    %v1240 = vpop.f32.mrb[0].mxu0
    %1241 = vdwg.mxu0
    %v1242 = vmax.f32 %v1224, 0.0
    %v1243 = vmax.f32 %v1229, 0.0
    %v1244 = vmax.f32 %v1234, 0.0
    %v1245 = vmax.f32 %v1239, 0.0
    %1247 = vset.pattern.permute.xlu0 0
    %1248 = vperm.xlu0 %1247, %v1114
    %v1249 = vpop.permute.xlu0 %1248
    %1252 = vset.pattern.permute.xlu0 0
    %1253 = vperm.xlu0 %1252, %v1115
    %v1254 = vpop.permute.xlu0 %1253
    %1257 = vset.pattern.permute.xlu0 0
    %1258 = vperm.xlu0 %1257, %v1116
    %v1259 = vpop.permute.xlu0 %1258
    %1262 = vset.pattern.permute.xlu0 0
    %1263 = vperm.xlu0 %1262, %v1117
    %v1264 = vpop.permute.xlu0 %1263
    %v1267 = vsel %vm195, %v1109, 0
    %v1270 = vsel %vm195, %v1110, 0
    %v1273 = vsel %vm195, %v1111, 0
    %v1276 = vsel %vm195, %v1112, 0
    %1278 = vmatprep.subr.mxu0 0.0
    %1279 = vmatpush1.msra.mxu0 %v1242
    %1280 = vmatprep.subr.mxu0 0.0
    %1281 = vmatpush1.msra.mxu0 %v1243
    %1282 = vmatprep.subr.mxu0 0.0
    %1283 = vmatpush1.msra.mxu0 %v1244
    %1284 = vmatprep.subr.mxu0 0.0
    %1285 = vmatpush1.msra.mxu0 %v1245
    %1286 = vmatprep.subr.mxu0 0.0
    %1287 = vmatpush1.msra.mxu0 0.0
    %1288 = vmatprep.subr.mxu0 0.0
    %1289 = vmatpush1.msra.mxu0 0.0
    %1290 = vmatprep.subr.mxu0 0.0
    %1291 = vmatpush1.msra.mxu0 0.0
    %1292 = vmatprep.subr.mxu0 0.0
    %1293 = vmatpush1.msra.mxu0 0.0
    %1294 = vmatprep.subr.mxu0 0.0
    %1295 = vmatpush1.msra.mxu0 0.0
    %1296 = vmatprep.subr.mxu0 0.0
    %1297 = vmatpush1.msra.mxu0 0.0
    %1298 = vmatprep.subr.mxu0 0.0
    %1299 = vmatpush1.msra.mxu0 0.0
    %1300 = vmatprep.subr.mxu0 0.0
    %1301 = vmatpush1.msra.mxu0 0.0
    %1302 = vmatprep.subr.mxu0 0.0
    %1303 = vmatpush1.msra.mxu0 0.0
    %1304 = vmatprep.subr.mxu0 0.0
    %1305 = vmatpush1.msra.mxu0 0.0
    %1306 = vmatprep.subr.mxu0 0.0
    %1307 = vmatpush1.msra.mxu0 0.0
    %1308 = vmatprep.subr.mxu0 0.0
    %1309 = vmatpush1.msra.mxu0 0.0
    %1310 = vmatprep.subr.mxu0 0.0
    %1311 = vmatpush1.msra.mxu0 0.0
    %1312 = vmatprep.subr.mxu0 0.0
    %1313 = vmatpush1.msra.mxu0 0.0
    %1314 = vmatprep.subr.mxu0 0.0
    %1315 = vmatpush1.msra.mxu0 0.0
    %1316 = vmatprep.subr.mxu0 0.0
    %1317 = vmatpush1.msra.mxu0 0.0
    %1318 = vmatprep.subr.mxu0 0.0
    %1319 = vmatpush1.msra.mxu0 0.0
    %1320 = vmatprep.subr.mxu0 0.0
    %1321 = vmatpush1.msra.mxu0 0.0
    %1322 = vmatprep.subr.mxu0 0.0
    %1323 = vmatpush1.msra.mxu0 0.0
    %1324 = vmatprep.subr.mxu0 0.0
    %1325 = vmatpush1.msra.mxu0 0.0
    %1326 = vmatprep.subr.mxu0 0.0
    %1327 = vmatpush1.msra.mxu0 0.0
    %1328 = vmatprep.subr.mxu0 0.0
    %1329 = vmatpush1.msra.mxu0 0.0
    %1330 = vmatprep.subr.mxu0 0.0
    %1331 = vmatpush1.msra.mxu0 0.0
    %1332 = vmatprep.subr.mxu0 0.0
    %1333 = vmatpush1.msra.mxu0 0.0
    %1334 = vmatprep.subr.mxu0 0.0
    %1335 = vmatpush1.msra.mxu0 0.0
    %1336 = vmatprep.subr.mxu0 0.0
    %1337 = vmatpush1.msra.mxu0 0.0
    %1338 = vmatprep.subr.mxu0 0.0
    %1339 = vmatpush1.msra.mxu0 0.0
    %1340 = vmatprep.subr.mxu0 0.0
    %1341 = vmatpush1.msra.mxu0 0.0
    %1342 = vmatprep.mubr.f32.mxu0 0.0
    %1343 = vmatmul.mubr.f32.gmra.mrb[0].mxu0 %v1267
    %v1344 = vpop.f32.mrb[0].mxu0
    %v1345 = vadd.f32 %v1249, %v1344
    %v1346 = vpop.f32.mrb[0].mxu0
    %1347 = vmatprep.mubr.f32.mxu0 0.0
    %1348 = vmatmul.mubr.f32.gmra.mrb[0].mxu0 %v1270
    %v1349 = vpop.f32.mrb[0].mxu0
    %v1350 = vadd.f32 %v1254, %v1349
    %v1351 = vpop.f32.mrb[0].mxu0
    %1352 = vmatprep.mubr.f32.mxu0 0.0
    %1353 = vmatmul.mubr.f32.gmra.mrb[0].mxu0 %v1273
    %v1354 = vpop.f32.mrb[0].mxu0
    %v1355 = vadd.f32 %v1259, %v1354
    %v1356 = vpop.f32.mrb[0].mxu0
    %1357 = vmatprep.mubr.f32.mxu0 0.0
    %1358 = vmatmul.mubr.f32.gmra.mrb[0].mxu0 %v1276
    %v1359 = vpop.f32.mrb[0].mxu0
    %v1360 = vadd.f32 %v1264, %v1359
    %v1361 = vpop.f32.mrb[0].mxu0
    %1362 = vdwg.mxu0
    %v1363 = vmax.f32 %v1345, 0.0
    %v1364 = vmax.f32 %v1350, 0.0
    %v1365 = vmax.f32 %v1355, 0.0
    %v1366 = vmax.f32 %v1360, 0.0
    %1368 = vset.pattern.permute.xlu0 0
    %1369 = vperm.xlu0 %1368, %v1121
    %v1370 = vpop.permute.xlu0 %1369
    %v1373 = vsel %vm195, %v1119, 0
    %1375 = vmatprep.subr.mxu0 0.0
    %1376 = vmatpush1.msra.mxu0 %v1363
    %1377 = vmatprep.subr.mxu0 0.0
    %1378 = vmatpush1.msra.mxu0 %v1364
    %1379 = vmatprep.subr.mxu0 0.0
    %1380 = vmatpush1.msra.mxu0 %v1365
    %1381 = vmatprep.subr.mxu0 0.0
    %1382 = vmatpush1.msra.mxu0 %v1366
    %1383 = vmatprep.subr.mxu0 0.0
    %1384 = vmatpush1.msra.mxu0 0.0
    %1385 = vmatprep.subr.mxu0 0.0
    %1386 = vmatpush1.msra.mxu0 0.0
    %1387 = vmatprep.subr.mxu0 0.0
    %1388 = vmatpush1.msra.mxu0 0.0
    %1389 = vmatprep.subr.mxu0 0.0
    %1390 = vmatpush1.msra.mxu0 0.0
    %1391 = vmatprep.subr.mxu0 0.0
    %1392 = vmatpush1.msra.mxu0 0.0
    %1393 = vmatprep.subr.mxu0 0.0
    %1394 = vmatpush1.msra.mxu0 0.0
    %1395 = vmatprep.subr.mxu0 0.0
    %1396 = vmatpush1.msra.mxu0 0.0
    %1397 = vmatprep.subr.mxu0 0.0
    %1398 = vmatpush1.msra.mxu0 0.0
    %1399 = vmatprep.subr.mxu0 0.0
    %1400 = vmatpush1.msra.mxu0 0.0
    %1401 = vmatprep.subr.mxu0 0.0
    %1402 = vmatpush1.msra.mxu0 0.0
    %1403 = vmatprep.subr.mxu0 0.0
    %1404 = vmatpush1.msra.mxu0 0.0
    %1405 = vmatprep.subr.mxu0 0.0
    %1406 = vmatpush1.msra.mxu0 0.0
    %1407 = vmatprep.subr.mxu0 0.0
    %1408 = vmatpush1.msra.mxu0 0.0
    %1409 = vmatprep.subr.mxu0 0.0
    %1410 = vmatpush1.msra.mxu0 0.0
    %1411 = vmatprep.subr.mxu0 0.0
    %1412 = vmatpush1.msra.mxu0 0.0
    %1413 = vmatprep.subr.mxu0 0.0
    %1414 = vmatpush1.msra.mxu0 0.0
    %1415 = vmatprep.subr.mxu0 0.0
    %1416 = vmatpush1.msra.mxu0 0.0
    %1417 = vmatprep.subr.mxu0 0.0
    %1418 = vmatpush1.msra.mxu0 0.0
    %1419 = vmatprep.subr.mxu0 0.0
    %1420 = vmatpush1.msra.mxu0 0.0
    %1421 = vmatprep.subr.mxu0 0.0
    %1422 = vmatpush1.msra.mxu0 0.0
    %1423 = vmatprep.subr.mxu0 0.0
    %1424 = vmatpush1.msra.mxu0 0.0
    %1425 = vmatprep.subr.mxu0 0.0
    %1426 = vmatpush1.msra.mxu0 0.0
    %1427 = vmatprep.subr.mxu0 0.0
    %1428 = vmatpush1.msra.mxu0 0.0
    %1429 = vmatprep.subr.mxu0 0.0
    %1430 = vmatpush1.msra.mxu0 0.0
    %1431 = vmatprep.subr.mxu0 0.0
    %1432 = vmatpush1.msra.mxu0 0.0
    %1433 = vmatprep.subr.mxu0 0.0
    %1434 = vmatpush1.msra.mxu0 0.0
    %1435 = vmatprep.subr.mxu0 0.0
    %1436 = vmatpush1.msra.mxu0 0.0
    %1437 = vmatprep.subr.mxu0 0.0
    %1438 = vmatpush1.msra.mxu0 0.0
    %1439 = vmatprep.mubr.f32.mxu0 0.0
    %1440 = vmatmul.mubr.f32.gmra.mrb[0].mxu0 %v1373
    %v1441 = vpop.f32.mrb[0].mxu0
    %v1442 = vadd.f32 %v1370, %v1441
    %v1443 = vpop.f32.mrb[0].mxu0
    %1444 = vdwg.mxu0
    %v1445 = vtanh.pop %v1442
    %v1446 = vmul.f32 %v1445, 1.442695
    %v1447 = vpow.pop %v1446
    %v1448 = vmul.f32 %v1447, %v740
    %v1450 = vrot.slane %v1442, 4
    %v1452 = vadd.f32 %v1448, %v1450
    %v1453 = vadd.f32 %v1097, %v1445
    %1454 = vst [vmem:[#allocation2] sm:$0xf] %v1452
    %1455 = vst [vmem:[#allocation2 + $0x4] sm:$0xf] %v1096
    %1456 = vst [vmem:[#allocation4] sm:$0xf] %v1453
    // Predicated region
    $region30: #{tpu_custom_call.1} parent=1 // pred_check
      _
    $region31: #{tpu_custom_call.1} parent=1 // pred_check_branch
      %1458 = sbr.rel (0) target = $region33
    $region32: #{tpu_custom_call.1} parent=1 // pred_region
      %s1460 = ssub.s32 128, 128
      %1461 = vsyncadd [#allocation3], %s1460
      %s1463 = sshll.u32 [#allocation2], 4
      %s1464 = int_to_ptr.vmem [resolvable:$true] %s1463
      %1466 = dma.vmem_to_hbm [thread:$0]  %s1464, 128, %s7, [#allocation3]
    $region33: #{tpu_custom_call.1} parent=1 // pred_fallthru
      _
    // Predicated region
    $region34: #{tpu_custom_call.1} parent=1 // pred_check
      _
    $region35: #{tpu_custom_call.1} parent=1 // pred_check_branch
      %1468 = sbr.rel (0) target = $region37
    $region36: #{tpu_custom_call.1} parent=1 // pred_region
      %s1470 = ssub.s32 64, 64
      %1471 = vsyncadd [#allocation5], %s1470
      %s1473 = sshll.u32 [#allocation4], 4
      %s1474 = int_to_ptr.vmem [resolvable:$true] %s1473
      %1476 = dma.vmem_to_hbm [thread:$0]  %s1474, 64, %s8, [#allocation5]
    $region37: #{tpu_custom_call.1} parent=1 // pred_fallthru
      _
    // Predicated region
    $region38: #{tpu_custom_call.1} parent=1 // pred_check
      _
    $region39: #{tpu_custom_call.1} parent=1 // pred_check_branch
      %1478 = sbr.rel (0) target = $region41
    $region40: #{tpu_custom_call.1} parent=1 // pred_region
      %1479 = dma.done [#allocation3], 128
    $region41: #{tpu_custom_call.1} parent=1 // pred_fallthru
      _
    // Predicated region
    $region42: #{tpu_custom_call.1} parent=1 // pred_check
      _
    $region43: #{tpu_custom_call.1} parent=1 // pred_check_branch
      %1481 = sbr.rel (0) target = $region45
    $region44: #{tpu_custom_call.1} parent=1 // pred_region
      %1482 = dma.done [#allocation5], 64
    $region45: #{tpu_custom_call.1} parent=1 // pred_fallthru
      _
    %1483 = vsyncpa [#allocation3], 1
    %1484 = vsyncpa [#allocation5], 1

// kernel: tpu_custom_call.1
$region0: #{tpu_custom_call.1}
  #allocation0 [shape = 'u32[]', space=smem, size = 0x4, offset = 0x4, fixed_abs, tag = 'smem constant byte address 0x4 - core index']
  #allocation1 [shape = 'u32[144,128]{1,0:T(1,128)}', space=vmem, size = 0x12000, scoped, tag = 'internal scratch']
  %s0 = inlined_call_operand.vmem [shape: f32[8,128], index: 0, kind: input, shape index: {}]
  %s1 = inlined_call_operand.vmem [shape: f32[4,32,4], index: 1, kind: input, shape index: {}]
  %s2 = inlined_call_operand.vmem [shape: f32[4,32,1], index: 2, kind: input, shape index: {}]
  %s3 = inlined_call_operand.vmem [shape: f32[4,32,32], index: 3, kind: input, shape index: {}]
  %s4 = inlined_call_operand.vmem [shape: f32[4,32,1], index: 4, kind: input, shape index: {}]
  %s5 = inlined_call_operand.vmem [shape: f32[4,8,32], index: 5, kind: input, shape index: {}]
  %s6 = inlined_call_operand.vmem [shape: f32[4,8,1], index: 6, kind: input, shape index: {}]
  %s7 = inlined_call_operand.hbm [shape: f32[8,128], index: 7, kind: output, shape index: {0}]
  %s8 = inlined_call_operand.hbm [shape: f32[4,128], index: 8, kind: output, shape index: {1}]
  %9 = xla_tuple %s7, %s8
  %s10 = sld [smem:[#allocation0]]
  $region46: #{tpu_custom_call.1} parent=0
    _
  %s12 = ssub.s32 1, %s10
  %s13 = scalar_select 0, %s12, %s10
  $region1: #{tpu_custom_call.1} parent=0
    #allocation2 [shape = 'u8[4096]{0}', space=vmem, size = 0x1000, scoped, tag = 'output window, operand 0, single buffered']
    #allocation3 [shape = 's32[1]{0}', space=sflag, size = 0x4, scoped, tag = 'scoped memory for tpu_custom_call.1']
    #allocation4 [shape = 'u8[2048]{0}', space=vmem, size = 0x800, scoped, tag = 'output window, operand 1, single buffered']
    #allocation5 [shape = 's32[1]{0}', space=sflag, size = 0x4, scoped, tag = 'scoped memory for tpu_custom_call.1']
    %14 = vsyncpa [#allocation3], 0
    %15 = vsyncpa [#allocation5], 0
    // Predicated region
    $region2: #{tpu_custom_call.1} parent=1 // pred_check
      _
    $region3: #{tpu_custom_call.1} parent=1 // pred_check_branch
      %17 = sbr.rel (0) target = $region5
    $region4: #{tpu_custom_call.1} parent=1 // pred_region
      _
    $region5: #{tpu_custom_call.1} parent=1 // pred_fallthru
      _
    // Predicated region
    $region6: #{tpu_custom_call.1} parent=1 // pred_check
      _
    $region7: #{tpu_custom_call.1} parent=1 // pred_check_branch
      %19 = sbr.rel (0) target = $region9
    $region8: #{tpu_custom_call.1} parent=1 // pred_region
      _
    $region9: #{tpu_custom_call.1} parent=1 // pred_fallthru
      _
    // Predicated region
    $region10: #{tpu_custom_call.1} parent=1 // pred_check
      _
    $region11: #{tpu_custom_call.1} parent=1 // pred_check_branch
      %21 = sbr.rel (0) target = $region13
    $region12: #{tpu_custom_call.1} parent=1 // pred_region
      _
    $region13: #{tpu_custom_call.1} parent=1 // pred_fallthru
      _
    // Predicated region
    $region14: #{tpu_custom_call.1} parent=1 // pred_check
      _
    $region15: #{tpu_custom_call.1} parent=1 // pred_check_branch
      %23 = sbr.rel (0) target = $region17
    $region16: #{tpu_custom_call.1} parent=1 // pred_region
      _
    $region17: #{tpu_custom_call.1} parent=1 // pred_fallthru
      _
    // Predicated region
    $region18: #{tpu_custom_call.1} parent=1 // pred_check
      _
    $region19: #{tpu_custom_call.1} parent=1 // pred_check_branch
      %25 = sbr.rel (0) target = $region21
    $region20: #{tpu_custom_call.1} parent=1 // pred_region
      _
    $region21: #{tpu_custom_call.1} parent=1 // pred_fallthru
      _
    // Predicated region
    $region22: #{tpu_custom_call.1} parent=1 // pred_check
      _
    $region23: #{tpu_custom_call.1} parent=1 // pred_check_branch
      %27 = sbr.rel (0) target = $region25
    $region24: #{tpu_custom_call.1} parent=1 // pred_region
      _
    $region25: #{tpu_custom_call.1} parent=1 // pred_fallthru
      _
    // Predicated region
    $region26: #{tpu_custom_call.1} parent=1 // pred_check
      _
    $region27: #{tpu_custom_call.1} parent=1 // pred_check_branch
      %29 = sbr.rel (0) target = $region29
    $region28: #{tpu_custom_call.1} parent=1 // pred_region
      _
    $region29: #{tpu_custom_call.1} parent=1 // pred_fallthru
      _
    %v30 = vld [vmem:[%s0] sm:$0xff]
    %v31 = vld [vmem:[%s1] sm:$0xff]
    %v32 = vld [vmem:[%s1 + $0x8] sm:$0xff]
    %v33 = vld [vmem:[%s1 + $0x10] sm:$0xff]
    %v34 = vld [vmem:[%s1 + $0x18] sm:$0xff]
    %v35 = vld [vmem:[%s2] sm:$0xff]
    %v36 = vld [vmem:[%s2 + $0x8] sm:$0xff]
    %v37 = vld [vmem:[%s2 + $0x10] sm:$0xff]
    %v38 = vld [vmem:[%s2 + $0x18] sm:$0xff]
    %v39 = vld [vmem:[%s3] sm:$0xff]
    %v40 = vld [vmem:[%s3 + $0x8] sm:$0xff]
    %v41 = vld [vmem:[%s3 + $0x10] sm:$0xff]
    %v42 = vld [vmem:[%s3 + $0x18] sm:$0xff]
    %v43 = vld [vmem:[%s4] sm:$0xff]
    %v44 = vld [vmem:[%s4 + $0x8] sm:$0xff]
    %v45 = vld [vmem:[%s4 + $0x10] sm:$0xff]
    %v46 = vld [vmem:[%s4 + $0x18] sm:$0xff]
    %v47 = vld [vmem:[%s5] sm:$0xff]
    %v48 = vld [vmem:[%s6] sm:$0xff]
    %50 = vset.pattern.permute.xlu0 0
    %51 = vperm.xlu0 %50, %v35
    %v52 = vpop.permute.xlu0 %51
    %55 = vset.pattern.permute.xlu0 0
    %56 = vperm.xlu0 %55, %v36
    %v57 = vpop.permute.xlu0 %56
    %60 = vset.pattern.permute.xlu0 0
    %61 = vperm.xlu0 %60, %v37
    %v62 = vpop.permute.xlu0 %61
    %65 = vset.pattern.permute.xlu0 0
    %66 = vperm.xlu0 %65, %v38
    %v67 = vpop.permute.xlu0 %66
    %vm69 = vcmask 31744
    %v71 = vsel %vm69, %v31, 0
    %v74 = vsel %vm69, %v32, 0
    %v77 = vsel %vm69, %v33, 0
    %v80 = vsel %vm69, %v34, 0
    %vm82 = vcmask 1043456
    %v84 = vsel %vm82, %v30, 0
    %86 = vmatprep.subr.mxu0 0.0
    %87 = vmatpush1.msra.mxu0 %v84
    %88 = vmatprep.subr.mxu0 0.0
    %89 = vmatpush1.msra.mxu0 0.0
    %90 = vmatprep.subr.mxu0 0.0
    %91 = vmatpush1.msra.mxu0 0.0
    %92 = vmatprep.subr.mxu0 0.0
    %93 = vmatpush1.msra.mxu0 0.0
    %94 = vmatprep.subr.mxu0 0.0
    %95 = vmatpush1.msra.mxu0 0.0
    %96 = vmatprep.subr.mxu0 0.0
    %97 = vmatpush1.msra.mxu0 0.0
    %98 = vmatprep.subr.mxu0 0.0
    %99 = vmatpush1.msra.mxu0 0.0
    %100 = vmatprep.subr.mxu0 0.0
    %101 = vmatpush1.msra.mxu0 0.0
    %102 = vmatprep.subr.mxu0 0.0
    %103 = vmatpush1.msra.mxu0 0.0
    %104 = vmatprep.subr.mxu0 0.0
    %105 = vmatpush1.msra.mxu0 0.0
    %106 = vmatprep.subr.mxu0 0.0
    %107 = vmatpush1.msra.mxu0 0.0
    %108 = vmatprep.subr.mxu0 0.0
    %109 = vmatpush1.msra.mxu0 0.0
    %110 = vmatprep.subr.mxu0 0.0
    %111 = vmatpush1.msra.mxu0 0.0
    %112 = vmatprep.subr.mxu0 0.0
    %113 = vmatpush1.msra.mxu0 0.0
    %114 = vmatprep.subr.mxu0 0.0
    %115 = vmatpush1.msra.mxu0 0.0
    %116 = vmatprep.subr.mxu0 0.0
    %117 = vmatpush1.msra.mxu0 0.0
    %118 = vmatprep.subr.mxu0 0.0
    %119 = vmatpush1.msra.mxu0 0.0
    %120 = vmatprep.subr.mxu0 0.0
    %121 = vmatpush1.msra.mxu0 0.0
    %122 = vmatprep.subr.mxu0 0.0
    %123 = vmatpush1.msra.mxu0 0.0
    %124 = vmatprep.subr.mxu0 0.0
    %125 = vmatpush1.msra.mxu0 0.0
    %126 = vmatprep.subr.mxu0 0.0
    %127 = vmatpush1.msra.mxu0 0.0
    %128 = vmatprep.subr.mxu0 0.0
    %129 = vmatpush1.msra.mxu0 0.0
    %130 = vmatprep.subr.mxu0 0.0
    %131 = vmatpush1.msra.mxu0 0.0
    %132 = vmatprep.subr.mxu0 0.0
    %133 = vmatpush1.msra.mxu0 0.0
    %134 = vmatprep.subr.mxu0 0.0
    %135 = vmatpush1.msra.mxu0 0.0
    %136 = vmatprep.subr.mxu0 0.0
    %137 = vmatpush1.msra.mxu0 0.0
    %138 = vmatprep.subr.mxu0 0.0
    %139 = vmatpush1.msra.mxu0 0.0
    %140 = vmatprep.subr.mxu0 0.0
    %141 = vmatpush1.msra.mxu0 0.0
    %142 = vmatprep.subr.mxu0 0.0
    %143 = vmatpush1.msra.mxu0 0.0
    %144 = vmatprep.subr.mxu0 0.0
    %145 = vmatpush1.msra.mxu0 0.0
    %146 = vmatprep.subr.mxu0 0.0
    %147 = vmatpush1.msra.mxu0 0.0
    %148 = vmatprep.subr.mxu0 0.0
    %149 = vmatpush1.msra.mxu0 0.0
    %150 = vmatprep.mubr.f32.mxu0 0.0
    %151 = vmatmul.mubr.f32.gmra.mrb[0].mxu0 %v71
    %v152 = vpop.f32.mrb[0].mxu0
    %v153 = vadd.f32 %v52, %v152
    %v154 = vpop.f32.mrb[0].mxu0
    %155 = vmatprep.mubr.f32.mxu0 0.0
    %156 = vmatmul.mubr.f32.gmra.mrb[0].mxu0 %v74
    %v157 = vpop.f32.mrb[0].mxu0
    %v158 = vadd.f32 %v57, %v157
    %v159 = vpop.f32.mrb[0].mxu0
    %160 = vmatprep.mubr.f32.mxu0 0.0
    %161 = vmatmul.mubr.f32.gmra.mrb[0].mxu0 %v77
    %v162 = vpop.f32.mrb[0].mxu0
    %v163 = vadd.f32 %v62, %v162
    %v164 = vpop.f32.mrb[0].mxu0
    %165 = vmatprep.mubr.f32.mxu0 0.0
    %166 = vmatmul.mubr.f32.gmra.mrb[0].mxu0 %v80
    %v167 = vpop.f32.mrb[0].mxu0
    %v168 = vadd.f32 %v67, %v167
    %v169 = vpop.f32.mrb[0].mxu0
    %170 = vdwg.mxu0
    %v171 = vmax.f32 %v153, 0.0
    %v172 = vmax.f32 %v158, 0.0
    %v173 = vmax.f32 %v163, 0.0
    %v174 = vmax.f32 %v168, 0.0
    %176 = vset.pattern.permute.xlu0 0
    %177 = vperm.xlu0 %176, %v43
    %v178 = vpop.permute.xlu0 %177
    %181 = vset.pattern.permute.xlu0 0
    %182 = vperm.xlu0 %181, %v44
    %v183 = vpop.permute.xlu0 %182
    %186 = vset.pattern.permute.xlu0 0
    %187 = vperm.xlu0 %186, %v45
    %v188 = vpop.permute.xlu0 %187
    %191 = vset.pattern.permute.xlu0 0
    %192 = vperm.xlu0 %191, %v46
    %v193 = vpop.permute.xlu0 %192
    %vm195 = vcmask 261120
    %v197 = vsel %vm195, %v39, 0
    %v200 = vsel %vm195, %v40, 0
    %v203 = vsel %vm195, %v41, 0
    %v206 = vsel %vm195, %v42, 0
    %208 = vmatprep.subr.mxu0 0.0
    %209 = vmatpush1.msra.mxu0 %v171
    %210 = vmatprep.subr.mxu0 0.0
    %211 = vmatpush1.msra.mxu0 %v172
    %212 = vmatprep.subr.mxu0 0.0
    %213 = vmatpush1.msra.mxu0 %v173
    %214 = vmatprep.subr.mxu0 0.0
    %215 = vmatpush1.msra.mxu0 %v174
    %216 = vmatprep.subr.mxu0 0.0
    %217 = vmatpush1.msra.mxu0 0.0
    %218 = vmatprep.subr.mxu0 0.0
    %219 = vmatpush1.msra.mxu0 0.0
    %220 = vmatprep.subr.mxu0 0.0
    %221 = vmatpush1.msra.mxu0 0.0
    %222 = vmatprep.subr.mxu0 0.0
    %223 = vmatpush1.msra.mxu0 0.0
    %224 = vmatprep.subr.mxu0 0.0
    %225 = vmatpush1.msra.mxu0 0.0
    %226 = vmatprep.subr.mxu0 0.0
    %227 = vmatpush1.msra.mxu0 0.0
    %228 = vmatprep.subr.mxu0 0.0
    %229 = vmatpush1.msra.mxu0 0.0
    %230 = vmatprep.subr.mxu0 0.0
    %231 = vmatpush1.msra.mxu0 0.0
    %232 = vmatprep.subr.mxu0 0.0
    %233 = vmatpush1.msra.mxu0 0.0
    %234 = vmatprep.subr.mxu0 0.0
    %235 = vmatpush1.msra.mxu0 0.0
    %236 = vmatprep.subr.mxu0 0.0
    %237 = vmatpush1.msra.mxu0 0.0
    %238 = vmatprep.subr.mxu0 0.0
    %239 = vmatpush1.msra.mxu0 0.0
    %240 = vmatprep.subr.mxu0 0.0
    %241 = vmatpush1.msra.mxu0 0.0
    %242 = vmatprep.subr.mxu0 0.0
    %243 = vmatpush1.msra.mxu0 0.0
    %244 = vmatprep.subr.mxu0 0.0
    %245 = vmatpush1.msra.mxu0 0.0
    %246 = vmatprep.subr.mxu0 0.0
    %247 = vmatpush1.msra.mxu0 0.0
    %248 = vmatprep.subr.mxu0 0.0
    %249 = vmatpush1.msra.mxu0 0.0
    %250 = vmatprep.subr.mxu0 0.0
    %251 = vmatpush1.msra.mxu0 0.0
    %252 = vmatprep.subr.mxu0 0.0
    %253 = vmatpush1.msra.mxu0 0.0
    %254 = vmatprep.subr.mxu0 0.0
    %255 = vmatpush1.msra.mxu0 0.0
    %256 = vmatprep.subr.mxu0 0.0
    %257 = vmatpush1.msra.mxu0 0.0
    %258 = vmatprep.subr.mxu0 0.0
    %259 = vmatpush1.msra.mxu0 0.0
    %260 = vmatprep.subr.mxu0 0.0
    %261 = vmatpush1.msra.mxu0 0.0
    %262 = vmatprep.subr.mxu0 0.0
    %263 = vmatpush1.msra.mxu0 0.0
    %264 = vmatprep.subr.mxu0 0.0
    %265 = vmatpush1.msra.mxu0 0.0
    %266 = vmatprep.subr.mxu0 0.0
    %267 = vmatpush1.msra.mxu0 0.0
    %268 = vmatprep.subr.mxu0 0.0
    %269 = vmatpush1.msra.mxu0 0.0
    %270 = vmatprep.subr.mxu0 0.0
    %271 = vmatpush1.msra.mxu0 0.0
    %272 = vmatprep.mubr.f32.mxu0 0.0
    %273 = vmatmul.mubr.f32.gmra.mrb[0].mxu0 %v197
    %v274 = vpop.f32.mrb[0].mxu0
    %v275 = vadd.f32 %v178, %v274
    %v276 = vpop.f32.mrb[0].mxu0
    %277 = vmatprep.mubr.f32.mxu0 0.0
    %278 = vmatmul.mubr.f32.gmra.mrb[0].mxu0 %v200
    %v279 = vpop.f32.mrb[0].mxu0
    %v280 = vadd.f32 %v183, %v279
    %v281 = vpop.f32.mrb[0].mxu0
    %282 = vmatprep.mubr.f32.mxu0 0.0
    %283 = vmatmul.mubr.f32.gmra.mrb[0].mxu0 %v203
    %v284 = vpop.f32.mrb[0].mxu0
    %v285 = vadd.f32 %v188, %v284
    %v286 = vpop.f32.mrb[0].mxu0
    %287 = vmatprep.mubr.f32.mxu0 0.0
    %288 = vmatmul.mubr.f32.gmra.mrb[0].mxu0 %v206
    %v289 = vpop.f32.mrb[0].mxu0
    %v290 = vadd.f32 %v193, %v289
    %v291 = vpop.f32.mrb[0].mxu0
    %292 = vdwg.mxu0
    %v293 = vmax.f32 %v275, 0.0
    %v294 = vmax.f32 %v280, 0.0
    %v295 = vmax.f32 %v285, 0.0
    %v296 = vmax.f32 %v290, 0.0
    %298 = vset.pattern.permute.xlu0 0
    %299 = vperm.xlu0 %298, %v48
    %v300 = vpop.permute.xlu0 %299
    %v303 = vsel %vm195, %v47, 0
    %305 = vmatprep.subr.mxu0 0.0
    %306 = vmatpush1.msra.mxu0 %v293
    %307 = vmatprep.subr.mxu0 0.0
    %308 = vmatpush1.msra.mxu0 %v294
    %309 = vmatprep.subr.mxu0 0.0
    %310 = vmatpush1.msra.mxu0 %v295
    %311 = vmatprep.subr.mxu0 0.0
    %312 = vmatpush1.msra.mxu0 %v296
    %313 = vmatprep.subr.mxu0 0.0
    %314 = vmatpush1.msra.mxu0 0.0
    %315 = vmatprep.subr.mxu0 0.0
    %316 = vmatpush1.msra.mxu0 0.0
    %317 = vmatprep.subr.mxu0 0.0
    %318 = vmatpush1.msra.mxu0 0.0
    %319 = vmatprep.subr.mxu0 0.0
    %320 = vmatpush1.msra.mxu0 0.0
    %321 = vmatprep.subr.mxu0 0.0
    %322 = vmatpush1.msra.mxu0 0.0
    %323 = vmatprep.subr.mxu0 0.0
    %324 = vmatpush1.msra.mxu0 0.0
    %325 = vmatprep.subr.mxu0 0.0
    %326 = vmatpush1.msra.mxu0 0.0
    %327 = vmatprep.subr.mxu0 0.0
    %328 = vmatpush1.msra.mxu0 0.0
    %329 = vmatprep.subr.mxu0 0.0
    %330 = vmatpush1.msra.mxu0 0.0
    %331 = vmatprep.subr.mxu0 0.0
    %332 = vmatpush1.msra.mxu0 0.0
    %333 = vmatprep.subr.mxu0 0.0
    %334 = vmatpush1.msra.mxu0 0.0
    %335 = vmatprep.subr.mxu0 0.0
    %336 = vmatpush1.msra.mxu0 0.0
    %337 = vmatprep.subr.mxu0 0.0
    %338 = vmatpush1.msra.mxu0 0.0
    %339 = vmatprep.subr.mxu0 0.0
    %340 = vmatpush1.msra.mxu0 0.0
    %341 = vmatprep.subr.mxu0 0.0
    %342 = vmatpush1.msra.mxu0 0.0
    %343 = vmatprep.subr.mxu0 0.0
    %344 = vmatpush1.msra.mxu0 0.0
    %345 = vmatprep.subr.mxu0 0.0
    %346 = vmatpush1.msra.mxu0 0.0
    %347 = vmatprep.subr.mxu0 0.0
    %348 = vmatpush1.msra.mxu0 0.0
    %349 = vmatprep.subr.mxu0 0.0
    %350 = vmatpush1.msra.mxu0 0.0
    %351 = vmatprep.subr.mxu0 0.0
    %352 = vmatpush1.msra.mxu0 0.0
    %353 = vmatprep.subr.mxu0 0.0
    %354 = vmatpush1.msra.mxu0 0.0
    %355 = vmatprep.subr.mxu0 0.0
    %356 = vmatpush1.msra.mxu0 0.0
    %357 = vmatprep.subr.mxu0 0.0
    %358 = vmatpush1.msra.mxu0 0.0
    %359 = vmatprep.subr.mxu0 0.0
    %360 = vmatpush1.msra.mxu0 0.0
    %361 = vmatprep.subr.mxu0 0.0
    %362 = vmatpush1.msra.mxu0 0.0
    %363 = vmatprep.subr.mxu0 0.0
    %364 = vmatpush1.msra.mxu0 0.0
    %365 = vmatprep.subr.mxu0 0.0
    %366 = vmatpush1.msra.mxu0 0.0
    %367 = vmatprep.subr.mxu0 0.0
    %368 = vmatpush1.msra.mxu0 0.0
    %369 = vmatprep.mubr.f32.mxu0 0.0
    %370 = vmatmul.mubr.f32.gmra.mrb[0].mxu0 %v303
    %v371 = vpop.f32.mrb[0].mxu0
    %v372 = vadd.f32 %v300, %v371
    %v373 = vpop.f32.mrb[0].mxu0
    %374 = vdwg.mxu0
    %v375 = vtanh.pop %v372
    %v376 = vmul.f32 %v375, 1.442695
    %v377 = vpow.pop %v376
    %v378 = vrot.slane %v30, 4
    %v380 = vmul.f32 %v377, %v378
    %v382 = vrot.slane %v372, 4
    %v384 = vadd.f32 %v380, %v382
    %v385 = vadd.f32 %v375, 0.0
    %s386 = scalar_lea.vmem %s1, 32
    %v387 = vld [vmem:[%s386] sm:$0xff]
    %v388 = vld [vmem:[%s386 + $0x8] sm:$0xff]
    %v389 = vld [vmem:[%s386 + $0x10] sm:$0xff]
    %v390 = vld [vmem:[%s386 + $0x18] sm:$0xff]
    %s391 = scalar_lea.vmem %s2, 32
    %v392 = vld [vmem:[%s391] sm:$0xff]
    %v393 = vld [vmem:[%s391 + $0x8] sm:$0xff]
    %v394 = vld [vmem:[%s391 + $0x10] sm:$0xff]
    %v395 = vld [vmem:[%s391 + $0x18] sm:$0xff]
    %s396 = scalar_lea.vmem %s3, 32
    %v397 = vld [vmem:[%s396] sm:$0xff]
    %v398 = vld [vmem:[%s396 + $0x8] sm:$0xff]
    %v399 = vld [vmem:[%s396 + $0x10] sm:$0xff]
    %v400 = vld [vmem:[%s396 + $0x18] sm:$0xff]
    %s401 = scalar_lea.vmem %s4, 32
    %v402 = vld [vmem:[%s401] sm:$0xff]
    %v403 = vld [vmem:[%s401 + $0x8] sm:$0xff]
    %v404 = vld [vmem:[%s401 + $0x10] sm:$0xff]
    %v405 = vld [vmem:[%s401 + $0x18] sm:$0xff]
    %s406 = scalar_lea.vmem %s5, 8
    %v407 = vld [vmem:[%s406] sm:$0xff]
    %s408 = scalar_lea.vmem %s6, 8
    %v409 = vld [vmem:[%s408] sm:$0xff]
    %411 = vset.pattern.permute.xlu0 0
    %412 = vperm.xlu0 %411, %v392
    %v413 = vpop.permute.xlu0 %412
    %416 = vset.pattern.permute.xlu0 0
    %417 = vperm.xlu0 %416, %v393
    %v418 = vpop.permute.xlu0 %417
    %421 = vset.pattern.permute.xlu0 0
    %422 = vperm.xlu0 %421, %v394
    %v423 = vpop.permute.xlu0 %422
    %426 = vset.pattern.permute.xlu0 0
    %427 = vperm.xlu0 %426, %v395
    %v428 = vpop.permute.xlu0 %427
    %v431 = vsel %vm69, %v387, 0
    %v434 = vsel %vm69, %v388, 0
    %v437 = vsel %vm69, %v389, 0
    %v440 = vsel %vm69, %v390, 0
    %v443 = vsel %vm82, %v384, 0
    %445 = vmatprep.subr.mxu0 0.0
    %446 = vmatpush1.msra.mxu0 %v443
    %447 = vmatprep.subr.mxu0 0.0
    %448 = vmatpush1.msra.mxu0 0.0
    %449 = vmatprep.subr.mxu0 0.0
    %450 = vmatpush1.msra.mxu0 0.0
    %451 = vmatprep.subr.mxu0 0.0
    %452 = vmatpush1.msra.mxu0 0.0
    %453 = vmatprep.subr.mxu0 0.0
    %454 = vmatpush1.msra.mxu0 0.0
    %455 = vmatprep.subr.mxu0 0.0
    %456 = vmatpush1.msra.mxu0 0.0
    %457 = vmatprep.subr.mxu0 0.0
    %458 = vmatpush1.msra.mxu0 0.0
    %459 = vmatprep.subr.mxu0 0.0
    %460 = vmatpush1.msra.mxu0 0.0
    %461 = vmatprep.subr.mxu0 0.0
    %462 = vmatpush1.msra.mxu0 0.0
    %463 = vmatprep.subr.mxu0 0.0
    %464 = vmatpush1.msra.mxu0 0.0
    %465 = vmatprep.subr.mxu0 0.0
    %466 = vmatpush1.msra.mxu0 0.0
    %467 = vmatprep.subr.mxu0 0.0
    %468 = vmatpush1.msra.mxu0 0.0
    %469 = vmatprep.subr.mxu0 0.0
    %470 = vmatpush1.msra.mxu0 0.0
    %471 = vmatprep.subr.mxu0 0.0
    %472 = vmatpush1.msra.mxu0 0.0
    %473 = vmatprep.subr.mxu0 0.0
    %474 = vmatpush1.msra.mxu0 0.0
    %475 = vmatprep.subr.mxu0 0.0
    %476 = vmatpush1.msra.mxu0 0.0
    %477 = vmatprep.subr.mxu0 0.0
    %478 = vmatpush1.msra.mxu0 0.0
    %479 = vmatprep.subr.mxu0 0.0
    %480 = vmatpush1.msra.mxu0 0.0
    %481 = vmatprep.subr.mxu0 0.0
    %482 = vmatpush1.msra.mxu0 0.0
    %483 = vmatprep.subr.mxu0 0.0
    %484 = vmatpush1.msra.mxu0 0.0
    %485 = vmatprep.subr.mxu0 0.0
    %486 = vmatpush1.msra.mxu0 0.0
    %487 = vmatprep.subr.mxu0 0.0
    %488 = vmatpush1.msra.mxu0 0.0
    %489 = vmatprep.subr.mxu0 0.0
    %490 = vmatpush1.msra.mxu0 0.0
    %491 = vmatprep.subr.mxu0 0.0
    %492 = vmatpush1.msra.mxu0 0.0
    %493 = vmatprep.subr.mxu0 0.0
    %494 = vmatpush1.msra.mxu0 0.0
    %495 = vmatprep.subr.mxu0 0.0
    %496 = vmatpush1.msra.mxu0 0.0
    %497 = vmatprep.subr.mxu0 0.0
    %498 = vmatpush1.msra.mxu0 0.0
    %499 = vmatprep.subr.mxu0 0.0
    %500 = vmatpush1.msra.mxu0 0.0
    %501 = vmatprep.subr.mxu0 0.0
    %502 = vmatpush1.msra.mxu0 0.0
    %503 = vmatprep.subr.mxu0 0.0
    %504 = vmatpush1.msra.mxu0 0.0
    %505 = vmatprep.subr.mxu0 0.0
    %506 = vmatpush1.msra.mxu0 0.0
    %507 = vmatprep.subr.mxu0 0.0
    %508 = vmatpush1.msra.mxu0 0.0
    %509 = vmatprep.mubr.f32.mxu0 0.0
    %510 = vmatmul.mubr.f32.gmra.mrb[0].mxu0 %v431
    %v511 = vpop.f32.mrb[0].mxu0
    %v512 = vadd.f32 %v413, %v511
    %v513 = vpop.f32.mrb[0].mxu0
    %514 = vmatprep.mubr.f32.mxu0 0.0
    %515 = vmatmul.mubr.f32.gmra.mrb[0].mxu0 %v434
    %v516 = vpop.f32.mrb[0].mxu0
    %v517 = vadd.f32 %v418, %v516
    %v518 = vpop.f32.mrb[0].mxu0
    %519 = vmatprep.mubr.f32.mxu0 0.0
    %520 = vmatmul.mubr.f32.gmra.mrb[0].mxu0 %v437
    %v521 = vpop.f32.mrb[0].mxu0
    %v522 = vadd.f32 %v423, %v521
    %v523 = vpop.f32.mrb[0].mxu0
    %524 = vmatprep.mubr.f32.mxu0 0.0
    %525 = vmatmul.mubr.f32.gmra.mrb[0].mxu0 %v440
    %v526 = vpop.f32.mrb[0].mxu0
    %v527 = vadd.f32 %v428, %v526
    %v528 = vpop.f32.mrb[0].mxu0
    %529 = vdwg.mxu0
    %v530 = vmax.f32 %v512, 0.0
    %v531 = vmax.f32 %v517, 0.0
    %v532 = vmax.f32 %v522, 0.0
    %v533 = vmax.f32 %v527, 0.0
    %535 = vset.pattern.permute.xlu0 0
    %536 = vperm.xlu0 %535, %v402
    %v537 = vpop.permute.xlu0 %536
    %540 = vset.pattern.permute.xlu0 0
    %541 = vperm.xlu0 %540, %v403
    %v542 = vpop.permute.xlu0 %541
    %545 = vset.pattern.permute.xlu0 0
    %546 = vperm.xlu0 %545, %v404
    %v547 = vpop.permute.xlu0 %546
    %550 = vset.pattern.permute.xlu0 0
    %551 = vperm.xlu0 %550, %v405
    %v552 = vpop.permute.xlu0 %551
    %v555 = vsel %vm195, %v397, 0
    %v558 = vsel %vm195, %v398, 0
    %v561 = vsel %vm195, %v399, 0
    %v564 = vsel %vm195, %v400, 0
    %566 = vmatprep.subr.mxu0 0.0
    %567 = vmatpush1.msra.mxu0 %v530
    %568 = vmatprep.subr.mxu0 0.0
    %569 = vmatpush1.msra.mxu0 %v531
    %570 = vmatprep.subr.mxu0 0.0
    %571 = vmatpush1.msra.mxu0 %v532
    %572 = vmatprep.subr.mxu0 0.0
    %573 = vmatpush1.msra.mxu0 %v533
    %574 = vmatprep.subr.mxu0 0.0
    %575 = vmatpush1.msra.mxu0 0.0
    %576 = vmatprep.subr.mxu0 0.0
    %577 = vmatpush1.msra.mxu0 0.0
    %578 = vmatprep.subr.mxu0 0.0
    %579 = vmatpush1.msra.mxu0 0.0
    %580 = vmatprep.subr.mxu0 0.0
    %581 = vmatpush1.msra.mxu0 0.0
    %582 = vmatprep.subr.mxu0 0.0
    %583 = vmatpush1.msra.mxu0 0.0
    %584 = vmatprep.subr.mxu0 0.0
    %585 = vmatpush1.msra.mxu0 0.0
    %586 = vmatprep.subr.mxu0 0.0
    %587 = vmatpush1.msra.mxu0 0.0
    %588 = vmatprep.subr.mxu0 0.0
    %589 = vmatpush1.msra.mxu0 0.0
    %590 = vmatprep.subr.mxu0 0.0
    %591 = vmatpush1.msra.mxu0 0.0
    %592 = vmatprep.subr.mxu0 0.0
    %593 = vmatpush1.msra.mxu0 0.0
    %594 = vmatprep.subr.mxu0 0.0
    %595 = vmatpush1.msra.mxu0 0.0
    %596 = vmatprep.subr.mxu0 0.0
    %597 = vmatpush1.msra.mxu0 0.0
    %598 = vmatprep.subr.mxu0 0.0
    %599 = vmatpush1.msra.mxu0 0.0
    %600 = vmatprep.subr.mxu0 0.0
    %601 = vmatpush1.msra.mxu0 0.0
    %602 = vmatprep.subr.mxu0 0.0
    %603 = vmatpush1.msra.mxu0 0.0
    %604 = vmatprep.subr.mxu0 0.0
    %605 = vmatpush1.msra.mxu0 0.0
    %606 = vmatprep.subr.mxu0 0.0
    %607 = vmatpush1.msra.mxu0 0.0
    %608 = vmatprep.subr.mxu0 0.0
    %609 = vmatpush1.msra.mxu0 0.0
    %610 = vmatprep.subr.mxu0 0.0
    %611 = vmatpush1.msra.mxu0 0.0
    %612 = vmatprep.subr.mxu0 0.0
    %613 = vmatpush1.msra.mxu0 0.0
    %614 = vmatprep.subr.mxu0 0.0
    %615 = vmatpush1.msra.mxu0 0.0
    %616 = vmatprep.subr.mxu0 0.0
    %617 = vmatpush1.msra.mxu0 0.0
    %618 = vmatprep.subr.mxu0 0.0
    %619 = vmatpush1.msra.mxu0 0.0
    %620 = vmatprep.subr.mxu0 0.0
    %621 = vmatpush1.msra.mxu0 0.0
    %622 = vmatprep.subr.mxu0 0.0
    %623 = vmatpush1.msra.mxu0 0.0
    %624 = vmatprep.subr.mxu0 0.0
    %625 = vmatpush1.msra.mxu0 0.0
    %626 = vmatprep.subr.mxu0 0.0
    %627 = vmatpush1.msra.mxu0 0.0
    %628 = vmatprep.subr.mxu0 0.0
    %629 = vmatpush1.msra.mxu0 0.0
    %630 = vmatprep.mubr.f32.mxu0 0.0
    %631 = vmatmul.mubr.f32.gmra.mrb[0].mxu0 %v555
    %v632 = vpop.f32.mrb[0].mxu0
    %v633 = vadd.f32 %v537, %v632
    %v634 = vpop.f32.mrb[0].mxu0
    %635 = vmatprep.mubr.f32.mxu0 0.0
    %636 = vmatmul.mubr.f32.gmra.mrb[0].mxu0 %v558
    %v637 = vpop.f32.mrb[0].mxu0
    %v638 = vadd.f32 %v542, %v637
    %v639 = vpop.f32.mrb[0].mxu0
    %640 = vmatprep.mubr.f32.mxu0 0.0
    %641 = vmatmul.mubr.f32.gmra.mrb[0].mxu0 %v561
    %v642 = vpop.f32.mrb[0].mxu0
    %v643 = vadd.f32 %v547, %v642
    %v644 = vpop.f32.mrb[0].mxu0
    %645 = vmatprep.mubr.f32.mxu0 0.0
    %646 = vmatmul.mubr.f32.gmra.mrb[0].mxu0 %v564
    %v647 = vpop.f32.mrb[0].mxu0
    %v648 = vadd.f32 %v552, %v647
    %v649 = vpop.f32.mrb[0].mxu0
    %650 = vdwg.mxu0
    %v651 = vmax.f32 %v633, 0.0
    %v652 = vmax.f32 %v638, 0.0
    %v653 = vmax.f32 %v643, 0.0
    %v654 = vmax.f32 %v648, 0.0
    %656 = vset.pattern.permute.xlu0 0
    %657 = vperm.xlu0 %656, %v409
    %v658 = vpop.permute.xlu0 %657
    %v661 = vsel %vm195, %v407, 0
    %663 = vmatprep.subr.mxu0 0.0
    %664 = vmatpush1.msra.mxu0 %v651
    %665 = vmatprep.subr.mxu0 0.0
    %666 = vmatpush1.msra.mxu0 %v652
    %667 = vmatprep.subr.mxu0 0.0
    %668 = vmatpush1.msra.mxu0 %v653
    %669 = vmatprep.subr.mxu0 0.0
    %670 = vmatpush1.msra.mxu0 %v654
    %671 = vmatprep.subr.mxu0 0.0
    %672 = vmatpush1.msra.mxu0 0.0
    %673 = vmatprep.subr.mxu0 0.0
    %674 = vmatpush1.msra.mxu0 0.0
    %675 = vmatprep.subr.mxu0 0.0
    %676 = vmatpush1.msra.mxu0 0.0
    %677 = vmatprep.subr.mxu0 0.0
    %678 = vmatpush1.msra.mxu0 0.0
    %679 = vmatprep.subr.mxu0 0.0
    %680 = vmatpush1.msra.mxu0 0.0
    %681 = vmatprep.subr.mxu0 0.0
    %682 = vmatpush1.msra.mxu0 0.0
    %683 = vmatprep.subr.mxu0 0.0
    %684 = vmatpush1.msra.mxu0 0.0
    %685 = vmatprep.subr.mxu0 0.0
    %686 = vmatpush1.msra.mxu0 0.0
    %687 = vmatprep.subr.mxu0 0.0
    %688 = vmatpush1.msra.mxu0 0.0
    %689 = vmatprep.subr.mxu0 0.0
    %690 = vmatpush1.msra.mxu0 0.0
    %691 = vmatprep.subr.mxu0 0.0
    %692 = vmatpush1.msra.mxu0 0.0
    %693 = vmatprep.subr.mxu0 0.0
    %694 = vmatpush1.msra.mxu0 0.0
    %695 = vmatprep.subr.mxu0 0.0
    %696 = vmatpush1.msra.mxu0 0.0
    %697 = vmatprep.subr.mxu0 0.0
    %698 = vmatpush1.msra.mxu0 0.0
    %699 = vmatprep.subr.mxu0 0.0
    %700 = vmatpush1.msra.mxu0 0.0
    %701 = vmatprep.subr.mxu0 0.0
    %702 = vmatpush1.msra.mxu0 0.0
    %703 = vmatprep.subr.mxu0 0.0
    %704 = vmatpush1.msra.mxu0 0.0
    %705 = vmatprep.subr.mxu0 0.0
    %706 = vmatpush1.msra.mxu0 0.0
    %707 = vmatprep.subr.mxu0 0.0
    %708 = vmatpush1.msra.mxu0 0.0
    %709 = vmatprep.subr.mxu0 0.0
    %710 = vmatpush1.msra.mxu0 0.0
    %711 = vmatprep.subr.mxu0 0.0
    %712 = vmatpush1.msra.mxu0 0.0
    %713 = vmatprep.subr.mxu0 0.0
    %714 = vmatpush1.msra.mxu0 0.0
    %715 = vmatprep.subr.mxu0 0.0
    %716 = vmatpush1.msra.mxu0 0.0
    %717 = vmatprep.subr.mxu0 0.0
    %718 = vmatpush1.msra.mxu0 0.0
    %719 = vmatprep.subr.mxu0 0.0
    %720 = vmatpush1.msra.mxu0 0.0
    %721 = vmatprep.subr.mxu0 0.0
    %722 = vmatpush1.msra.mxu0 0.0
    %723 = vmatprep.subr.mxu0 0.0
    %724 = vmatpush1.msra.mxu0 0.0
    %725 = vmatprep.subr.mxu0 0.0
    %726 = vmatpush1.msra.mxu0 0.0
    %727 = vmatprep.mubr.f32.mxu0 0.0
    %728 = vmatmul.mubr.f32.gmra.mrb[0].mxu0 %v661
    %v729 = vpop.f32.mrb[0].mxu0
    %v730 = vadd.f32 %v658, %v729
    %v731 = vpop.f32.mrb[0].mxu0
    %732 = vdwg.mxu0
    %v733 = vtanh.pop %v730
    %v734 = vmul.f32 %v733, 1.442695
    %v735 = vpow.pop %v734
    %v736 = vmul.f32 %v735, %v30
    %v738 = vrot.slane %v730, 4
    %v740 = vadd.f32 %v736, %v738
    %v741 = vadd.f32 %v385, %v733
    %s742 = scalar_lea.vmem %s1, 64
    %v743 = vld [vmem:[%s742] sm:$0xff]
    %v744 = vld [vmem:[%s742 + $0x8] sm:$0xff]
    %v745 = vld [vmem:[%s742 + $0x10] sm:$0xff]
    %v746 = vld [vmem:[%s742 + $0x18] sm:$0xff]
    %s747 = scalar_lea.vmem %s2, 64
    %v748 = vld [vmem:[%s747] sm:$0xff]
    %v749 = vld [vmem:[%s747 + $0x8] sm:$0xff]
    %v750 = vld [vmem:[%s747 + $0x10] sm:$0xff]
    %v751 = vld [vmem:[%s747 + $0x18] sm:$0xff]
    %s752 = scalar_lea.vmem %s3, 64
    %v753 = vld [vmem:[%s752] sm:$0xff]
    %v754 = vld [vmem:[%s752 + $0x8] sm:$0xff]
    %v755 = vld [vmem:[%s752 + $0x10] sm:$0xff]
    %v756 = vld [vmem:[%s752 + $0x18] sm:$0xff]
    %s757 = scalar_lea.vmem %s4, 64
    %v758 = vld [vmem:[%s757] sm:$0xff]
    %v759 = vld [vmem:[%s757 + $0x8] sm:$0xff]
    %v760 = vld [vmem:[%s757 + $0x10] sm:$0xff]
    %v761 = vld [vmem:[%s757 + $0x18] sm:$0xff]
    %s762 = scalar_lea.vmem %s5, 16
    %v763 = vld [vmem:[%s762] sm:$0xff]
    %s764 = scalar_lea.vmem %s6, 16
    %v765 = vld [vmem:[%s764] sm:$0xff]
    %767 = vset.pattern.permute.xlu0 0
    %768 = vperm.xlu0 %767, %v748
    %v769 = vpop.permute.xlu0 %768
    %772 = vset.pattern.permute.xlu0 0
    %773 = vperm.xlu0 %772, %v749
    %v774 = vpop.permute.xlu0 %773
    %777 = vset.pattern.permute.xlu0 0
    %778 = vperm.xlu0 %777, %v750
    %v779 = vpop.permute.xlu0 %778
    %782 = vset.pattern.permute.xlu0 0
    %783 = vperm.xlu0 %782, %v751
    %v784 = vpop.permute.xlu0 %783
    %v787 = vsel %vm69, %v743, 0
    %v790 = vsel %vm69, %v744, 0
    %v793 = vsel %vm69, %v745, 0
    %v796 = vsel %vm69, %v746, 0
    %v799 = vsel %vm82, %v740, 0
    %801 = vmatprep.subr.mxu0 0.0
    %802 = vmatpush1.msra.mxu0 %v799
    %803 = vmatprep.subr.mxu0 0.0
    %804 = vmatpush1.msra.mxu0 0.0
    %805 = vmatprep.subr.mxu0 0.0
    %806 = vmatpush1.msra.mxu0 0.0
    %807 = vmatprep.subr.mxu0 0.0
    %808 = vmatpush1.msra.mxu0 0.0
    %809 = vmatprep.subr.mxu0 0.0
    %810 = vmatpush1.msra.mxu0 0.0
    %811 = vmatprep.subr.mxu0 0.0
    %812 = vmatpush1.msra.mxu0 0.0
    %813 = vmatprep.subr.mxu0 0.0
    %814 = vmatpush1.msra.mxu0 0.0
    %815 = vmatprep.subr.mxu0 0.0
    %816 = vmatpush1.msra.mxu0 0.0
    %817 = vmatprep.subr.mxu0 0.0
    %818 = vmatpush1.msra.mxu0 0.0
    %819 = vmatprep.subr.mxu0 0.0
    %820 = vmatpush1.msra.mxu0 0.0
    %821 = vmatprep.subr.mxu0 0.0
    %822 = vmatpush1.msra.mxu0 0.0
    %823 = vmatprep.subr.mxu0 0.0
    %824 = vmatpush1.msra.mxu0 0.0
    %825 = vmatprep.subr.mxu0 0.0
    %826 = vmatpush1.msra.mxu0 0.0
    %827 = vmatprep.subr.mxu0 0.0
    %828 = vmatpush1.msra.mxu0 0.0
    %829 = vmatprep.subr.mxu0 0.0
    %830 = vmatpush1.msra.mxu0 0.0
    %831 = vmatprep.subr.mxu0 0.0
    %832 = vmatpush1.msra.mxu0 0.0
    %833 = vmatprep.subr.mxu0 0.0
    %834 = vmatpush1.msra.mxu0 0.0
    %835 = vmatprep.subr.mxu0 0.0
    %836 = vmatpush1.msra.mxu0 0.0
    %837 = vmatprep.subr.mxu0 0.0
    %838 = vmatpush1.msra.mxu0 0.0
    %839 = vmatprep.subr.mxu0 0.0
    %840 = vmatpush1.msra.mxu0 0.0
    %841 = vmatprep.subr.mxu0 0.0
    %842 = vmatpush1.msra.mxu0 0.0
    %843 = vmatprep.subr.mxu0 0.0
    %844 = vmatpush1.msra.mxu0 0.0
    %845 = vmatprep.subr.mxu0 0.0
    %846 = vmatpush1.msra.mxu0 0.0
    %847 = vmatprep.subr.mxu0 0.0
    %848 = vmatpush1.msra.mxu0 0.0
    %849 = vmatprep.subr.mxu0 0.0
    %850 = vmatpush1.msra.mxu0 0.0
    %851 = vmatprep.subr.mxu0 0.0
    %852 = vmatpush1.msra.mxu0 0.0
    %853 = vmatprep.subr.mxu0 0.0
    %854 = vmatpush1.msra.mxu0 0.0
    %855 = vmatprep.subr.mxu0 0.0
    %856 = vmatpush1.msra.mxu0 0.0
    %857 = vmatprep.subr.mxu0 0.0
    %858 = vmatpush1.msra.mxu0 0.0
    %859 = vmatprep.subr.mxu0 0.0
    %860 = vmatpush1.msra.mxu0 0.0
    %861 = vmatprep.subr.mxu0 0.0
    %862 = vmatpush1.msra.mxu0 0.0
    %863 = vmatprep.subr.mxu0 0.0
    %864 = vmatpush1.msra.mxu0 0.0
    %865 = vmatprep.mubr.f32.mxu0 0.0
    %866 = vmatmul.mubr.f32.gmra.mrb[0].mxu0 %v787
    %v867 = vpop.f32.mrb[0].mxu0
    %v868 = vadd.f32 %v769, %v867
    %v869 = vpop.f32.mrb[0].mxu0
    %870 = vmatprep.mubr.f32.mxu0 0.0
    %871 = vmatmul.mubr.f32.gmra.mrb[0].mxu0 %v790
    %v872 = vpop.f32.mrb[0].mxu0
    %v873 = vadd.f32 %v774, %v872
    %v874 = vpop.f32.mrb[0].mxu0
    %875 = vmatprep.mubr.f32.mxu0 0.0
    %876 = vmatmul.mubr.f32.gmra.mrb[0].mxu0 %v793
    %v877 = vpop.f32.mrb[0].mxu0
    %v878 = vadd.f32 %v779, %v877
    %v879 = vpop.f32.mrb[0].mxu0
    %880 = vmatprep.mubr.f32.mxu0 0.0
    %881 = vmatmul.mubr.f32.gmra.mrb[0].mxu0 %v796
    %v882 = vpop.f32.mrb[0].mxu0
    %v883 = vadd.f32 %v784, %v882
    %v884 = vpop.f32.mrb[0].mxu0
    %885 = vdwg.mxu0
    %v886 = vmax.f32 %v868, 0.0
    %v887 = vmax.f32 %v873, 0.0
    %v888 = vmax.f32 %v878, 0.0
    %v889 = vmax.f32 %v883, 0.0
    %891 = vset.pattern.permute.xlu0 0
    %892 = vperm.xlu0 %891, %v758
    %v893 = vpop.permute.xlu0 %892
    %896 = vset.pattern.permute.xlu0 0
    %897 = vperm.xlu0 %896, %v759
    %v898 = vpop.permute.xlu0 %897
    %901 = vset.pattern.permute.xlu0 0
    %902 = vperm.xlu0 %901, %v760
    %v903 = vpop.permute.xlu0 %902
    %906 = vset.pattern.permute.xlu0 0
    %907 = vperm.xlu0 %906, %v761
    %v908 = vpop.permute.xlu0 %907
    %v911 = vsel %vm195, %v753, 0
    %v914 = vsel %vm195, %v754, 0
    %v917 = vsel %vm195, %v755, 0
    %v920 = vsel %vm195, %v756, 0
    %922 = vmatprep.subr.mxu0 0.0
    %923 = vmatpush1.msra.mxu0 %v886
    %924 = vmatprep.subr.mxu0 0.0
    %925 = vmatpush1.msra.mxu0 %v887
    %926 = vmatprep.subr.mxu0 0.0
    %927 = vmatpush1.msra.mxu0 %v888
    %928 = vmatprep.subr.mxu0 0.0
    %929 = vmatpush1.msra.mxu0 %v889
    %930 = vmatprep.subr.mxu0 0.0
    %931 = vmatpush1.msra.mxu0 0.0
    %932 = vmatprep.subr.mxu0 0.0
    %933 = vmatpush1.msra.mxu0 0.0
    %934 = vmatprep.subr.mxu0 0.0
    %935 = vmatpush1.msra.mxu0 0.0
    %936 = vmatprep.subr.mxu0 0.0
    %937 = vmatpush1.msra.mxu0 0.0
    %938 = vmatprep.subr.mxu0 0.0
    %939 = vmatpush1.msra.mxu0 0.0
    %940 = vmatprep.subr.mxu0 0.0
    %941 = vmatpush1.msra.mxu0 0.0
    %942 = vmatprep.subr.mxu0 0.0
    %943 = vmatpush1.msra.mxu0 0.0
    %944 = vmatprep.subr.mxu0 0.0
    %945 = vmatpush1.msra.mxu0 0.0
    %946 = vmatprep.subr.mxu0 0.0
    %947 = vmatpush1.msra.mxu0 0.0
    %948 = vmatprep.subr.mxu0 0.0
    %949 = vmatpush1.msra.mxu0 0.0
    %950 = vmatprep.subr.mxu0 0.0
    %951 = vmatpush1.msra.mxu0 0.0
    %952 = vmatprep.subr.mxu0 0.0
    %953 = vmatpush1.msra.mxu0 0.0
    %954 = vmatprep.subr.mxu0 0.0
    %955 = vmatpush1.msra.mxu0 0.0
    %956 = vmatprep.subr.mxu0 0.0
    %957 = vmatpush1.msra.mxu0 0.0
    %958 = vmatprep.subr.mxu0 0.0
    %959 = vmatpush1.msra.mxu0 0.0
    %960 = vmatprep.subr.mxu0 0.0
    %961 = vmatpush1.msra.mxu0 0.0
    %962 = vmatprep.subr.mxu0 0.0
    %963 = vmatpush1.msra.mxu0 0.0
    %964 = vmatprep.subr.mxu0 0.0
    %965 = vmatpush1.msra.mxu0 0.0
    %966 = vmatprep.subr.mxu0 0.0
    %967 = vmatpush1.msra.mxu0 0.0
    %968 = vmatprep.subr.mxu0 0.0
    %969 = vmatpush1.msra.mxu0 0.0
    %970 = vmatprep.subr.mxu0 0.0
    %971 = vmatpush1.msra.mxu0 0.0
    %972 = vmatprep.subr.mxu0 0.0
    %973 = vmatpush1.msra.mxu0 0.0
    %974 = vmatprep.subr.mxu0 0.0
    %975 = vmatpush1.msra.mxu0 0.0
    %976 = vmatprep.subr.mxu0 0.0
    %977 = vmatpush1.msra.mxu0 0.0
    %978 = vmatprep.subr.mxu0 0.0
    %979 = vmatpush1.msra.mxu0 0.0
    %980 = vmatprep.subr.mxu0 0.0
    %981 = vmatpush1.msra.mxu0 0.0
    %982 = vmatprep.subr.mxu0 0.0
    %983 = vmatpush1.msra.mxu0 0.0
    %984 = vmatprep.subr.mxu0 0.0
    %985 = vmatpush1.msra.mxu0 0.0
    %986 = vmatprep.mubr.f32.mxu0 0.0
    %987 = vmatmul.mubr.f32.gmra.mrb[0].mxu0 %v911
    %v988 = vpop.f32.mrb[0].mxu0
    %v989 = vadd.f32 %v893, %v988
    %v990 = vpop.f32.mrb[0].mxu0
    %991 = vmatprep.mubr.f32.mxu0 0.0
    %992 = vmatmul.mubr.f32.gmra.mrb[0].mxu0 %v914
    %v993 = vpop.f32.mrb[0].mxu0
    %v994 = vadd.f32 %v898, %v993
    %v995 = vpop.f32.mrb[0].mxu0
    %996 = vmatprep.mubr.f32.mxu0 0.0
    %997 = vmatmul.mubr.f32.gmra.mrb[0].mxu0 %v917
    %v998 = vpop.f32.mrb[0].mxu0
    %v999 = vadd.f32 %v903, %v998
    %v1000 = vpop.f32.mrb[0].mxu0
    %1001 = vmatprep.mubr.f32.mxu0 0.0
    %1002 = vmatmul.mubr.f32.gmra.mrb[0].mxu0 %v920
    %v1003 = vpop.f32.mrb[0].mxu0
    %v1004 = vadd.f32 %v908, %v1003
    %v1005 = vpop.f32.mrb[0].mxu0
    %1006 = vdwg.mxu0
    %v1007 = vmax.f32 %v989, 0.0
    %v1008 = vmax.f32 %v994, 0.0
    %v1009 = vmax.f32 %v999, 0.0
    %v1010 = vmax.f32 %v1004, 0.0
    %1012 = vset.pattern.permute.xlu0 0
    %1013 = vperm.xlu0 %1012, %v765
    %v1014 = vpop.permute.xlu0 %1013
    %v1017 = vsel %vm195, %v763, 0
    %1019 = vmatprep.subr.mxu0 0.0
    %1020 = vmatpush1.msra.mxu0 %v1007
    %1021 = vmatprep.subr.mxu0 0.0
    %1022 = vmatpush1.msra.mxu0 %v1008
    %1023 = vmatprep.subr.mxu0 0.0
    %1024 = vmatpush1.msra.mxu0 %v1009
    %1025 = vmatprep.subr.mxu0 0.0
    %1026 = vmatpush1.msra.mxu0 %v1010
    %1027 = vmatprep.subr.mxu0 0.0
    %1028 = vmatpush1.msra.mxu0 0.0
    %1029 = vmatprep.subr.mxu0 0.0
    %1030 = vmatpush1.msra.mxu0 0.0
    %1031 = vmatprep.subr.mxu0 0.0
    %1032 = vmatpush1.msra.mxu0 0.0
    %1033 = vmatprep.subr.mxu0 0.0
    %1034 = vmatpush1.msra.mxu0 0.0
    %1035 = vmatprep.subr.mxu0 0.0
    %1036 = vmatpush1.msra.mxu0 0.0
    %1037 = vmatprep.subr.mxu0 0.0
    %1038 = vmatpush1.msra.mxu0 0.0
    %1039 = vmatprep.subr.mxu0 0.0
    %1040 = vmatpush1.msra.mxu0 0.0
    %1041 = vmatprep.subr.mxu0 0.0
    %1042 = vmatpush1.msra.mxu0 0.0
    %1043 = vmatprep.subr.mxu0 0.0
    %1044 = vmatpush1.msra.mxu0 0.0
    %1045 = vmatprep.subr.mxu0 0.0
    %1046 = vmatpush1.msra.mxu0 0.0
    %1047 = vmatprep.subr.mxu0 0.0
    %1048 = vmatpush1.msra.mxu0 0.0
    %1049 = vmatprep.subr.mxu0 0.0
    %1050 = vmatpush1.msra.mxu0 0.0
    %1051 = vmatprep.subr.mxu0 0.0
    %1052 = vmatpush1.msra.mxu0 0.0
    %1053 = vmatprep.subr.mxu0 0.0
    %1054 = vmatpush1.msra.mxu0 0.0
    %1055 = vmatprep.subr.mxu0 0.0
    %1056 = vmatpush1.msra.mxu0 0.0
    %1057 = vmatprep.subr.mxu0 0.0
    %1058 = vmatpush1.msra.mxu0 0.0
    %1059 = vmatprep.subr.mxu0 0.0
    %1060 = vmatpush1.msra.mxu0 0.0
    %1061 = vmatprep.subr.mxu0 0.0
    %1062 = vmatpush1.msra.mxu0 0.0
    %1063 = vmatprep.subr.mxu0 0.0
    %1064 = vmatpush1.msra.mxu0 0.0
    %1065 = vmatprep.subr.mxu0 0.0
    %1066 = vmatpush1.msra.mxu0 0.0
    %1067 = vmatprep.subr.mxu0 0.0
    %1068 = vmatpush1.msra.mxu0 0.0
    %1069 = vmatprep.subr.mxu0 0.0
    %1070 = vmatpush1.msra.mxu0 0.0
    %1071 = vmatprep.subr.mxu0 0.0
    %1072 = vmatpush1.msra.mxu0 0.0
    %1073 = vmatprep.subr.mxu0 0.0
    %1074 = vmatpush1.msra.mxu0 0.0
    %1075 = vmatprep.subr.mxu0 0.0
    %1076 = vmatpush1.msra.mxu0 0.0
    %1077 = vmatprep.subr.mxu0 0.0
    %1078 = vmatpush1.msra.mxu0 0.0
    %1079 = vmatprep.subr.mxu0 0.0
    %1080 = vmatpush1.msra.mxu0 0.0
    %1081 = vmatprep.subr.mxu0 0.0
    %1082 = vmatpush1.msra.mxu0 0.0
    %1083 = vmatprep.mubr.f32.mxu0 0.0
    %1084 = vmatmul.mubr.f32.gmra.mrb[0].mxu0 %v1017
    %v1085 = vpop.f32.mrb[0].mxu0
    %v1086 = vadd.f32 %v1014, %v1085
    %v1087 = vpop.f32.mrb[0].mxu0
    %1088 = vdwg.mxu0
    %v1089 = vtanh.pop %v1086
    %v1090 = vmul.f32 %v1089, 1.442695
    %v1091 = vpow.pop %v1090
    %v1092 = vmul.f32 %v1091, %v384
    %v1094 = vrot.slane %v1086, 4
    %v1096 = vadd.f32 %v1092, %v1094
    %v1097 = vadd.f32 %v741, %v1089
    %s1098 = scalar_lea.vmem %s1, 96
    %v1099 = vld [vmem:[%s1098] sm:$0xff]
    %v1100 = vld [vmem:[%s1098 + $0x8] sm:$0xff]
    %v1101 = vld [vmem:[%s1098 + $0x10] sm:$0xff]
    %v1102 = vld [vmem:[%s1098 + $0x18] sm:$0xff]
    %s1103 = scalar_lea.vmem %s2, 96
    %v1104 = vld [vmem:[%s1103] sm:$0xff]
    %v1105 = vld [vmem:[%s1103 + $0x8] sm:$0xff]
    %v1106 = vld [vmem:[%s1103 + $0x10] sm:$0xff]
    %v1107 = vld [vmem:[%s1103 + $0x18] sm:$0xff]
    %s1108 = scalar_lea.vmem %s3, 96
    %v1109 = vld [vmem:[%s1108] sm:$0xff]
    %v1110 = vld [vmem:[%s1108 + $0x8] sm:$0xff]
    %v1111 = vld [vmem:[%s1108 + $0x10] sm:$0xff]
    %v1112 = vld [vmem:[%s1108 + $0x18] sm:$0xff]
    %s1113 = scalar_lea.vmem %s4, 96
    %v1114 = vld [vmem:[%s1113] sm:$0xff]
    %v1115 = vld [vmem:[%s1113 + $0x8] sm:$0xff]
    %v1116 = vld [vmem:[%s1113 + $0x10] sm:$0xff]
    %v1117 = vld [vmem:[%s1113 + $0x18] sm:$0xff]
    %s1118 = scalar_lea.vmem %s5, 24
    %v1119 = vld [vmem:[%s1118] sm:$0xff]
    %s1120 = scalar_lea.vmem %s6, 24
    %v1121 = vld [vmem:[%s1120] sm:$0xff]
    %1123 = vset.pattern.permute.xlu0 0
    %1124 = vperm.xlu0 %1123, %v1104
    %v1125 = vpop.permute.xlu0 %1124
    %1128 = vset.pattern.permute.xlu0 0
    %1129 = vperm.xlu0 %1128, %v1105
    %v1130 = vpop.permute.xlu0 %1129
    %1133 = vset.pattern.permute.xlu0 0
    %1134 = vperm.xlu0 %1133, %v1106
    %v1135 = vpop.permute.xlu0 %1134
    %1138 = vset.pattern.permute.xlu0 0
    %1139 = vperm.xlu0 %1138, %v1107
    %v1140 = vpop.permute.xlu0 %1139
    %v1143 = vsel %vm69, %v1099, 0
    %v1146 = vsel %vm69, %v1100, 0
    %v1149 = vsel %vm69, %v1101, 0
    %v1152 = vsel %vm69, %v1102, 0
    %v1155 = vsel %vm82, %v1096, 0
    %1157 = vmatprep.subr.mxu0 0.0
    %1158 = vmatpush1.msra.mxu0 %v1155
    %1159 = vmatprep.subr.mxu0 0.0
    %1160 = vmatpush1.msra.mxu0 0.0
    %1161 = vmatprep.subr.mxu0 0.0
    %1162 = vmatpush1.msra.mxu0 0.0
    %1163 = vmatprep.subr.mxu0 0.0
    %1164 = vmatpush1.msra.mxu0 0.0
    %1165 = vmatprep.subr.mxu0 0.0
    %1166 = vmatpush1.msra.mxu0 0.0
    %1167 = vmatprep.subr.mxu0 0.0
    %1168 = vmatpush1.msra.mxu0 0.0
    %1169 = vmatprep.subr.mxu0 0.0
    %1170 = vmatpush1.msra.mxu0 0.0
    %1171 = vmatprep.subr.mxu0 0.0
    %1172 = vmatpush1.msra.mxu0 0.0
    %1173 = vmatprep.subr.mxu0 0.0
    %1174 = vmatpush1.msra.mxu0 0.0
    %1175 = vmatprep.subr.mxu0 0.0
    %1176 = vmatpush1.msra.mxu0 0.0
    %1177 = vmatprep.subr.mxu0 0.0
    %1178 = vmatpush1.msra.mxu0 0.0
    %1179 = vmatprep.subr.mxu0 0.0
    %1180 = vmatpush1.msra.mxu0 0.0
    %1181 = vmatprep.subr.mxu0 0.0
    %1182 = vmatpush1.msra.mxu0 0.0
    %1183 = vmatprep.subr.mxu0 0.0
    %1184 = vmatpush1.msra.mxu0 0.0
    %1185 = vmatprep.subr.mxu0 0.0
    %1186 = vmatpush1.msra.mxu0 0.0
    %1187 = vmatprep.subr.mxu0 0.0
    %1188 = vmatpush1.msra.mxu0 0.0
    %1189 = vmatprep.subr.mxu0 0.0
    %1190 = vmatpush1.msra.mxu0 0.0
    %1191 = vmatprep.subr.mxu0 0.0
    %1192 = vmatpush1.msra.mxu0 0.0
    %1193 = vmatprep.subr.mxu0 0.0
    %1194 = vmatpush1.msra.mxu0 0.0
    %1195 = vmatprep.subr.mxu0 0.0
    %1196 = vmatpush1.msra.mxu0 0.0
    %1197 = vmatprep.subr.mxu0 0.0
    %1198 = vmatpush1.msra.mxu0 0.0
    %1199 = vmatprep.subr.mxu0 0.0
    %1200 = vmatpush1.msra.mxu0 0.0
    %1201 = vmatprep.subr.mxu0 0.0
    %1202 = vmatpush1.msra.mxu0 0.0
    %1203 = vmatprep.subr.mxu0 0.0
    %1204 = vmatpush1.msra.mxu0 0.0
    %1205 = vmatprep.subr.mxu0 0.0
    %1206 = vmatpush1.msra.mxu0 0.0
    %1207 = vmatprep.subr.mxu0 0.0
    %1208 = vmatpush1.msra.mxu0 0.0
    %1209 = vmatprep.subr.mxu0 0.0
    %1210 = vmatpush1.msra.mxu0 0.0
    %1211 = vmatprep.subr.mxu0 0.0
    %1212 = vmatpush1.msra.mxu0 0.0
    %1213 = vmatprep.subr.mxu0 0.0
    %1214 = vmatpush1.msra.mxu0 0.0
    %1215 = vmatprep.subr.mxu0 0.0
    %1216 = vmatpush1.msra.mxu0 0.0
    %1217 = vmatprep.subr.mxu0 0.0
    %1218 = vmatpush1.msra.mxu0 0.0
    %1219 = vmatprep.subr.mxu0 0.0
    %1220 = vmatpush1.msra.mxu0 0.0
    %1221 = vmatprep.mubr.f32.mxu0 0.0
    %1222 = vmatmul.mubr.f32.gmra.mrb[0].mxu0 %v1143
    %v1223 = vpop.f32.mrb[0].mxu0
    %v1224 = vadd.f32 %v1125, %v1223
    %v1225 = vpop.f32.mrb[0].mxu0
    %1226 = vmatprep.mubr.f32.mxu0 0.0
    %1227 = vmatmul.mubr.f32.gmra.mrb[0].mxu0 %v1146
    %v1228 = vpop.f32.mrb[0].mxu0
    %v1229 = vadd.f32 %v1130, %v1228
    %v1230 = vpop.f32.mrb[0].mxu0
    %1231 = vmatprep.mubr.f32.mxu0 0.0
    %1232 = vmatmul.mubr.f32.gmra.mrb[0].mxu0 %v1149
    %v1233 = vpop.f32.mrb[0].mxu0
    %v1234 = vadd.f32 %v1135, %v1233
    %v1235 = vpop.f32.mrb[0].mxu0
    %1236 = vmatprep.mubr.f32.mxu0 0.0
    %1237 = vmatmul.mubr.f32.gmra.mrb[0].mxu0 %v1152
    %v1238 = vpop.f32.mrb[0].mxu0
    %v1239 = vadd.f32 %v1140, %v1238
    %v1240 = vpop.f32.mrb[0].mxu0
    %1241 = vdwg.mxu0
    %v1242 = vmax.f32 %v1224, 0.0
    %v1243 = vmax.f32 %v1229, 0.0
    %v1244 = vmax.f32 %v1234, 0.0
    %v1245 = vmax.f32 %v1239, 0.0
    %1247 = vset.pattern.permute.xlu0 0
    %1248 = vperm.xlu0 %1247, %v1114
    %v1249 = vpop.permute.xlu0 %1248
    %1252 = vset.pattern.permute.xlu0 0
    %1253 = vperm.xlu0 %1252, %v1115
    %v1254 = vpop.permute.xlu0 %1253
    %1257 = vset.pattern.permute.xlu0 0
    %1258 = vperm.xlu0 %1257, %v1116
    %v1259 = vpop.permute.xlu0 %1258
    %1262 = vset.pattern.permute.xlu0 0
    %1263 = vperm.xlu0 %1262, %v1117
    %v1264 = vpop.permute.xlu0 %1263
    %v1267 = vsel %vm195, %v1109, 0
    %v1270 = vsel %vm195, %v1110, 0
    %v1273 = vsel %vm195, %v1111, 0
    %v1276 = vsel %vm195, %v1112, 0
    %1278 = vmatprep.subr.mxu0 0.0
    %1279 = vmatpush1.msra.mxu0 %v1242
    %1280 = vmatprep.subr.mxu0 0.0
    %1281 = vmatpush1.msra.mxu0 %v1243
    %1282 = vmatprep.subr.mxu0 0.0
    %1283 = vmatpush1.msra.mxu0 %v1244
    %1284 = vmatprep.subr.mxu0 0.0
    %1285 = vmatpush1.msra.mxu0 %v1245
    %1286 = vmatprep.subr.mxu0 0.0
    %1287 = vmatpush1.msra.mxu0 0.0
    %1288 = vmatprep.subr.mxu0 0.0
    %1289 = vmatpush1.msra.mxu0 0.0
    %1290 = vmatprep.subr.mxu0 0.0
    %1291 = vmatpush1.msra.mxu0 0.0
    %1292 = vmatprep.subr.mxu0 0.0
    %1293 = vmatpush1.msra.mxu0 0.0
    %1294 = vmatprep.subr.mxu0 0.0
    %1295 = vmatpush1.msra.mxu0 0.0
    %1296 = vmatprep.subr.mxu0 0.0
    %1297 = vmatpush1.msra.mxu0 0.0
    %1298 = vmatprep.subr.mxu0 0.0
    %1299 = vmatpush1.msra.mxu0 0.0
    %1300 = vmatprep.subr.mxu0 0.0
    %1301 = vmatpush1.msra.mxu0 0.0
    %1302 = vmatprep.subr.mxu0 0.0
    %1303 = vmatpush1.msra.mxu0 0.0
    %1304 = vmatprep.subr.mxu0 0.0
    %1305 = vmatpush1.msra.mxu0 0.0
    %1306 = vmatprep.subr.mxu0 0.0
    %1307 = vmatpush1.msra.mxu0 0.0
    %1308 = vmatprep.subr.mxu0 0.0
    %1309 = vmatpush1.msra.mxu0 0.0
    %1310 = vmatprep.subr.mxu0 0.0
    %1311 = vmatpush1.msra.mxu0 0.0
    %1312 = vmatprep.subr.mxu0 0.0
    %1313 = vmatpush1.msra.mxu0 0.0
    %1314 = vmatprep.subr.mxu0 0.0
    %1315 = vmatpush1.msra.mxu0 0.0
    %1316 = vmatprep.subr.mxu0 0.0
    %1317 = vmatpush1.msra.mxu0 0.0
    %1318 = vmatprep.subr.mxu0 0.0
    %1319 = vmatpush1.msra.mxu0 0.0
    %1320 = vmatprep.subr.mxu0 0.0
    %1321 = vmatpush1.msra.mxu0 0.0
    %1322 = vmatprep.subr.mxu0 0.0
    %1323 = vmatpush1.msra.mxu0 0.0
    %1324 = vmatprep.subr.mxu0 0.0
    %1325 = vmatpush1.msra.mxu0 0.0
    %1326 = vmatprep.subr.mxu0 0.0
    %1327 = vmatpush1.msra.mxu0 0.0
    %1328 = vmatprep.subr.mxu0 0.0
    %1329 = vmatpush1.msra.mxu0 0.0
    %1330 = vmatprep.subr.mxu0 0.0
    %1331 = vmatpush1.msra.mxu0 0.0
    %1332 = vmatprep.subr.mxu0 0.0
    %1333 = vmatpush1.msra.mxu0 0.0
    %1334 = vmatprep.subr.mxu0 0.0
    %1335 = vmatpush1.msra.mxu0 0.0
    %1336 = vmatprep.subr.mxu0 0.0
    %1337 = vmatpush1.msra.mxu0 0.0
    %1338 = vmatprep.subr.mxu0 0.0
    %1339 = vmatpush1.msra.mxu0 0.0
    %1340 = vmatprep.subr.mxu0 0.0
    %1341 = vmatpush1.msra.mxu0 0.0
    %1342 = vmatprep.mubr.f32.mxu0 0.0
    %1343 = vmatmul.mubr.f32.gmra.mrb[0].mxu0 %v1267
    %v1344 = vpop.f32.mrb[0].mxu0
    %v1345 = vadd.f32 %v1249, %v1344
    %v1346 = vpop.f32.mrb[0].mxu0
    %1347 = vmatprep.mubr.f32.mxu0 0.0
    %1348 = vmatmul.mubr.f32.gmra.mrb[0].mxu0 %v1270
    %v1349 = vpop.f32.mrb[0].mxu0
    %v1350 = vadd.f32 %v1254, %v1349
    %v1351 = vpop.f32.mrb[0].mxu0
    %1352 = vmatprep.mubr.f32.mxu0 0.0
    %1353 = vmatmul.mubr.f32.gmra.mrb[0].mxu0 %v1273
    %v1354 = vpop.f32.mrb[0].mxu0
    %v1355 = vadd.f32 %v1259, %v1354
    %v1356 = vpop.f32.mrb[0].mxu0
    %1357 = vmatprep.mubr.f32.mxu0 0.0
    %1358 = vmatmul.mubr.f32.gmra.mrb[0].mxu0 %v1276
    %v1359 = vpop.f32.mrb[0].mxu0
    %v1360 = vadd.f32 %v1264, %v1359
    %v1361 = vpop.f32.mrb[0].mxu0
    %1362 = vdwg.mxu0
    %v1363 = vmax.f32 %v1345, 0.0
    %v1364 = vmax.f32 %v1350, 0.0
    %v1365 = vmax.f32 %v1355, 0.0
    %v1366 = vmax.f32 %v1360, 0.0
    %1368 = vset.pattern.permute.xlu0 0
    %1369 = vperm.xlu0 %1368, %v1121
    %v1370 = vpop.permute.xlu0 %1369
    %v1373 = vsel %vm195, %v1119, 0
    %1375 = vmatprep.subr.mxu0 0.0
    %1376 = vmatpush1.msra.mxu0 %v1363
    %1377 = vmatprep.subr.mxu0 0.0
    %1378 = vmatpush1.msra.mxu0 %v1364
    %1379 = vmatprep.subr.mxu0 0.0
    %1380 = vmatpush1.msra.mxu0 %v1365
    %1381 = vmatprep.subr.mxu0 0.0
    %1382 = vmatpush1.msra.mxu0 %v1366
    %1383 = vmatprep.subr.mxu0 0.0
    %1384 = vmatpush1.msra.mxu0 0.0
    %1385 = vmatprep.subr.mxu0 0.0
    %1386 = vmatpush1.msra.mxu0 0.0
    %1387 = vmatprep.subr.mxu0 0.0
    %1388 = vmatpush1.msra.mxu0 0.0
    %1389 = vmatprep.subr.mxu0 0.0
    %1390 = vmatpush1.msra.mxu0 0.0
    %1391 = vmatprep.subr.mxu0 0.0
    %1392 = vmatpush1.msra.mxu0 0.0
    %1393 = vmatprep.subr.mxu0 0.0
    %1394 = vmatpush1.msra.mxu0 0.0
    %1395 = vmatprep.subr.mxu0 0.0
    %1396 = vmatpush1.msra.mxu0 0.0
    %1397 = vmatprep.subr.mxu0 0.0
    %1398 = vmatpush1.msra.mxu0 0.0
    %1399 = vmatprep.subr.mxu0 0.0
    %1400 = vmatpush1.msra.mxu0 0.0
    %1401 = vmatprep.subr.mxu0 0.0
    %1402 = vmatpush1.msra.mxu0 0.0
    %1403 = vmatprep.subr.mxu0 0.0
    %1404 = vmatpush1.msra.mxu0 0.0
    %1405 = vmatprep.subr.mxu0 0.0
    %1406 = vmatpush1.msra.mxu0 0.0
    %1407 = vmatprep.subr.mxu0 0.0
    %1408 = vmatpush1.msra.mxu0 0.0
    %1409 = vmatprep.subr.mxu0 0.0
    %1410 = vmatpush1.msra.mxu0 0.0
    %1411 = vmatprep.subr.mxu0 0.0
    %1412 = vmatpush1.msra.mxu0 0.0
    %1413 = vmatprep.subr.mxu0 0.0
    %1414 = vmatpush1.msra.mxu0 0.0
    %1415 = vmatprep.subr.mxu0 0.0
    %1416 = vmatpush1.msra.mxu0 0.0
    %1417 = vmatprep.subr.mxu0 0.0
    %1418 = vmatpush1.msra.mxu0 0.0
    %1419 = vmatprep.subr.mxu0 0.0
    %1420 = vmatpush1.msra.mxu0 0.0
    %1421 = vmatprep.subr.mxu0 0.0
    %1422 = vmatpush1.msra.mxu0 0.0
    %1423 = vmatprep.subr.mxu0 0.0
    %1424 = vmatpush1.msra.mxu0 0.0
    %1425 = vmatprep.subr.mxu0 0.0
    %1426 = vmatpush1.msra.mxu0 0.0
    %1427 = vmatprep.subr.mxu0 0.0
    %1428 = vmatpush1.msra.mxu0 0.0
    %1429 = vmatprep.subr.mxu0 0.0
    %1430 = vmatpush1.msra.mxu0 0.0
    %1431 = vmatprep.subr.mxu0 0.0
    %1432 = vmatpush1.msra.mxu0 0.0
    %1433 = vmatprep.subr.mxu0 0.0
    %1434 = vmatpush1.msra.mxu0 0.0
    %1435 = vmatprep.subr.mxu0 0.0
    %1436 = vmatpush1.msra.mxu0 0.0
    %1437 = vmatprep.subr.mxu0 0.0
    %1438 = vmatpush1.msra.mxu0 0.0
    %1439 = vmatprep.mubr.f32.mxu0 0.0
    %1440 = vmatmul.mubr.f32.gmra.mrb[0].mxu0 %v1373
    %v1441 = vpop.f32.mrb[0].mxu0
    %v1442 = vadd.f32 %v1370, %v1441
    %v1443 = vpop.f32.mrb[0].mxu0
    %1444 = vdwg.mxu0
    %v1445 = vtanh.pop %v1442
    %v1446 = vmul.f32 %v1445, 1.442695
    %v1447 = vpow.pop %v1446
    %v1448 = vmul.f32 %v1447, %v740
    %v1450 = vrot.slane %v1442, 4
    %v1452 = vadd.f32 %v1448, %v1450
    %v1453 = vadd.f32 %v1097, %v1445
    %1454 = vst [vmem:[#allocation2] sm:$0xf] %v1452
    %1455 = vst [vmem:[#allocation2 + $0x4] sm:$0xf] %v1096
    %1456 = vst [vmem:[#allocation4] sm:$0xf] %v1453
    // Predicated region
    $region30: #{tpu_custom_call.1} parent=1 // pred_check
      _
    $region31: #{tpu_custom_call.1} parent=1 // pred_check_branch
      %1458 = sbr.rel (0) target = $region33
    $region32: #{tpu_custom_call.1} parent=1 // pred_region
      %s1460 = ssub.s32 128, 128
      %1461 = vsyncadd [#allocation3], %s1460
      %s1463 = sshll.u32 [#allocation2], 4
      %s1464 = int_to_ptr.vmem [resolvable:$true] %s1463
      %1466 = dma.vmem_to_hbm [thread:$0]  %s1464, 128, %s7, [#allocation3]
    $region33: #{tpu_custom_call.1} parent=1 // pred_fallthru
      _
    // Predicated region
    $region34: #{tpu_custom_call.1} parent=1 // pred_check
      _
    $region35: #{tpu_custom_call.1} parent=1 // pred_check_branch
      %1468 = sbr.rel (0) target = $region37
    $region36: #{tpu_custom_call.1} parent=1 // pred_region
      %s1470 = ssub.s32 64, 64
      %1471 = vsyncadd [#allocation5], %s1470
      %s1473 = sshll.u32 [#allocation4], 4
      %s1474 = int_to_ptr.vmem [resolvable:$true] %s1473
      %1476 = dma.vmem_to_hbm [thread:$0]  %s1474, 64, %s8, [#allocation5]
    $region37: #{tpu_custom_call.1} parent=1 // pred_fallthru
      _
    // Predicated region
    $region38: #{tpu_custom_call.1} parent=1 // pred_check
      _
    $region39: #{tpu_custom_call.1} parent=1 // pred_check_branch
      %1478 = sbr.rel (0) target = $region41
    $region40: #{tpu_custom_call.1} parent=1 // pred_region
      %1479 = dma.done [#allocation3], 128
    $region41: #{tpu_custom_call.1} parent=1 // pred_fallthru
      _
    // Predicated region
    $region42: #{tpu_custom_call.1} parent=1 // pred_check
      _
    $region43: #{tpu_custom_call.1} parent=1 // pred_check_branch
      %1481 = sbr.rel (0) target = $region45
    $region44: #{tpu_custom_call.1} parent=1 // pred_region
      %1482 = dma.done [#allocation5], 64
    $region45: #{tpu_custom_call.1} parent=1 // pred_fallthru
      _
    %1483 = vsyncpa [#allocation3], 1
    %1484 = vsyncpa [#allocation5], 1

</llo_original>
